<compile_context>
chip_gen: v7x
topology: tpu7x:2x2x1
jax: 0.10.0
libtpu: 0.0.40
codegen_flags: <defaults>
</compile_context>

<pallas_src>
from functools import partial

import jax
import jax.numpy as jnp
from jax.experimental import pallas as pl
from jax.experimental.pallas import tpu as pltpu  # noqa: F401  (kept for parity / future scratch use)

# ----- synthetic config (mirrors conf.* / len(data.dictionary)) -----
VOCAB = 64          # len(data.dictionary)
EMB = 16            # conf.embedding_size
HID = 32            # conf.hidden_size
NUM_LAYERS = 2      # conf.num_layers
BN_EPS = 1e-5


# -------------------- fused whole-model kernel --------------------
def hamspam_kernel(tok_ref, gx0_tab_ref, b0_ref,
                   whh0_f_ref, whh0_b_ref,
                   wih1_top_ref, wih1_bot_ref, b1_ref,
                   whh1_f_ref, whh1_b_ref,
                   w1_top_ref, w1_bot_ref, bfc1_ref,
                   bn_scale_ref, bn_shift_ref,
                   w2_ref, b2_ref,
                   out_ref, *, T, B):
    H = HID
    TB = T * B

    # ---- embedding lookup + layer-0 input projection in ONE one-hot matmul ----
    # gx0_tab = embedding @ Wih0 (both directions), precomputed at init (bf16).
    tok = tok_ref[...]                                                    # (TB,1) int32, time-major rows
    onehot = (tok == jax.lax.broadcasted_iota(jnp.int32, (TB, VOCAB), 1)
              ).astype(jnp.bfloat16)                                      # (TB, V) bf16
    gx0 = jnp.dot(onehot, gx0_tab_ref[...],
                  preferred_element_type=jnp.float32) + b0_ref[...]       # (TB, 8H) f32

    def step_dir(g, h, c):
        # gate column order [i, f, o | g]: one sigmoid slab + one tanh slab
        sig = jax.nn.sigmoid(g[:, :3 * H])
        i_g = sig[:, 0 * H:1 * H]
        f_g = sig[:, 1 * H:2 * H]
        o_g = sig[:, 2 * H:3 * H]
        g_g = jnp.tanh(g[:, 3 * H:4 * H])
        c = f_g * c + i_g * g_g
        h = o_g * jnp.tanh(c)
        return h, c

    def bilstm(gx, whh_f, whh_b, collect_seq):
        """One bidirectional LSTM layer; fwd/bwd fused in one fully-unrolled loop.

        gx    : (TB, 8H) f32  hoisted input projection + bias, [fwd 4H | bwd 4H]
        whh_f : (H, 4H) bf16  forward recurrent weights (gate order [i,f,o,g])
        whh_b : (H, 4H) bf16  backward recurrent weights
        """
        h_f = jnp.zeros((B, H), jnp.float32)
        c_f = jnp.zeros((B, H), jnp.float32)
        h_b = jnp.zeros((B, H), jnp.float32)
        c_b = jnp.zeros((B, H), jnp.float32)
        seq_f = [None] * T
        seq_b = [None] * T

        for t in range(T):                       # fully unrolled (T static & small)
            tb = T - 1 - t
            g_f = gx[t * B:(t + 1) * B, 0:4 * H] + jnp.dot(
                h_f.astype(jnp.bfloat16), whh_f, preferred_element_type=jnp.float32)
            g_b = gx[tb * B:(tb + 1) * B, 4 * H:8 * H] + jnp.dot(
                h_b.astype(jnp.bfloat16), whh_b, preferred_element_type=jnp.float32)
            h_f, c_f = step_dir(g_f, h_f, c_f)
            h_b, c_b = step_dir(g_b, h_b, c_b)
            if collect_seq:
                seq_f[t] = h_f                   # fwd output at time t
                seq_b[tb] = h_b                  # bwd output at original time tb
        return h_f, h_b, seq_f, seq_b

    # layer 0: output sequence carried in registers (no scratch / masked stores)
    _, _, seq_f0, seq_b0 = bilstm(gx0, whh0_f_ref[...], whh0_b_ref[...], True)
    seq_f0 = jnp.concatenate(seq_f0, axis=0)     # (TB, H), time-major
    seq_b0 = jnp.concatenate(seq_b0, axis=0)     # (TB, H)
    # nn.LSTM inter-layer dropout is identity in eval mode.

    # layer-1 hoisted input projection, split per input half (no lane splice)
    gx1 = (jnp.dot(seq_f0.astype(jnp.bfloat16), wih1_top_ref[...],
                   preferred_element_type=jnp.float32)
           + jnp.dot(seq_b0.astype(jnp.bfloat16), wih1_bot_ref[...],
                     preferred_element_type=jnp.float32)
           + b1_ref[...])                        # (TB, 8H)
    h_f1, h_b1, _, _ = bilstm(gx1, whh1_f_ref[...], whh1_b_ref[...], False)

    # ---- FC head: ReLU -> Linear(2H,H) -> ReLU -> Dropout(id) -> BN(folded) -> Linear(H,1) -> Sigmoid
    zf = jnp.maximum(h_f1, 0.0)                  # relu(concat) == concat(relu): keep halves split
    zb = jnp.maximum(h_b1, 0.0)
    z = (jnp.dot(zf.astype(jnp.bfloat16), w1_top_ref[...], preferred_element_type=jnp.float32)
         + jnp.dot(zb.astype(jnp.bfloat16), w1_bot_ref[...], preferred_element_type=jnp.float32)
         + bfc1_ref[...])
    z = jnp.maximum(z, 0.0)
    z = z * bn_scale_ref[...] + bn_shift_ref[...]              # BatchNorm1d folded to scale/shift
    # final Linear(H,1): VPU multiply + lane reduce (skip a wasteful N=1 MXU pass)
    y = jnp.sum(z * w2_ref[...], axis=-1, keepdims=True) + b2_ref[...]   # (B, 1)
    out_ref[...] = jax.nn.sigmoid(y)


# -------------------- wrapper --------------------
def forward(params, tokens):
    B, T = tokens.shape
    # TODO(synk): this tiny time-major transpose stays in XLA glue; it keeps every
    # per-step access inside the kernel a contiguous, static slice.
    tok_tm = jnp.transpose(tokens).reshape(T * B, 1).astype(jnp.int32)
    p = params
    return pl.pallas_call(
        partial(hamspam_kernel, T=T, B=B),
        out_shape=jax.ShapeDtypeStruct((B, 1), jnp.float32),
    )(tok_tm,
      p["gx0_tab"], p["b0"], p["whh0_f"], p["whh0_b"],
      p["wih1_top"], p["wih1_bot"], p["b1"], p["whh1_f"], p["whh1_b"],
      p["w1_top"], p["w1_bot"], p["bfc1"],
      p["bn_scale"], p["bn_shift"], p["w2"], p["b2"])


# -------------------- parameters --------------------
def init_params(key):
    ks = jax.random.split(key, 32)
    bound = 1.0 / (HID ** 0.5)
    H = HID

    def u(k, shape):
        return jax.random.uniform(k, shape, jnp.float32, -bound, bound)

    idx = 0
    emb = jax.random.normal(ks[idx], (VOCAB, EMB), jnp.float32); idx += 1

    raw_lstm = []
    for layer in range(NUM_LAYERS):
        in_size = EMB if layer == 0 else 2 * HID
        dirs = []
        for _d in range(2):
            wih = u(ks[idx], (4 * HID, in_size)); idx += 1   # PyTorch layout (4H, In), gates [i,f,g,o]
            whh = u(ks[idx], (4 * HID, HID)); idx += 1       # (4H, H)
            bih = u(ks[idx], (4 * HID,)); idx += 1
            bhh = u(ks[idx], (4 * HID,)); idx += 1
            dirs.append((wih, whh, bih, bhh))
        raw_lstm.append(dirs)

    w1 = u(ks[idx], (HID, 2 * HID)); idx += 1     # nn.Linear(2H, H).weight
    b1 = u(ks[idx], (HID,)); idx += 1
    w2 = u(ks[idx], (1, HID)); idx += 1           # nn.Linear(H, 1).weight
    b2 = u(ks[idx], (1,)); idx += 1

    raw = {"embedding": emb, "lstm": raw_lstm, "fc": (w1, b1, w2, b2)}

    # ---- kernel packing: gate columns reordered to [i, f, o | g]; MXU operands bf16 ----
    def cols(w):   # PyTorch (4H, X) rows [i,f,g,o]  ->  (X, 4H) columns [i,f,o,g]
        wi, wf, wg, wo = w[:H], w[H:2 * H], w[2 * H:3 * H], w[3 * H:]
        return jnp.concatenate([wi, wf, wo, wg], axis=0).T

    def bvec(bih, bhh):   # combined bias, reordered to [i,f,o,g]
        b = bih + bhh
        return jnp.concatenate([b[:H], b[H:2 * H], b[3 * H:], b[2 * H:3 * H]])

    (w0f, h0f, bi0f, bh0f), (w0b, h0b, bi0b, bh0b) = raw_lstm[0]
    (w1f, h1f, bi1f, bh1f), (w1b, h1b, bi1b, bh1b) = raw_lstm[1]

    # layer 0: fold embedding @ Wih0 (both directions) into one per-token gate table
    wih0_fb = jnp.concatenate([cols(w0f), cols(w0b)], axis=1)            # (E, 8H) f32
    gx0_tab = (emb @ wih0_fb).astype(jnp.bfloat16)                       # (V, 8H) bf16
    b0 = jnp.concatenate([bvec(bi0f, bh0f), bvec(bi0b, bh0b)]).reshape(1, 8 * H)

    # layer 1: input projection split by input half (fwd-output rows / bwd-output rows)
    wih1_f = cols(w1f)                                                   # (2H, 4H)
    wih1_b = cols(w1b)
    wih1_top = jnp.concatenate([wih1_f[:H], wih1_b[:H]], axis=1).astype(jnp.bfloat16)   # (H, 8H)
    wih1_bot = jnp.concatenate([wih1_f[H:], wih1_b[H:]], axis=1).astype(jnp.bfloat16)   # (H, 8H)
    b1l = jnp.concatenate([bvec(bi1f, bh1f), bvec(bi1b, bh1b)]).reshape(1, 8 * H)

    # BatchNorm1d eval affine folded once (default stats: mean=0, var=1, gamma=1, beta=0)
    gamma = jnp.ones((HID,), jnp.float32)
    beta = jnp.zeros((HID,), jnp.float32)
    mean = jnp.zeros((HID,), jnp.float32)
    var = jnp.ones((HID,), jnp.float32)
    scale = gamma * jax.lax.rsqrt(var + BN_EPS)
    shift = beta - mean * scale

    w1t = w1.T                                                           # (2H, H)
    packed = {
        "gx0_tab": gx0_tab,
        "b0": b0,
        "whh0_f": cols(h0f).astype(jnp.bfloat16),                        # (H, 4H)
        "whh0_b": cols(h0b).astype(jnp.bfloat16),
        "wih1_top": wih1_top,
        "wih1_bot": wih1_bot,
        "b1": b1l,
        "whh1_f": cols(h1f).astype(jnp.bfloat16),
        "whh1_b": cols(h1b).astype(jnp.bfloat16),
        "w1_top": w1t[:H].astype(jnp.bfloat16),                          # (H, H)
        "w1_bot": w1t[H:].astype(jnp.bfloat16),                          # (H, H)
        "bfc1": b1.reshape(1, HID),
        "bn_scale": scale.reshape(1, HID),
        "bn_shift": shift.reshape(1, HID),
        "w2": w2.reshape(1, HID),
        "b2": b2.reshape(1, 1),
    }
    return raw, packed


# -------------------- pure-JAX reference (PyTorch eval semantics, f32) --------------------
def reference_forward(raw, tokens):
    B, T = tokens.shape
    x = raw["embedding"][tokens]                                   # (B, T, E), batch_first
    h_f_final = h_b_final = None
    for layer in range(NUM_LAYERS):
        outs, finals = [], []
        for d in range(2):
            wih, whh, bih, bhh = raw["lstm"][layer][d]
            seq = x if d == 0 else x[:, ::-1, :]
            h = jnp.zeros((B, HID), jnp.float32)
            c = jnp.zeros((B, HID), jnp.float32)
            hs = []
            for t in range(T):
                g = seq[:, t, :] @ wih.T + h @ whh.T + bih + bhh
                i = jax.nn.sigmoid(g[:, :HID])
                f = jax.nn.sigmoid(g[:, HID:2 * HID])
                gg = jnp.tanh(g[:, 2 * HID:3 * HID])
                o = jax.nn.sigmoid(g[:, 3 * HID:])
                c = f * c + i * gg
                h = o * jnp.tanh(c)
                hs.append(h)
            hs = jnp.stack(hs, axis=1)
            if d == 1:
                hs = hs[:, ::-1, :]
            outs.append(hs)
            finals.append(h)
        x = jnp.concatenate(outs, axis=-1)                         # (B, T, 2H)
        h_f_final, h_b_final = finals
    feat = jnp.concatenate([h_f_final, h_b_final], axis=-1)        # concat(h_n[-2], h_n[-1])
    w1, b1, w2, b2 = raw["fc"]
    z = jnp.maximum(feat, 0.0)
    z = z @ w1.T + b1
    z = jnp.maximum(z, 0.0)
    z = z / jnp.sqrt(1.0 + BN_EPS)                                 # BN eval with default stats
    y = z @ w2.T + b2
    return jax.nn.sigmoid(y)


if __name__ == "__main__":
    key = jax.random.PRNGKey(0)
    pkey, dkey = jax.random.split(key)
    raw, packed = init_params(pkey)

    B, T = 2, 8
    tokens = jax.random.randint(dkey, (B, T), 0, VOCAB, dtype=jnp.int32)

    out = jax.jit(forward)(packed, tokens)
    out = jax.block_until_ready(out)
    assert out.shape == (B, 1)
    assert bool(jnp.all((out >= 0.0) & (out <= 1.0)))

    ref = reference_forward(raw, tokens)
    # bf16 MXU operands (f32 accumulation) -> compare against the f32 reference
    # with a bf16-appropriate tolerance.
    assert bool(jnp.allclose(out, ref, atol=2e-2, rtol=2e-2)), (out, ref)
    print("KERNEL_OK")
</pallas_src>

<mosaic_0001>
module attributes {stable_mosaic.version = 11 : i64} {
  func.func @hamspam_kernel(%arg0: memref<16x1xi32, #tpu.memory_space<vmem>>, %arg1: memref<64x256xbf16, #tpu.memory_space<vmem>>, %arg2: memref<1x256xf32, #tpu.memory_space<vmem>>, %arg3: memref<32x128xbf16, #tpu.memory_space<vmem>>, %arg4: memref<32x128xbf16, #tpu.memory_space<vmem>>, %arg5: memref<32x256xbf16, #tpu.memory_space<vmem>>, %arg6: memref<32x256xbf16, #tpu.memory_space<vmem>>, %arg7: memref<1x256xf32, #tpu.memory_space<vmem>>, %arg8: memref<32x128xbf16, #tpu.memory_space<vmem>>, %arg9: memref<32x128xbf16, #tpu.memory_space<vmem>>, %arg10: memref<32x32xbf16, #tpu.memory_space<vmem>>, %arg11: memref<32x32xbf16, #tpu.memory_space<vmem>>, %arg12: memref<1x32xf32, #tpu.memory_space<vmem>>, %arg13: memref<1x32xf32, #tpu.memory_space<vmem>>, %arg14: memref<1x32xf32, #tpu.memory_space<vmem>>, %arg15: memref<1x32xf32, #tpu.memory_space<vmem>>, %arg16: memref<1x1xf32, #tpu.memory_space<vmem>>, %arg17: memref<2x1xf32, #tpu.memory_space<vmem>>) attributes {dimension_semantics = [], scalar_prefetch = 0 : i64, scratch_operands = 0 : i64, tpu.core_type = #tpu.core_type<tc>} {
    %c0 = arith.constant 0 : index
    %c0_0 = arith.constant 0 : index
    %0 = vector.load %arg0[%c0, %c0_0] : memref<16x1xi32, #tpu.memory_space<vmem>>, vector<16x1xi32>
    %1 = tpu.iota {dimensions = array<i32: 1>} : vector<16x64xi32>
    %2 = vector.broadcast %0 : vector<16x1xi32> to vector<16x64xi32>
    %3 = arith.cmpi eq, %2, %1 : vector<16x64xi32>
    %4 = arith.extui %3 : vector<16x64xi1> to vector<16x64xi32>
    %5 = arith.sitofp %4 : vector<16x64xi32> to vector<16x64xf32>
    %6 = arith.truncf %5 : vector<16x64xf32> to vector<16x64xbf16>
    %c0_1 = arith.constant 0 : index
    %c0_2 = arith.constant 0 : index
    %7 = vector.load %arg1[%c0_1, %c0_2] : memref<64x256xbf16, #tpu.memory_space<vmem>>, vector<64x256xbf16>
    %cst = arith.constant dense<0.000000e+00> : vector<16x256xf32>
    %8 = tpu.matmul %6, %7, %cst {dimension_numbers = #tpu.dot_dimension_numbers<[1], [0], [0], [1], [0, 0, 1, 1], [], []>} : vector<16x64xbf16>, vector<64x256xbf16>, vector<16x256xf32> -> vector<16x256xf32>
    %c0_3 = arith.constant 0 : index
    %c0_4 = arith.constant 0 : index
    %9 = vector.load %arg2[%c0_3, %c0_4] : memref<1x256xf32, #tpu.memory_space<vmem>>, vector<1x256xf32>
    %10 = vector.broadcast %9 : vector<1x256xf32> to vector<16x256xf32>
    %11 = arith.addf %8, %10 : vector<16x256xf32>
    %c0_5 = arith.constant 0 : index
    %c0_6 = arith.constant 0 : index
    %12 = vector.load %arg3[%c0_5, %c0_6] : memref<32x128xbf16, #tpu.memory_space<vmem>>, vector<32x128xbf16>
    %c0_7 = arith.constant 0 : index
    %c0_8 = arith.constant 0 : index
    %13 = vector.load %arg4[%c0_7, %c0_8] : memref<32x128xbf16, #tpu.memory_space<vmem>>, vector<32x128xbf16>
    %cst_9 = arith.constant 0.000000e+00 : f32
    %14 = vector.broadcast %cst_9 : f32 to vector<2x32xf32>
    %cst_10 = arith.constant 0.000000e+00 : f32
    %15 = vector.broadcast %cst_10 : f32 to vector<2x32xf32>
    %cst_11 = arith.constant 0.000000e+00 : f32
    %16 = vector.broadcast %cst_11 : f32 to vector<2x32xf32>
    %cst_12 = arith.constant 0.000000e+00 : f32
    %17 = vector.broadcast %cst_12 : f32 to vector<2x32xf32>
    %18 = vector.extract_strided_slice %11 {offsets = [0, 0], sizes = [2, 128], strides = [1, 1]} : vector<16x256xf32> to vector<2x128xf32>
    %19 = arith.truncf %14 : vector<2x32xf32> to vector<2x32xbf16>
    %cst_13 = arith.constant dense<0.000000e+00> : vector<2x128xf32>
    %20 = tpu.matmul %19, %12, %cst_13 {dimension_numbers = #tpu.dot_dimension_numbers<[1], [0], [0], [1], [0, 0, 1, 1], [], []>} : vector<2x32xbf16>, vector<32x128xbf16>, vector<2x128xf32> -> vector<2x128xf32>
    %21 = arith.addf %18, %20 : vector<2x128xf32>
    %22 = vector.extract_strided_slice %11 {offsets = [14, 128], sizes = [2, 128], strides = [1, 1]} : vector<16x256xf32> to vector<2x128xf32>
    %23 = arith.truncf %16 : vector<2x32xf32> to vector<2x32xbf16>
    %cst_14 = arith.constant dense<0.000000e+00> : vector<2x128xf32>
    %24 = tpu.matmul %23, %13, %cst_14 {dimension_numbers = #tpu.dot_dimension_numbers<[1], [0], [0], [1], [0, 0, 1, 1], [], []>} : vector<2x32xbf16>, vector<32x128xbf16>, vector<2x128xf32> -> vector<2x128xf32>
    %25 = arith.addf %22, %24 : vector<2x128xf32>
    %26 = vector.extract_strided_slice %21 {offsets = [0, 0], sizes = [2, 96], strides = [1, 1]} : vector<2x128xf32> to vector<2x96xf32>
    %27 = arith.negf %26 : vector<2x96xf32>
    %28 = math.exp %27 : vector<2x96xf32>
    %cst_15 = arith.constant 1.000000e+00 : f32
    %29 = vector.broadcast %cst_15 : f32 to vector<2x96xf32>
    %30 = arith.addf %29, %28 : vector<2x96xf32>
    %31 = arith.divf %29, %30 : vector<2x96xf32>
    %32 = vector.extract_strided_slice %31 {offsets = [0, 0], sizes = [2, 32], strides = [1, 1]} : vector<2x96xf32> to vector<2x32xf32>
    %33 = vector.extract_strided_slice %31 {offsets = [0, 32], sizes = [2, 32], strides = [1, 1]} : vector<2x96xf32> to vector<2x32xf32>
    %34 = vector.extract_strided_slice %31 {offsets = [0, 64], sizes = [2, 32], strides = [1, 1]} : vector<2x96xf32> to vector<2x32xf32>
    %35 = vector.extract_strided_slice %21 {offsets = [0, 96], sizes = [2, 32], strides = [1, 1]} : vector<2x128xf32> to vector<2x32xf32>
    %36 = math.tanh %35 : vector<2x32xf32>
    %37 = arith.mulf %33, %15 : vector<2x32xf32>
    %38 = arith.mulf %32, %36 : vector<2x32xf32>
    %39 = arith.addf %37, %38 : vector<2x32xf32>
    %40 = math.tanh %39 : vector<2x32xf32>
    %41 = arith.mulf %34, %40 : vector<2x32xf32>
    %42 = vector.extract_strided_slice %25 {offsets = [0, 0], sizes = [2, 96], strides = [1, 1]} : vector<2x128xf32> to vector<2x96xf32>
    %43 = arith.negf %42 : vector<2x96xf32>
    %44 = math.exp %43 : vector<2x96xf32>
    %cst_16 = arith.constant 1.000000e+00 : f32
    %45 = vector.broadcast %cst_16 : f32 to vector<2x96xf32>
    %46 = arith.addf %45, %44 : vector<2x96xf32>
    %47 = arith.divf %45, %46 : vector<2x96xf32>
    %48 = vector.extract_strided_slice %47 {offsets = [0, 0], sizes = [2, 32], strides = [1, 1]} : vector<2x96xf32> to vector<2x32xf32>
    %49 = vector.extract_strided_slice %47 {offsets = [0, 32], sizes = [2, 32], strides = [1, 1]} : vector<2x96xf32> to vector<2x32xf32>
    %50 = vector.extract_strided_slice %47 {offsets = [0, 64], sizes = [2, 32], strides = [1, 1]} : vector<2x96xf32> to vector<2x32xf32>
    %51 = vector.extract_strided_slice %25 {offsets = [0, 96], sizes = [2, 32], strides = [1, 1]} : vector<2x128xf32> to vector<2x32xf32>
    %52 = math.tanh %51 : vector<2x32xf32>
    %53 = arith.mulf %49, %17 : vector<2x32xf32>
    %54 = arith.mulf %48, %52 : vector<2x32xf32>
    %55 = arith.addf %53, %54 : vector<2x32xf32>
    %56 = math.tanh %55 : vector<2x32xf32>
    %57 = arith.mulf %50, %56 : vector<2x32xf32>
    %58 = vector.extract_strided_slice %11 {offsets = [2, 0], sizes = [2, 128], strides = [1, 1]} : vector<16x256xf32> to vector<2x128xf32>
    %59 = arith.truncf %41 : vector<2x32xf32> to vector<2x32xbf16>
    %cst_17 = arith.constant dense<0.000000e+00> : vector<2x128xf32>
    %60 = tpu.matmul %59, %12, %cst_17 {dimension_numbers = #tpu.dot_dimension_numbers<[1], [0], [0], [1], [0, 0, 1, 1], [], []>} : vector<2x32xbf16>, vector<32x128xbf16>, vector<2x128xf32> -> vector<2x128xf32>
    %61 = arith.addf %58, %60 : vector<2x128xf32>
    %62 = vector.extract_strided_slice %11 {offsets = [12, 128], sizes = [2, 128], strides = [1, 1]} : vector<16x256xf32> to vector<2x128xf32>
    %63 = arith.truncf %57 : vector<2x32xf32> to vector<2x32xbf16>
    %cst_18 = arith.constant dense<0.000000e+00> : vector<2x128xf32>
    %64 = tpu.matmul %63, %13, %cst_18 {dimension_numbers = #tpu.dot_dimension_numbers<[1], [0], [0], [1], [0, 0, 1, 1], [], []>} : vector<2x32xbf16>, vector<32x128xbf16>, vector<2x128xf32> -> vector<2x128xf32>
    %65 = arith.addf %62, %64 : vector<2x128xf32>
    %66 = vector.extract_strided_slice %61 {offsets = [0, 0], sizes = [2, 96], strides = [1, 1]} : vector<2x128xf32> to vector<2x96xf32>
    %67 = arith.negf %66 : vector<2x96xf32>
    %68 = math.exp %67 : vector<2x96xf32>
    %cst_19 = arith.constant 1.000000e+00 : f32
    %69 = vector.broadcast %cst_19 : f32 to vector<2x96xf32>
    %70 = arith.addf %69, %68 : vector<2x96xf32>
    %71 = arith.divf %69, %70 : vector<2x96xf32>
    %72 = vector.extract_strided_slice %71 {offsets = [0, 0], sizes = [2, 32], strides = [1, 1]} : vector<2x96xf32> to vector<2x32xf32>
    %73 = vector.extract_strided_slice %71 {offsets = [0, 32], sizes = [2, 32], strides = [1, 1]} : vector<2x96xf32> to vector<2x32xf32>
    %74 = vector.extract_strided_slice %71 {offsets = [0, 64], sizes = [2, 32], strides = [1, 1]} : vector<2x96xf32> to vector<2x32xf32>
    %75 = vector.extract_strided_slice %61 {offsets = [0, 96], sizes = [2, 32], strides = [1, 1]} : vector<2x128xf32> to vector<2x32xf32>
    %76 = math.tanh %75 : vector<2x32xf32>
    %77 = arith.mulf %73, %39 : vector<2x32xf32>
    %78 = arith.mulf %72, %76 : vector<2x32xf32>
    %79 = arith.addf %77, %78 : vector<2x32xf32>
    %80 = math.tanh %79 : vector<2x32xf32>
    %81 = arith.mulf %74, %80 : vector<2x32xf32>
    %82 = vector.extract_strided_slice %65 {offsets = [0, 0], sizes = [2, 96], strides = [1, 1]} : vector<2x128xf32> to vector<2x96xf32>
    %83 = arith.negf %82 : vector<2x96xf32>
    %84 = math.exp %83 : vector<2x96xf32>
    %cst_20 = arith.constant 1.000000e+00 : f32
    %85 = vector.broadcast %cst_20 : f32 to vector<2x96xf32>
    %86 = arith.addf %85, %84 : vector<2x96xf32>
    %87 = arith.divf %85, %86 : vector<2x96xf32>
    %88 = vector.extract_strided_slice %87 {offsets = [0, 0], sizes = [2, 32], strides = [1, 1]} : vector<2x96xf32> to vector<2x32xf32>
    %89 = vector.extract_strided_slice %87 {offsets = [0, 32], sizes = [2, 32], strides = [1, 1]} : vector<2x96xf32> to vector<2x32xf32>
    %90 = vector.extract_strided_slice %87 {offsets = [0, 64], sizes = [2, 32], strides = [1, 1]} : vector<2x96xf32> to vector<2x32xf32>
    %91 = vector.extract_strided_slice %65 {offsets = [0, 96], sizes = [2, 32], strides = [1, 1]} : vector<2x128xf32> to vector<2x32xf32>
    %92 = math.tanh %91 : vector<2x32xf32>
    %93 = arith.mulf %89, %55 : vector<2x32xf32>
    %94 = arith.mulf %88, %92 : vector<2x32xf32>
    %95 = arith.addf %93, %94 : vector<2x32xf32>
    %96 = math.tanh %95 : vector<2x32xf32>
    %97 = arith.mulf %90, %96 : vector<2x32xf32>
    %98 = vector.extract_strided_slice %11 {offsets = [4, 0], sizes = [2, 128], strides = [1, 1]} : vector<16x256xf32> to vector<2x128xf32>
    %99 = arith.truncf %81 : vector<2x32xf32> to vector<2x32xbf16>
    %cst_21 = arith.constant dense<0.000000e+00> : vector<2x128xf32>
    %100 = tpu.matmul %99, %12, %cst_21 {dimension_numbers = #tpu.dot_dimension_numbers<[1], [0], [0], [1], [0, 0, 1, 1], [], []>} : vector<2x32xbf16>, vector<32x128xbf16>, vector<2x128xf32> -> vector<2x128xf32>
    %101 = arith.addf %98, %100 : vector<2x128xf32>
    %102 = vector.extract_strided_slice %11 {offsets = [10, 128], sizes = [2, 128], strides = [1, 1]} : vector<16x256xf32> to vector<2x128xf32>
    %103 = arith.truncf %97 : vector<2x32xf32> to vector<2x32xbf16>
    %cst_22 = arith.constant dense<0.000000e+00> : vector<2x128xf32>
    %104 = tpu.matmul %103, %13, %cst_22 {dimension_numbers = #tpu.dot_dimension_numbers<[1], [0], [0], [1], [0, 0, 1, 1], [], []>} : vector<2x32xbf16>, vector<32x128xbf16>, vector<2x128xf32> -> vector<2x128xf32>
    %105 = arith.addf %102, %104 : vector<2x128xf32>
    %106 = vector.extract_strided_slice %101 {offsets = [0, 0], sizes = [2, 96], strides = [1, 1]} : vector<2x128xf32> to vector<2x96xf32>
    %107 = arith.negf %106 : vector<2x96xf32>
    %108 = math.exp %107 : vector<2x96xf32>
    %cst_23 = arith.constant 1.000000e+00 : f32
    %109 = vector.broadcast %cst_23 : f32 to vector<2x96xf32>
    %110 = arith.addf %109, %108 : vector<2x96xf32>
    %111 = arith.divf %109, %110 : vector<2x96xf32>
    %112 = vector.extract_strided_slice %111 {offsets = [0, 0], sizes = [2, 32], strides = [1, 1]} : vector<2x96xf32> to vector<2x32xf32>
    %113 = vector.extract_strided_slice %111 {offsets = [0, 32], sizes = [2, 32], strides = [1, 1]} : vector<2x96xf32> to vector<2x32xf32>
    %114 = vector.extract_strided_slice %111 {offsets = [0, 64], sizes = [2, 32], strides = [1, 1]} : vector<2x96xf32> to vector<2x32xf32>
    %115 = vector.extract_strided_slice %101 {offsets = [0, 96], sizes = [2, 32], strides = [1, 1]} : vector<2x128xf32> to vector<2x32xf32>
    %116 = math.tanh %115 : vector<2x32xf32>
    %117 = arith.mulf %113, %79 : vector<2x32xf32>
    %118 = arith.mulf %112, %116 : vector<2x32xf32>
    %119 = arith.addf %117, %118 : vector<2x32xf32>
    %120 = math.tanh %119 : vector<2x32xf32>
    %121 = arith.mulf %114, %120 : vector<2x32xf32>
    %122 = vector.extract_strided_slice %105 {offsets = [0, 0], sizes = [2, 96], strides = [1, 1]} : vector<2x128xf32> to vector<2x96xf32>
    %123 = arith.negf %122 : vector<2x96xf32>
    %124 = math.exp %123 : vector<2x96xf32>
    %cst_24 = arith.constant 1.000000e+00 : f32
    %125 = vector.broadcast %cst_24 : f32 to vector<2x96xf32>
    %126 = arith.addf %125, %124 : vector<2x96xf32>
    %127 = arith.divf %125, %126 : vector<2x96xf32>
    %128 = vector.extract_strided_slice %127 {offsets = [0, 0], sizes = [2, 32], strides = [1, 1]} : vector<2x96xf32> to vector<2x32xf32>
    %129 = vector.extract_strided_slice %127 {offsets = [0, 32], sizes = [2, 32], strides = [1, 1]} : vector<2x96xf32> to vector<2x32xf32>
    %130 = vector.extract_strided_slice %127 {offsets = [0, 64], sizes = [2, 32], strides = [1, 1]} : vector<2x96xf32> to vector<2x32xf32>
    %131 = vector.extract_strided_slice %105 {offsets = [0, 96], sizes = [2, 32], strides = [1, 1]} : vector<2x128xf32> to vector<2x32xf32>
    %132 = math.tanh %131 : vector<2x32xf32>
    %133 = arith.mulf %129, %95 : vector<2x32xf32>
    %134 = arith.mulf %128, %132 : vector<2x32xf32>
    %135 = arith.addf %133, %134 : vector<2x32xf32>
    %136 = math.tanh %135 : vector<2x32xf32>
    %137 = arith.mulf %130, %136 : vector<2x32xf32>
    %138 = vector.extract_strided_slice %11 {offsets = [6, 0], sizes = [2, 128], strides = [1, 1]} : vector<16x256xf32> to vector<2x128xf32>
    %139 = arith.truncf %121 : vector<2x32xf32> to vector<2x32xbf16>
    %cst_25 = arith.constant dense<0.000000e+00> : vector<2x128xf32>
    %140 = tpu.matmul %139, %12, %cst_25 {dimension_numbers = #tpu.dot_dimension_numbers<[1], [0], [0], [1], [0, 0, 1, 1], [], []>} : vector<2x32xbf16>, vector<32x128xbf16>, vector<2x128xf32> -> vector<2x128xf32>
    %141 = arith.addf %138, %140 : vector<2x128xf32>
    %142 = vector.extract_strided_slice %11 {offsets = [8, 128], sizes = [2, 128], strides = [1, 1]} : vector<16x256xf32> to vector<2x128xf32>
    %143 = arith.truncf %137 : vector<2x32xf32> to vector<2x32xbf16>
    %cst_26 = arith.constant dense<0.000000e+00> : vector<2x128xf32>
    %144 = tpu.matmul %143, %13, %cst_26 {dimension_numbers = #tpu.dot_dimension_numbers<[1], [0], [0], [1], [0, 0, 1, 1], [], []>} : vector<2x32xbf16>, vector<32x128xbf16>, vector<2x128xf32> -> vector<2x128xf32>
    %145 = arith.addf %142, %144 : vector<2x128xf32>
    %146 = vector.extract_strided_slice %141 {offsets = [0, 0], sizes = [2, 96], strides = [1, 1]} : vector<2x128xf32> to vector<2x96xf32>
    %147 = arith.negf %146 : vector<2x96xf32>
    %148 = math.exp %147 : vector<2x96xf32>
    %cst_27 = arith.constant 1.000000e+00 : f32
    %149 = vector.broadcast %cst_27 : f32 to vector<2x96xf32>
    %150 = arith.addf %149, %148 : vector<2x96xf32>
    %151 = arith.divf %149, %150 : vector<2x96xf32>
    %152 = vector.extract_strided_slice %151 {offsets = [0, 0], sizes = [2, 32], strides = [1, 1]} : vector<2x96xf32> to vector<2x32xf32>
    %153 = vector.extract_strided_slice %151 {offsets = [0, 32], sizes = [2, 32], strides = [1, 1]} : vector<2x96xf32> to vector<2x32xf32>
    %154 = vector.extract_strided_slice %151 {offsets = [0, 64], sizes = [2, 32], strides = [1, 1]} : vector<2x96xf32> to vector<2x32xf32>
    %155 = vector.extract_strided_slice %141 {offsets = [0, 96], sizes = [2, 32], strides = [1, 1]} : vector<2x128xf32> to vector<2x32xf32>
    %156 = math.tanh %155 : vector<2x32xf32>
    %157 = arith.mulf %153, %119 : vector<2x32xf32>
    %158 = arith.mulf %152, %156 : vector<2x32xf32>
    %159 = arith.addf %157, %158 : vector<2x32xf32>
    %160 = math.tanh %159 : vector<2x32xf32>
    %161 = arith.mulf %154, %160 : vector<2x32xf32>
    %162 = vector.extract_strided_slice %145 {offsets = [0, 0], sizes = [2, 96], strides = [1, 1]} : vector<2x128xf32> to vector<2x96xf32>
    %163 = arith.negf %162 : vector<2x96xf32>
    %164 = math.exp %163 : vector<2x96xf32>
    %cst_28 = arith.constant 1.000000e+00 : f32
    %165 = vector.broadcast %cst_28 : f32 to vector<2x96xf32>
    %166 = arith.addf %165, %164 : vector<2x96xf32>
    %167 = arith.divf %165, %166 : vector<2x96xf32>
    %168 = vector.extract_strided_slice %167 {offsets = [0, 0], sizes = [2, 32], strides = [1, 1]} : vector<2x96xf32> to vector<2x32xf32>
    %169 = vector.extract_strided_slice %167 {offsets = [0, 32], sizes = [2, 32], strides = [1, 1]} : vector<2x96xf32> to vector<2x32xf32>
    %170 = vector.extract_strided_slice %167 {offsets = [0, 64], sizes = [2, 32], strides = [1, 1]} : vector<2x96xf32> to vector<2x32xf32>
    %171 = vector.extract_strided_slice %145 {offsets = [0, 96], sizes = [2, 32], strides = [1, 1]} : vector<2x128xf32> to vector<2x32xf32>
    %172 = math.tanh %171 : vector<2x32xf32>
    %173 = arith.mulf %169, %135 : vector<2x32xf32>
    %174 = arith.mulf %168, %172 : vector<2x32xf32>
    %175 = arith.addf %173, %174 : vector<2x32xf32>
    %176 = math.tanh %175 : vector<2x32xf32>
    %177 = arith.mulf %170, %176 : vector<2x32xf32>
    %178 = vector.extract_strided_slice %11 {offsets = [8, 0], sizes = [2, 128], strides = [1, 1]} : vector<16x256xf32> to vector<2x128xf32>
    %179 = arith.truncf %161 : vector<2x32xf32> to vector<2x32xbf16>
    %cst_29 = arith.constant dense<0.000000e+00> : vector<2x128xf32>
    %180 = tpu.matmul %179, %12, %cst_29 {dimension_numbers = #tpu.dot_dimension_numbers<[1], [0], [0], [1], [0, 0, 1, 1], [], []>} : vector<2x32xbf16>, vector<32x128xbf16>, vector<2x128xf32> -> vector<2x128xf32>
    %181 = arith.addf %178, %180 : vector<2x128xf32>
    %182 = vector.extract_strided_slice %11 {offsets = [6, 128], sizes = [2, 128], strides = [1, 1]} : vector<16x256xf32> to vector<2x128xf32>
    %183 = arith.truncf %177 : vector<2x32xf32> to vector<2x32xbf16>
    %cst_30 = arith.constant dense<0.000000e+00> : vector<2x128xf32>
    %184 = tpu.matmul %183, %13, %cst_30 {dimension_numbers = #tpu.dot_dimension_numbers<[1], [0], [0], [1], [0, 0, 1, 1], [], []>} : vector<2x32xbf16>, vector<32x128xbf16>, vector<2x128xf32> -> vector<2x128xf32>
    %185 = arith.addf %182, %184 : vector<2x128xf32>
    %186 = vector.extract_strided_slice %181 {offsets = [0, 0], sizes = [2, 96], strides = [1, 1]} : vector<2x128xf32> to vector<2x96xf32>
    %187 = arith.negf %186 : vector<2x96xf32>
    %188 = math.exp %187 : vector<2x96xf32>
    %cst_31 = arith.constant 1.000000e+00 : f32
    %189 = vector.broadcast %cst_31 : f32 to vector<2x96xf32>
    %190 = arith.addf %189, %188 : vector<2x96xf32>
    %191 = arith.divf %189, %190 : vector<2x96xf32>
    %192 = vector.extract_strided_slice %191 {offsets = [0, 0], sizes = [2, 32], strides = [1, 1]} : vector<2x96xf32> to vector<2x32xf32>
    %193 = vector.extract_strided_slice %191 {offsets = [0, 32], sizes = [2, 32], strides = [1, 1]} : vector<2x96xf32> to vector<2x32xf32>
    %194 = vector.extract_strided_slice %191 {offsets = [0, 64], sizes = [2, 32], strides = [1, 1]} : vector<2x96xf32> to vector<2x32xf32>
    %195 = vector.extract_strided_slice %181 {offsets = [0, 96], sizes = [2, 32], strides = [1, 1]} : vector<2x128xf32> to vector<2x32xf32>
    %196 = math.tanh %195 : vector<2x32xf32>
    %197 = arith.mulf %193, %159 : vector<2x32xf32>
    %198 = arith.mulf %192, %196 : vector<2x32xf32>
    %199 = arith.addf %197, %198 : vector<2x32xf32>
    %200 = math.tanh %199 : vector<2x32xf32>
    %201 = arith.mulf %194, %200 : vector<2x32xf32>
    %202 = vector.extract_strided_slice %185 {offsets = [0, 0], sizes = [2, 96], strides = [1, 1]} : vector<2x128xf32> to vector<2x96xf32>
    %203 = arith.negf %202 : vector<2x96xf32>
    %204 = math.exp %203 : vector<2x96xf32>
    %cst_32 = arith.constant 1.000000e+00 : f32
    %205 = vector.broadcast %cst_32 : f32 to vector<2x96xf32>
    %206 = arith.addf %205, %204 : vector<2x96xf32>
    %207 = arith.divf %205, %206 : vector<2x96xf32>
    %208 = vector.extract_strided_slice %207 {offsets = [0, 0], sizes = [2, 32], strides = [1, 1]} : vector<2x96xf32> to vector<2x32xf32>
    %209 = vector.extract_strided_slice %207 {offsets = [0, 32], sizes = [2, 32], strides = [1, 1]} : vector<2x96xf32> to vector<2x32xf32>
    %210 = vector.extract_strided_slice %207 {offsets = [0, 64], sizes = [2, 32], strides = [1, 1]} : vector<2x96xf32> to vector<2x32xf32>
    %211 = vector.extract_strided_slice %185 {offsets = [0, 96], sizes = [2, 32], strides = [1, 1]} : vector<2x128xf32> to vector<2x32xf32>
    %212 = math.tanh %211 : vector<2x32xf32>
    %213 = arith.mulf %209, %175 : vector<2x32xf32>
    %214 = arith.mulf %208, %212 : vector<2x32xf32>
    %215 = arith.addf %213, %214 : vector<2x32xf32>
    %216 = math.tanh %215 : vector<2x32xf32>
    %217 = arith.mulf %210, %216 : vector<2x32xf32>
    %218 = vector.extract_strided_slice %11 {offsets = [10, 0], sizes = [2, 128], strides = [1, 1]} : vector<16x256xf32> to vector<2x128xf32>
    %219 = arith.truncf %201 : vector<2x32xf32> to vector<2x32xbf16>
    %cst_33 = arith.constant dense<0.000000e+00> : vector<2x128xf32>
    %220 = tpu.matmul %219, %12, %cst_33 {dimension_numbers = #tpu.dot_dimension_numbers<[1], [0], [0], [1], [0, 0, 1, 1], [], []>} : vector<2x32xbf16>, vector<32x128xbf16>, vector<2x128xf32> -> vector<2x128xf32>
    %221 = arith.addf %218, %220 : vector<2x128xf32>
    %222 = vector.extract_strided_slice %11 {offsets = [4, 128], sizes = [2, 128], strides = [1, 1]} : vector<16x256xf32> to vector<2x128xf32>
    %223 = arith.truncf %217 : vector<2x32xf32> to vector<2x32xbf16>
    %cst_34 = arith.constant dense<0.000000e+00> : vector<2x128xf32>
    %224 = tpu.matmul %223, %13, %cst_34 {dimension_numbers = #tpu.dot_dimension_numbers<[1], [0], [0], [1], [0, 0, 1, 1], [], []>} : vector<2x32xbf16>, vector<32x128xbf16>, vector<2x128xf32> -> vector<2x128xf32>
    %225 = arith.addf %222, %224 : vector<2x128xf32>
    %226 = vector.extract_strided_slice %221 {offsets = [0, 0], sizes = [2, 96], strides = [1, 1]} : vector<2x128xf32> to vector<2x96xf32>
    %227 = arith.negf %226 : vector<2x96xf32>
    %228 = math.exp %227 : vector<2x96xf32>
    %cst_35 = arith.constant 1.000000e+00 : f32
    %229 = vector.broadcast %cst_35 : f32 to vector<2x96xf32>
    %230 = arith.addf %229, %228 : vector<2x96xf32>
    %231 = arith.divf %229, %230 : vector<2x96xf32>
    %232 = vector.extract_strided_slice %231 {offsets = [0, 0], sizes = [2, 32], strides = [1, 1]} : vector<2x96xf32> to vector<2x32xf32>
    %233 = vector.extract_strided_slice %231 {offsets = [0, 32], sizes = [2, 32], strides = [1, 1]} : vector<2x96xf32> to vector<2x32xf32>
    %234 = vector.extract_strided_slice %231 {offsets = [0, 64], sizes = [2, 32], strides = [1, 1]} : vector<2x96xf32> to vector<2x32xf32>
    %235 = vector.extract_strided_slice %221 {offsets = [0, 96], sizes = [2, 32], strides = [1, 1]} : vector<2x128xf32> to vector<2x32xf32>
    %236 = math.tanh %235 : vector<2x32xf32>
    %237 = arith.mulf %233, %199 : vector<2x32xf32>
    %238 = arith.mulf %232, %236 : vector<2x32xf32>
    %239 = arith.addf %237, %238 : vector<2x32xf32>
    %240 = math.tanh %239 : vector<2x32xf32>
    %241 = arith.mulf %234, %240 : vector<2x32xf32>
    %242 = vector.extract_strided_slice %225 {offsets = [0, 0], sizes = [2, 96], strides = [1, 1]} : vector<2x128xf32> to vector<2x96xf32>
    %243 = arith.negf %242 : vector<2x96xf32>
    %244 = math.exp %243 : vector<2x96xf32>
    %cst_36 = arith.constant 1.000000e+00 : f32
    %245 = vector.broadcast %cst_36 : f32 to vector<2x96xf32>
    %246 = arith.addf %245, %244 : vector<2x96xf32>
    %247 = arith.divf %245, %246 : vector<2x96xf32>
    %248 = vector.extract_strided_slice %247 {offsets = [0, 0], sizes = [2, 32], strides = [1, 1]} : vector<2x96xf32> to vector<2x32xf32>
    %249 = vector.extract_strided_slice %247 {offsets = [0, 32], sizes = [2, 32], strides = [1, 1]} : vector<2x96xf32> to vector<2x32xf32>
    %250 = vector.extract_strided_slice %247 {offsets = [0, 64], sizes = [2, 32], strides = [1, 1]} : vector<2x96xf32> to vector<2x32xf32>
    %251 = vector.extract_strided_slice %225 {offsets = [0, 96], sizes = [2, 32], strides = [1, 1]} : vector<2x128xf32> to vector<2x32xf32>
    %252 = math.tanh %251 : vector<2x32xf32>
    %253 = arith.mulf %249, %215 : vector<2x32xf32>
    %254 = arith.mulf %248, %252 : vector<2x32xf32>
    %255 = arith.addf %253, %254 : vector<2x32xf32>
    %256 = math.tanh %255 : vector<2x32xf32>
    %257 = arith.mulf %250, %256 : vector<2x32xf32>
    %258 = vector.extract_strided_slice %11 {offsets = [12, 0], sizes = [2, 128], strides = [1, 1]} : vector<16x256xf32> to vector<2x128xf32>
    %259 = arith.truncf %241 : vector<2x32xf32> to vector<2x32xbf16>
    %cst_37 = arith.constant dense<0.000000e+00> : vector<2x128xf32>
    %260 = tpu.matmul %259, %12, %cst_37 {dimension_numbers = #tpu.dot_dimension_numbers<[1], [0], [0], [1], [0, 0, 1, 1], [], []>} : vector<2x32xbf16>, vector<32x128xbf16>, vector<2x128xf32> -> vector<2x128xf32>
    %261 = arith.addf %258, %260 : vector<2x128xf32>
    %262 = vector.extract_strided_slice %11 {offsets = [2, 128], sizes = [2, 128], strides = [1, 1]} : vector<16x256xf32> to vector<2x128xf32>
    %263 = arith.truncf %257 : vector<2x32xf32> to vector<2x32xbf16>
    %cst_38 = arith.constant dense<0.000000e+00> : vector<2x128xf32>
    %264 = tpu.matmul %263, %13, %cst_38 {dimension_numbers = #tpu.dot_dimension_numbers<[1], [0], [0], [1], [0, 0, 1, 1], [], []>} : vector<2x32xbf16>, vector<32x128xbf16>, vector<2x128xf32> -> vector<2x128xf32>
    %265 = arith.addf %262, %264 : vector<2x128xf32>
    %266 = vector.extract_strided_slice %261 {offsets = [0, 0], sizes = [2, 96], strides = [1, 1]} : vector<2x128xf32> to vector<2x96xf32>
    %267 = arith.negf %266 : vector<2x96xf32>
    %268 = math.exp %267 : vector<2x96xf32>
    %cst_39 = arith.constant 1.000000e+00 : f32
    %269 = vector.broadcast %cst_39 : f32 to vector<2x96xf32>
    %270 = arith.addf %269, %268 : vector<2x96xf32>
    %271 = arith.divf %269, %270 : vector<2x96xf32>
    %272 = vector.extract_strided_slice %271 {offsets = [0, 0], sizes = [2, 32], strides = [1, 1]} : vector<2x96xf32> to vector<2x32xf32>
    %273 = vector.extract_strided_slice %271 {offsets = [0, 32], sizes = [2, 32], strides = [1, 1]} : vector<2x96xf32> to vector<2x32xf32>
    %274 = vector.extract_strided_slice %271 {offsets = [0, 64], sizes = [2, 32], strides = [1, 1]} : vector<2x96xf32> to vector<2x32xf32>
    %275 = vector.extract_strided_slice %261 {offsets = [0, 96], sizes = [2, 32], strides = [1, 1]} : vector<2x128xf32> to vector<2x32xf32>
    %276 = math.tanh %275 : vector<2x32xf32>
    %277 = arith.mulf %273, %239 : vector<2x32xf32>
    %278 = arith.mulf %272, %276 : vector<2x32xf32>
    %279 = arith.addf %277, %278 : vector<2x32xf32>
    %280 = math.tanh %279 : vector<2x32xf32>
    %281 = arith.mulf %274, %280 : vector<2x32xf32>
    %282 = vector.extract_strided_slice %265 {offsets = [0, 0], sizes = [2, 96], strides = [1, 1]} : vector<2x128xf32> to vector<2x96xf32>
    %283 = arith.negf %282 : vector<2x96xf32>
    %284 = math.exp %283 : vector<2x96xf32>
    %cst_40 = arith.constant 1.000000e+00 : f32
    %285 = vector.broadcast %cst_40 : f32 to vector<2x96xf32>
    %286 = arith.addf %285, %284 : vector<2x96xf32>
    %287 = arith.divf %285, %286 : vector<2x96xf32>
    %288 = vector.extract_strided_slice %287 {offsets = [0, 0], sizes = [2, 32], strides = [1, 1]} : vector<2x96xf32> to vector<2x32xf32>
    %289 = vector.extract_strided_slice %287 {offsets = [0, 32], sizes = [2, 32], strides = [1, 1]} : vector<2x96xf32> to vector<2x32xf32>
    %290 = vector.extract_strided_slice %287 {offsets = [0, 64], sizes = [2, 32], strides = [1, 1]} : vector<2x96xf32> to vector<2x32xf32>
    %291 = vector.extract_strided_slice %265 {offsets = [0, 96], sizes = [2, 32], strides = [1, 1]} : vector<2x128xf32> to vector<2x32xf32>
    %292 = math.tanh %291 : vector<2x32xf32>
    %293 = arith.mulf %289, %255 : vector<2x32xf32>
    %294 = arith.mulf %288, %292 : vector<2x32xf32>
    %295 = arith.addf %293, %294 : vector<2x32xf32>
    %296 = math.tanh %295 : vector<2x32xf32>
    %297 = arith.mulf %290, %296 : vector<2x32xf32>
    %298 = vector.extract_strided_slice %11 {offsets = [14, 0], sizes = [2, 128], strides = [1, 1]} : vector<16x256xf32> to vector<2x128xf32>
    %299 = arith.truncf %281 : vector<2x32xf32> to vector<2x32xbf16>
    %cst_41 = arith.constant dense<0.000000e+00> : vector<2x128xf32>
    %300 = tpu.matmul %299, %12, %cst_41 {dimension_numbers = #tpu.dot_dimension_numbers<[1], [0], [0], [1], [0, 0, 1, 1], [], []>} : vector<2x32xbf16>, vector<32x128xbf16>, vector<2x128xf32> -> vector<2x128xf32>
    %301 = arith.addf %298, %300 : vector<2x128xf32>
    %302 = vector.extract_strided_slice %11 {offsets = [0, 128], sizes = [2, 128], strides = [1, 1]} : vector<16x256xf32> to vector<2x128xf32>
    %303 = arith.truncf %297 : vector<2x32xf32> to vector<2x32xbf16>
    %cst_42 = arith.constant dense<0.000000e+00> : vector<2x128xf32>
    %304 = tpu.matmul %303, %13, %cst_42 {dimension_numbers = #tpu.dot_dimension_numbers<[1], [0], [0], [1], [0, 0, 1, 1], [], []>} : vector<2x32xbf16>, vector<32x128xbf16>, vector<2x128xf32> -> vector<2x128xf32>
    %305 = arith.addf %302, %304 : vector<2x128xf32>
    %306 = vector.extract_strided_slice %301 {offsets = [0, 0], sizes = [2, 96], strides = [1, 1]} : vector<2x128xf32> to vector<2x96xf32>
    %307 = arith.negf %306 : vector<2x96xf32>
    %308 = math.exp %307 : vector<2x96xf32>
    %cst_43 = arith.constant 1.000000e+00 : f32
    %309 = vector.broadcast %cst_43 : f32 to vector<2x96xf32>
    %310 = arith.addf %309, %308 : vector<2x96xf32>
    %311 = arith.divf %309, %310 : vector<2x96xf32>
    %312 = vector.extract_strided_slice %311 {offsets = [0, 0], sizes = [2, 32], strides = [1, 1]} : vector<2x96xf32> to vector<2x32xf32>
    %313 = vector.extract_strided_slice %311 {offsets = [0, 32], sizes = [2, 32], strides = [1, 1]} : vector<2x96xf32> to vector<2x32xf32>
    %314 = vector.extract_strided_slice %311 {offsets = [0, 64], sizes = [2, 32], strides = [1, 1]} : vector<2x96xf32> to vector<2x32xf32>
    %315 = vector.extract_strided_slice %301 {offsets = [0, 96], sizes = [2, 32], strides = [1, 1]} : vector<2x128xf32> to vector<2x32xf32>
    %316 = math.tanh %315 : vector<2x32xf32>
    %317 = arith.mulf %313, %279 : vector<2x32xf32>
    %318 = arith.mulf %312, %316 : vector<2x32xf32>
    %319 = arith.addf %317, %318 : vector<2x32xf32>
    %320 = math.tanh %319 : vector<2x32xf32>
    %321 = arith.mulf %314, %320 : vector<2x32xf32>
    %322 = vector.extract_strided_slice %305 {offsets = [0, 0], sizes = [2, 96], strides = [1, 1]} : vector<2x128xf32> to vector<2x96xf32>
    %323 = arith.negf %322 : vector<2x96xf32>
    %324 = math.exp %323 : vector<2x96xf32>
    %cst_44 = arith.constant 1.000000e+00 : f32
    %325 = vector.broadcast %cst_44 : f32 to vector<2x96xf32>
    %326 = arith.addf %325, %324 : vector<2x96xf32>
    %327 = arith.divf %325, %326 : vector<2x96xf32>
    %328 = vector.extract_strided_slice %327 {offsets = [0, 0], sizes = [2, 32], strides = [1, 1]} : vector<2x96xf32> to vector<2x32xf32>
    %329 = vector.extract_strided_slice %327 {offsets = [0, 32], sizes = [2, 32], strides = [1, 1]} : vector<2x96xf32> to vector<2x32xf32>
    %330 = vector.extract_strided_slice %327 {offsets = [0, 64], sizes = [2, 32], strides = [1, 1]} : vector<2x96xf32> to vector<2x32xf32>
    %331 = vector.extract_strided_slice %305 {offsets = [0, 96], sizes = [2, 32], strides = [1, 1]} : vector<2x128xf32> to vector<2x32xf32>
    %332 = math.tanh %331 : vector<2x32xf32>
    %333 = arith.mulf %329, %295 : vector<2x32xf32>
    %334 = arith.mulf %328, %332 : vector<2x32xf32>
    %335 = arith.addf %333, %334 : vector<2x32xf32>
    %336 = math.tanh %335 : vector<2x32xf32>
    %337 = arith.mulf %330, %336 : vector<2x32xf32>
    %338 = tpu.concatenate %41, %81, %121, %161, %201, %241, %281, %321 in 0 : vector<2x32xf32>, vector<2x32xf32>, vector<2x32xf32>, vector<2x32xf32>, vector<2x32xf32>, vector<2x32xf32>, vector<2x32xf32>, vector<2x32xf32> -> vector<16x32xf32>
    %339 = tpu.concatenate %337, %297, %257, %217, %177, %137, %97, %57 in 0 : vector<2x32xf32>, vector<2x32xf32>, vector<2x32xf32>, vector<2x32xf32>, vector<2x32xf32>, vector<2x32xf32>, vector<2x32xf32>, vector<2x32xf32> -> vector<16x32xf32>
    %340 = arith.truncf %338 : vector<16x32xf32> to vector<16x32xbf16>
    %c0_45 = arith.constant 0 : index
    %c0_46 = arith.constant 0 : index
    %341 = vector.load %arg5[%c0_45, %c0_46] : memref<32x256xbf16, #tpu.memory_space<vmem>>, vector<32x256xbf16>
    %cst_47 = arith.constant dense<0.000000e+00> : vector<16x256xf32>
    %342 = tpu.matmul %340, %341, %cst_47 {dimension_numbers = #tpu.dot_dimension_numbers<[1], [0], [0], [1], [0, 0, 1, 1], [], []>} : vector<16x32xbf16>, vector<32x256xbf16>, vector<16x256xf32> -> vector<16x256xf32>
    %343 = arith.truncf %339 : vector<16x32xf32> to vector<16x32xbf16>
    %c0_48 = arith.constant 0 : index
    %c0_49 = arith.constant 0 : index
    %344 = vector.load %arg6[%c0_48, %c0_49] : memref<32x256xbf16, #tpu.memory_space<vmem>>, vector<32x256xbf16>
    %cst_50 = arith.constant dense<0.000000e+00> : vector<16x256xf32>
    %345 = tpu.matmul %343, %344, %cst_50 {dimension_numbers = #tpu.dot_dimension_numbers<[1], [0], [0], [1], [0, 0, 1, 1], [], []>} : vector<16x32xbf16>, vector<32x256xbf16>, vector<16x256xf32> -> vector<16x256xf32>
    %346 = arith.addf %342, %345 : vector<16x256xf32>
    %c0_51 = arith.constant 0 : index
    %c0_52 = arith.constant 0 : index
    %347 = vector.load %arg7[%c0_51, %c0_52] : memref<1x256xf32, #tpu.memory_space<vmem>>, vector<1x256xf32>
    %348 = vector.broadcast %347 : vector<1x256xf32> to vector<16x256xf32>
    %349 = arith.addf %346, %348 : vector<16x256xf32>
    %c0_53 = arith.constant 0 : index
    %c0_54 = arith.constant 0 : index
    %350 = vector.load %arg8[%c0_53, %c0_54] : memref<32x128xbf16, #tpu.memory_space<vmem>>, vector<32x128xbf16>
    %c0_55 = arith.constant 0 : index
    %c0_56 = arith.constant 0 : index
    %351 = vector.load %arg9[%c0_55, %c0_56] : memref<32x128xbf16, #tpu.memory_space<vmem>>, vector<32x128xbf16>
    %cst_57 = arith.constant 0.000000e+00 : f32
    %352 = vector.broadcast %cst_57 : f32 to vector<2x32xf32>
    %cst_58 = arith.constant 0.000000e+00 : f32
    %353 = vector.broadcast %cst_58 : f32 to vector<2x32xf32>
    %cst_59 = arith.constant 0.000000e+00 : f32
    %354 = vector.broadcast %cst_59 : f32 to vector<2x32xf32>
    %cst_60 = arith.constant 0.000000e+00 : f32
    %355 = vector.broadcast %cst_60 : f32 to vector<2x32xf32>
    %356 = vector.extract_strided_slice %349 {offsets = [0, 0], sizes = [2, 128], strides = [1, 1]} : vector<16x256xf32> to vector<2x128xf32>
    %357 = arith.truncf %352 : vector<2x32xf32> to vector<2x32xbf16>
    %cst_61 = arith.constant dense<0.000000e+00> : vector<2x128xf32>
    %358 = tpu.matmul %357, %350, %cst_61 {dimension_numbers = #tpu.dot_dimension_numbers<[1], [0], [0], [1], [0, 0, 1, 1], [], []>} : vector<2x32xbf16>, vector<32x128xbf16>, vector<2x128xf32> -> vector<2x128xf32>
    %359 = arith.addf %356, %358 : vector<2x128xf32>
    %360 = vector.extract_strided_slice %349 {offsets = [14, 128], sizes = [2, 128], strides = [1, 1]} : vector<16x256xf32> to vector<2x128xf32>
    %361 = arith.truncf %354 : vector<2x32xf32> to vector<2x32xbf16>
    %cst_62 = arith.constant dense<0.000000e+00> : vector<2x128xf32>
    %362 = tpu.matmul %361, %351, %cst_62 {dimension_numbers = #tpu.dot_dimension_numbers<[1], [0], [0], [1], [0, 0, 1, 1], [], []>} : vector<2x32xbf16>, vector<32x128xbf16>, vector<2x128xf32> -> vector<2x128xf32>
    %363 = arith.addf %360, %362 : vector<2x128xf32>
    %364 = vector.extract_strided_slice %359 {offsets = [0, 0], sizes = [2, 96], strides = [1, 1]} : vector<2x128xf32> to vector<2x96xf32>
    %365 = arith.negf %364 : vector<2x96xf32>
    %366 = math.exp %365 : vector<2x96xf32>
    %cst_63 = arith.constant 1.000000e+00 : f32
    %367 = vector.broadcast %cst_63 : f32 to vector<2x96xf32>
    %368 = arith.addf %367, %366 : vector<2x96xf32>
    %369 = arith.divf %367, %368 : vector<2x96xf32>
    %370 = vector.extract_strided_slice %369 {offsets = [0, 0], sizes = [2, 32], strides = [1, 1]} : vector<2x96xf32> to vector<2x32xf32>
    %371 = vector.extract_strided_slice %369 {offsets = [0, 32], sizes = [2, 32], strides = [1, 1]} : vector<2x96xf32> to vector<2x32xf32>
    %372 = vector.extract_strided_slice %369 {offsets = [0, 64], sizes = [2, 32], strides = [1, 1]} : vector<2x96xf32> to vector<2x32xf32>
    %373 = vector.extract_strided_slice %359 {offsets = [0, 96], sizes = [2, 32], strides = [1, 1]} : vector<2x128xf32> to vector<2x32xf32>
    %374 = math.tanh %373 : vector<2x32xf32>
    %375 = arith.mulf %371, %353 : vector<2x32xf32>
    %376 = arith.mulf %370, %374 : vector<2x32xf32>
    %377 = arith.addf %375, %376 : vector<2x32xf32>
    %378 = math.tanh %377 : vector<2x32xf32>
    %379 = arith.mulf %372, %378 : vector<2x32xf32>
    %380 = vector.extract_strided_slice %363 {offsets = [0, 0], sizes = [2, 96], strides = [1, 1]} : vector<2x128xf32> to vector<2x96xf32>
    %381 = arith.negf %380 : vector<2x96xf32>
    %382 = math.exp %381 : vector<2x96xf32>
    %cst_64 = arith.constant 1.000000e+00 : f32
    %383 = vector.broadcast %cst_64 : f32 to vector<2x96xf32>
    %384 = arith.addf %383, %382 : vector<2x96xf32>
    %385 = arith.divf %383, %384 : vector<2x96xf32>
    %386 = vector.extract_strided_slice %385 {offsets = [0, 0], sizes = [2, 32], strides = [1, 1]} : vector<2x96xf32> to vector<2x32xf32>
    %387 = vector.extract_strided_slice %385 {offsets = [0, 32], sizes = [2, 32], strides = [1, 1]} : vector<2x96xf32> to vector<2x32xf32>
    %388 = vector.extract_strided_slice %385 {offsets = [0, 64], sizes = [2, 32], strides = [1, 1]} : vector<2x96xf32> to vector<2x32xf32>
    %389 = vector.extract_strided_slice %363 {offsets = [0, 96], sizes = [2, 32], strides = [1, 1]} : vector<2x128xf32> to vector<2x32xf32>
    %390 = math.tanh %389 : vector<2x32xf32>
    %391 = arith.mulf %387, %355 : vector<2x32xf32>
    %392 = arith.mulf %386, %390 : vector<2x32xf32>
    %393 = arith.addf %391, %392 : vector<2x32xf32>
    %394 = math.tanh %393 : vector<2x32xf32>
    %395 = arith.mulf %388, %394 : vector<2x32xf32>
    %396 = vector.extract_strided_slice %349 {offsets = [2, 0], sizes = [2, 128], strides = [1, 1]} : vector<16x256xf32> to vector<2x128xf32>
    %397 = arith.truncf %379 : vector<2x32xf32> to vector<2x32xbf16>
    %cst_65 = arith.constant dense<0.000000e+00> : vector<2x128xf32>
    %398 = tpu.matmul %397, %350, %cst_65 {dimension_numbers = #tpu.dot_dimension_numbers<[1], [0], [0], [1], [0, 0, 1, 1], [], []>} : vector<2x32xbf16>, vector<32x128xbf16>, vector<2x128xf32> -> vector<2x128xf32>
    %399 = arith.addf %396, %398 : vector<2x128xf32>
    %400 = vector.extract_strided_slice %349 {offsets = [12, 128], sizes = [2, 128], strides = [1, 1]} : vector<16x256xf32> to vector<2x128xf32>
    %401 = arith.truncf %395 : vector<2x32xf32> to vector<2x32xbf16>
    %cst_66 = arith.constant dense<0.000000e+00> : vector<2x128xf32>
    %402 = tpu.matmul %401, %351, %cst_66 {dimension_numbers = #tpu.dot_dimension_numbers<[1], [0], [0], [1], [0, 0, 1, 1], [], []>} : vector<2x32xbf16>, vector<32x128xbf16>, vector<2x128xf32> -> vector<2x128xf32>
    %403 = arith.addf %400, %402 : vector<2x128xf32>
    %404 = vector.extract_strided_slice %399 {offsets = [0, 0], sizes = [2, 96], strides = [1, 1]} : vector<2x128xf32> to vector<2x96xf32>
    %405 = arith.negf %404 : vector<2x96xf32>
    %406 = math.exp %405 : vector<2x96xf32>
    %cst_67 = arith.constant 1.000000e+00 : f32
    %407 = vector.broadcast %cst_67 : f32 to vector<2x96xf32>
    %408 = arith.addf %407, %406 : vector<2x96xf32>
    %409 = arith.divf %407, %408 : vector<2x96xf32>
    %410 = vector.extract_strided_slice %409 {offsets = [0, 0], sizes = [2, 32], strides = [1, 1]} : vector<2x96xf32> to vector<2x32xf32>
    %411 = vector.extract_strided_slice %409 {offsets = [0, 32], sizes = [2, 32], strides = [1, 1]} : vector<2x96xf32> to vector<2x32xf32>
    %412 = vector.extract_strided_slice %409 {offsets = [0, 64], sizes = [2, 32], strides = [1, 1]} : vector<2x96xf32> to vector<2x32xf32>
    %413 = vector.extract_strided_slice %399 {offsets = [0, 96], sizes = [2, 32], strides = [1, 1]} : vector<2x128xf32> to vector<2x32xf32>
    %414 = math.tanh %413 : vector<2x32xf32>
    %415 = arith.mulf %411, %377 : vector<2x32xf32>
    %416 = arith.mulf %410, %414 : vector<2x32xf32>
    %417 = arith.addf %415, %416 : vector<2x32xf32>
    %418 = math.tanh %417 : vector<2x32xf32>
    %419 = arith.mulf %412, %418 : vector<2x32xf32>
    %420 = vector.extract_strided_slice %403 {offsets = [0, 0], sizes = [2, 96], strides = [1, 1]} : vector<2x128xf32> to vector<2x96xf32>
    %421 = arith.negf %420 : vector<2x96xf32>
    %422 = math.exp %421 : vector<2x96xf32>
    %cst_68 = arith.constant 1.000000e+00 : f32
    %423 = vector.broadcast %cst_68 : f32 to vector<2x96xf32>
    %424 = arith.addf %423, %422 : vector<2x96xf32>
    %425 = arith.divf %423, %424 : vector<2x96xf32>
    %426 = vector.extract_strided_slice %425 {offsets = [0, 0], sizes = [2, 32], strides = [1, 1]} : vector<2x96xf32> to vector<2x32xf32>
    %427 = vector.extract_strided_slice %425 {offsets = [0, 32], sizes = [2, 32], strides = [1, 1]} : vector<2x96xf32> to vector<2x32xf32>
    %428 = vector.extract_strided_slice %425 {offsets = [0, 64], sizes = [2, 32], strides = [1, 1]} : vector<2x96xf32> to vector<2x32xf32>
    %429 = vector.extract_strided_slice %403 {offsets = [0, 96], sizes = [2, 32], strides = [1, 1]} : vector<2x128xf32> to vector<2x32xf32>
    %430 = math.tanh %429 : vector<2x32xf32>
    %431 = arith.mulf %427, %393 : vector<2x32xf32>
    %432 = arith.mulf %426, %430 : vector<2x32xf32>
    %433 = arith.addf %431, %432 : vector<2x32xf32>
    %434 = math.tanh %433 : vector<2x32xf32>
    %435 = arith.mulf %428, %434 : vector<2x32xf32>
    %436 = vector.extract_strided_slice %349 {offsets = [4, 0], sizes = [2, 128], strides = [1, 1]} : vector<16x256xf32> to vector<2x128xf32>
    %437 = arith.truncf %419 : vector<2x32xf32> to vector<2x32xbf16>
    %cst_69 = arith.constant dense<0.000000e+00> : vector<2x128xf32>
    %438 = tpu.matmul %437, %350, %cst_69 {dimension_numbers = #tpu.dot_dimension_numbers<[1], [0], [0], [1], [0, 0, 1, 1], [], []>} : vector<2x32xbf16>, vector<32x128xbf16>, vector<2x128xf32> -> vector<2x128xf32>
    %439 = arith.addf %436, %438 : vector<2x128xf32>
    %440 = vector.extract_strided_slice %349 {offsets = [10, 128], sizes = [2, 128], strides = [1, 1]} : vector<16x256xf32> to vector<2x128xf32>
    %441 = arith.truncf %435 : vector<2x32xf32> to vector<2x32xbf16>
    %cst_70 = arith.constant dense<0.000000e+00> : vector<2x128xf32>
    %442 = tpu.matmul %441, %351, %cst_70 {dimension_numbers = #tpu.dot_dimension_numbers<[1], [0], [0], [1], [0, 0, 1, 1], [], []>} : vector<2x32xbf16>, vector<32x128xbf16>, vector<2x128xf32> -> vector<2x128xf32>
    %443 = arith.addf %440, %442 : vector<2x128xf32>
    %444 = vector.extract_strided_slice %439 {offsets = [0, 0], sizes = [2, 96], strides = [1, 1]} : vector<2x128xf32> to vector<2x96xf32>
    %445 = arith.negf %444 : vector<2x96xf32>
    %446 = math.exp %445 : vector<2x96xf32>
    %cst_71 = arith.constant 1.000000e+00 : f32
    %447 = vector.broadcast %cst_71 : f32 to vector<2x96xf32>
    %448 = arith.addf %447, %446 : vector<2x96xf32>
    %449 = arith.divf %447, %448 : vector<2x96xf32>
    %450 = vector.extract_strided_slice %449 {offsets = [0, 0], sizes = [2, 32], strides = [1, 1]} : vector<2x96xf32> to vector<2x32xf32>
    %451 = vector.extract_strided_slice %449 {offsets = [0, 32], sizes = [2, 32], strides = [1, 1]} : vector<2x96xf32> to vector<2x32xf32>
    %452 = vector.extract_strided_slice %449 {offsets = [0, 64], sizes = [2, 32], strides = [1, 1]} : vector<2x96xf32> to vector<2x32xf32>
    %453 = vector.extract_strided_slice %439 {offsets = [0, 96], sizes = [2, 32], strides = [1, 1]} : vector<2x128xf32> to vector<2x32xf32>
    %454 = math.tanh %453 : vector<2x32xf32>
    %455 = arith.mulf %451, %417 : vector<2x32xf32>
    %456 = arith.mulf %450, %454 : vector<2x32xf32>
    %457 = arith.addf %455, %456 : vector<2x32xf32>
    %458 = math.tanh %457 : vector<2x32xf32>
    %459 = arith.mulf %452, %458 : vector<2x32xf32>
    %460 = vector.extract_strided_slice %443 {offsets = [0, 0], sizes = [2, 96], strides = [1, 1]} : vector<2x128xf32> to vector<2x96xf32>
    %461 = arith.negf %460 : vector<2x96xf32>
    %462 = math.exp %461 : vector<2x96xf32>
    %cst_72 = arith.constant 1.000000e+00 : f32
    %463 = vector.broadcast %cst_72 : f32 to vector<2x96xf32>
    %464 = arith.addf %463, %462 : vector<2x96xf32>
    %465 = arith.divf %463, %464 : vector<2x96xf32>
    %466 = vector.extract_strided_slice %465 {offsets = [0, 0], sizes = [2, 32], strides = [1, 1]} : vector<2x96xf32> to vector<2x32xf32>
    %467 = vector.extract_strided_slice %465 {offsets = [0, 32], sizes = [2, 32], strides = [1, 1]} : vector<2x96xf32> to vector<2x32xf32>
    %468 = vector.extract_strided_slice %465 {offsets = [0, 64], sizes = [2, 32], strides = [1, 1]} : vector<2x96xf32> to vector<2x32xf32>
    %469 = vector.extract_strided_slice %443 {offsets = [0, 96], sizes = [2, 32], strides = [1, 1]} : vector<2x128xf32> to vector<2x32xf32>
    %470 = math.tanh %469 : vector<2x32xf32>
    %471 = arith.mulf %467, %433 : vector<2x32xf32>
    %472 = arith.mulf %466, %470 : vector<2x32xf32>
    %473 = arith.addf %471, %472 : vector<2x32xf32>
    %474 = math.tanh %473 : vector<2x32xf32>
    %475 = arith.mulf %468, %474 : vector<2x32xf32>
    %476 = vector.extract_strided_slice %349 {offsets = [6, 0], sizes = [2, 128], strides = [1, 1]} : vector<16x256xf32> to vector<2x128xf32>
    %477 = arith.truncf %459 : vector<2x32xf32> to vector<2x32xbf16>
    %cst_73 = arith.constant dense<0.000000e+00> : vector<2x128xf32>
    %478 = tpu.matmul %477, %350, %cst_73 {dimension_numbers = #tpu.dot_dimension_numbers<[1], [0], [0], [1], [0, 0, 1, 1], [], []>} : vector<2x32xbf16>, vector<32x128xbf16>, vector<2x128xf32> -> vector<2x128xf32>
    %479 = arith.addf %476, %478 : vector<2x128xf32>
    %480 = vector.extract_strided_slice %349 {offsets = [8, 128], sizes = [2, 128], strides = [1, 1]} : vector<16x256xf32> to vector<2x128xf32>
    %481 = arith.truncf %475 : vector<2x32xf32> to vector<2x32xbf16>
    %cst_74 = arith.constant dense<0.000000e+00> : vector<2x128xf32>
    %482 = tpu.matmul %481, %351, %cst_74 {dimension_numbers = #tpu.dot_dimension_numbers<[1], [0], [0], [1], [0, 0, 1, 1], [], []>} : vector<2x32xbf16>, vector<32x128xbf16>, vector<2x128xf32> -> vector<2x128xf32>
    %483 = arith.addf %480, %482 : vector<2x128xf32>
    %484 = vector.extract_strided_slice %479 {offsets = [0, 0], sizes = [2, 96], strides = [1, 1]} : vector<2x128xf32> to vector<2x96xf32>
    %485 = arith.negf %484 : vector<2x96xf32>
    %486 = math.exp %485 : vector<2x96xf32>
    %cst_75 = arith.constant 1.000000e+00 : f32
    %487 = vector.broadcast %cst_75 : f32 to vector<2x96xf32>
    %488 = arith.addf %487, %486 : vector<2x96xf32>
    %489 = arith.divf %487, %488 : vector<2x96xf32>
    %490 = vector.extract_strided_slice %489 {offsets = [0, 0], sizes = [2, 32], strides = [1, 1]} : vector<2x96xf32> to vector<2x32xf32>
    %491 = vector.extract_strided_slice %489 {offsets = [0, 32], sizes = [2, 32], strides = [1, 1]} : vector<2x96xf32> to vector<2x32xf32>
    %492 = vector.extract_strided_slice %489 {offsets = [0, 64], sizes = [2, 32], strides = [1, 1]} : vector<2x96xf32> to vector<2x32xf32>
    %493 = vector.extract_strided_slice %479 {offsets = [0, 96], sizes = [2, 32], strides = [1, 1]} : vector<2x128xf32> to vector<2x32xf32>
    %494 = math.tanh %493 : vector<2x32xf32>
    %495 = arith.mulf %491, %457 : vector<2x32xf32>
    %496 = arith.mulf %490, %494 : vector<2x32xf32>
    %497 = arith.addf %495, %496 : vector<2x32xf32>
    %498 = math.tanh %497 : vector<2x32xf32>
    %499 = arith.mulf %492, %498 : vector<2x32xf32>
    %500 = vector.extract_strided_slice %483 {offsets = [0, 0], sizes = [2, 96], strides = [1, 1]} : vector<2x128xf32> to vector<2x96xf32>
    %501 = arith.negf %500 : vector<2x96xf32>
    %502 = math.exp %501 : vector<2x96xf32>
    %cst_76 = arith.constant 1.000000e+00 : f32
    %503 = vector.broadcast %cst_76 : f32 to vector<2x96xf32>
    %504 = arith.addf %503, %502 : vector<2x96xf32>
    %505 = arith.divf %503, %504 : vector<2x96xf32>
    %506 = vector.extract_strided_slice %505 {offsets = [0, 0], sizes = [2, 32], strides = [1, 1]} : vector<2x96xf32> to vector<2x32xf32>
    %507 = vector.extract_strided_slice %505 {offsets = [0, 32], sizes = [2, 32], strides = [1, 1]} : vector<2x96xf32> to vector<2x32xf32>
    %508 = vector.extract_strided_slice %505 {offsets = [0, 64], sizes = [2, 32], strides = [1, 1]} : vector<2x96xf32> to vector<2x32xf32>
    %509 = vector.extract_strided_slice %483 {offsets = [0, 96], sizes = [2, 32], strides = [1, 1]} : vector<2x128xf32> to vector<2x32xf32>
    %510 = math.tanh %509 : vector<2x32xf32>
    %511 = arith.mulf %507, %473 : vector<2x32xf32>
    %512 = arith.mulf %506, %510 : vector<2x32xf32>
    %513 = arith.addf %511, %512 : vector<2x32xf32>
    %514 = math.tanh %513 : vector<2x32xf32>
    %515 = arith.mulf %508, %514 : vector<2x32xf32>
    %516 = vector.extract_strided_slice %349 {offsets = [8, 0], sizes = [2, 128], strides = [1, 1]} : vector<16x256xf32> to vector<2x128xf32>
    %517 = arith.truncf %499 : vector<2x32xf32> to vector<2x32xbf16>
    %cst_77 = arith.constant dense<0.000000e+00> : vector<2x128xf32>
    %518 = tpu.matmul %517, %350, %cst_77 {dimension_numbers = #tpu.dot_dimension_numbers<[1], [0], [0], [1], [0, 0, 1, 1], [], []>} : vector<2x32xbf16>, vector<32x128xbf16>, vector<2x128xf32> -> vector<2x128xf32>
    %519 = arith.addf %516, %518 : vector<2x128xf32>
    %520 = vector.extract_strided_slice %349 {offsets = [6, 128], sizes = [2, 128], strides = [1, 1]} : vector<16x256xf32> to vector<2x128xf32>
    %521 = arith.truncf %515 : vector<2x32xf32> to vector<2x32xbf16>
    %cst_78 = arith.constant dense<0.000000e+00> : vector<2x128xf32>
    %522 = tpu.matmul %521, %351, %cst_78 {dimension_numbers = #tpu.dot_dimension_numbers<[1], [0], [0], [1], [0, 0, 1, 1], [], []>} : vector<2x32xbf16>, vector<32x128xbf16>, vector<2x128xf32> -> vector<2x128xf32>
    %523 = arith.addf %520, %522 : vector<2x128xf32>
    %524 = vector.extract_strided_slice %519 {offsets = [0, 0], sizes = [2, 96], strides = [1, 1]} : vector<2x128xf32> to vector<2x96xf32>
    %525 = arith.negf %524 : vector<2x96xf32>
    %526 = math.exp %525 : vector<2x96xf32>
    %cst_79 = arith.constant 1.000000e+00 : f32
    %527 = vector.broadcast %cst_79 : f32 to vector<2x96xf32>
    %528 = arith.addf %527, %526 : vector<2x96xf32>
    %529 = arith.divf %527, %528 : vector<2x96xf32>
    %530 = vector.extract_strided_slice %529 {offsets = [0, 0], sizes = [2, 32], strides = [1, 1]} : vector<2x96xf32> to vector<2x32xf32>
    %531 = vector.extract_strided_slice %529 {offsets = [0, 32], sizes = [2, 32], strides = [1, 1]} : vector<2x96xf32> to vector<2x32xf32>
    %532 = vector.extract_strided_slice %529 {offsets = [0, 64], sizes = [2, 32], strides = [1, 1]} : vector<2x96xf32> to vector<2x32xf32>
    %533 = vector.extract_strided_slice %519 {offsets = [0, 96], sizes = [2, 32], strides = [1, 1]} : vector<2x128xf32> to vector<2x32xf32>
    %534 = math.tanh %533 : vector<2x32xf32>
    %535 = arith.mulf %531, %497 : vector<2x32xf32>
    %536 = arith.mulf %530, %534 : vector<2x32xf32>
    %537 = arith.addf %535, %536 : vector<2x32xf32>
    %538 = math.tanh %537 : vector<2x32xf32>
    %539 = arith.mulf %532, %538 : vector<2x32xf32>
    %540 = vector.extract_strided_slice %523 {offsets = [0, 0], sizes = [2, 96], strides = [1, 1]} : vector<2x128xf32> to vector<2x96xf32>
    %541 = arith.negf %540 : vector<2x96xf32>
    %542 = math.exp %541 : vector<2x96xf32>
    %cst_80 = arith.constant 1.000000e+00 : f32
    %543 = vector.broadcast %cst_80 : f32 to vector<2x96xf32>
    %544 = arith.addf %543, %542 : vector<2x96xf32>
    %545 = arith.divf %543, %544 : vector<2x96xf32>
    %546 = vector.extract_strided_slice %545 {offsets = [0, 0], sizes = [2, 32], strides = [1, 1]} : vector<2x96xf32> to vector<2x32xf32>
    %547 = vector.extract_strided_slice %545 {offsets = [0, 32], sizes = [2, 32], strides = [1, 1]} : vector<2x96xf32> to vector<2x32xf32>
    %548 = vector.extract_strided_slice %545 {offsets = [0, 64], sizes = [2, 32], strides = [1, 1]} : vector<2x96xf32> to vector<2x32xf32>
    %549 = vector.extract_strided_slice %523 {offsets = [0, 96], sizes = [2, 32], strides = [1, 1]} : vector<2x128xf32> to vector<2x32xf32>
    %550 = math.tanh %549 : vector<2x32xf32>
    %551 = arith.mulf %547, %513 : vector<2x32xf32>
    %552 = arith.mulf %546, %550 : vector<2x32xf32>
    %553 = arith.addf %551, %552 : vector<2x32xf32>
    %554 = math.tanh %553 : vector<2x32xf32>
    %555 = arith.mulf %548, %554 : vector<2x32xf32>
    %556 = vector.extract_strided_slice %349 {offsets = [10, 0], sizes = [2, 128], strides = [1, 1]} : vector<16x256xf32> to vector<2x128xf32>
    %557 = arith.truncf %539 : vector<2x32xf32> to vector<2x32xbf16>
    %cst_81 = arith.constant dense<0.000000e+00> : vector<2x128xf32>
    %558 = tpu.matmul %557, %350, %cst_81 {dimension_numbers = #tpu.dot_dimension_numbers<[1], [0], [0], [1], [0, 0, 1, 1], [], []>} : vector<2x32xbf16>, vector<32x128xbf16>, vector<2x128xf32> -> vector<2x128xf32>
    %559 = arith.addf %556, %558 : vector<2x128xf32>
    %560 = vector.extract_strided_slice %349 {offsets = [4, 128], sizes = [2, 128], strides = [1, 1]} : vector<16x256xf32> to vector<2x128xf32>
    %561 = arith.truncf %555 : vector<2x32xf32> to vector<2x32xbf16>
    %cst_82 = arith.constant dense<0.000000e+00> : vector<2x128xf32>
    %562 = tpu.matmul %561, %351, %cst_82 {dimension_numbers = #tpu.dot_dimension_numbers<[1], [0], [0], [1], [0, 0, 1, 1], [], []>} : vector<2x32xbf16>, vector<32x128xbf16>, vector<2x128xf32> -> vector<2x128xf32>
    %563 = arith.addf %560, %562 : vector<2x128xf32>
    %564 = vector.extract_strided_slice %559 {offsets = [0, 0], sizes = [2, 96], strides = [1, 1]} : vector<2x128xf32> to vector<2x96xf32>
    %565 = arith.negf %564 : vector<2x96xf32>
    %566 = math.exp %565 : vector<2x96xf32>
    %cst_83 = arith.constant 1.000000e+00 : f32
    %567 = vector.broadcast %cst_83 : f32 to vector<2x96xf32>
    %568 = arith.addf %567, %566 : vector<2x96xf32>
    %569 = arith.divf %567, %568 : vector<2x96xf32>
    %570 = vector.extract_strided_slice %569 {offsets = [0, 0], sizes = [2, 32], strides = [1, 1]} : vector<2x96xf32> to vector<2x32xf32>
    %571 = vector.extract_strided_slice %569 {offsets = [0, 32], sizes = [2, 32], strides = [1, 1]} : vector<2x96xf32> to vector<2x32xf32>
    %572 = vector.extract_strided_slice %569 {offsets = [0, 64], sizes = [2, 32], strides = [1, 1]} : vector<2x96xf32> to vector<2x32xf32>
    %573 = vector.extract_strided_slice %559 {offsets = [0, 96], sizes = [2, 32], strides = [1, 1]} : vector<2x128xf32> to vector<2x32xf32>
    %574 = math.tanh %573 : vector<2x32xf32>
    %575 = arith.mulf %571, %537 : vector<2x32xf32>
    %576 = arith.mulf %570, %574 : vector<2x32xf32>
    %577 = arith.addf %575, %576 : vector<2x32xf32>
    %578 = math.tanh %577 : vector<2x32xf32>
    %579 = arith.mulf %572, %578 : vector<2x32xf32>
    %580 = vector.extract_strided_slice %563 {offsets = [0, 0], sizes = [2, 96], strides = [1, 1]} : vector<2x128xf32> to vector<2x96xf32>
    %581 = arith.negf %580 : vector<2x96xf32>
    %582 = math.exp %581 : vector<2x96xf32>
    %cst_84 = arith.constant 1.000000e+00 : f32
    %583 = vector.broadcast %cst_84 : f32 to vector<2x96xf32>
    %584 = arith.addf %583, %582 : vector<2x96xf32>
    %585 = arith.divf %583, %584 : vector<2x96xf32>
    %586 = vector.extract_strided_slice %585 {offsets = [0, 0], sizes = [2, 32], strides = [1, 1]} : vector<2x96xf32> to vector<2x32xf32>
    %587 = vector.extract_strided_slice %585 {offsets = [0, 32], sizes = [2, 32], strides = [1, 1]} : vector<2x96xf32> to vector<2x32xf32>
    %588 = vector.extract_strided_slice %585 {offsets = [0, 64], sizes = [2, 32], strides = [1, 1]} : vector<2x96xf32> to vector<2x32xf32>
    %589 = vector.extract_strided_slice %563 {offsets = [0, 96], sizes = [2, 32], strides = [1, 1]} : vector<2x128xf32> to vector<2x32xf32>
    %590 = math.tanh %589 : vector<2x32xf32>
    %591 = arith.mulf %587, %553 : vector<2x32xf32>
    %592 = arith.mulf %586, %590 : vector<2x32xf32>
    %593 = arith.addf %591, %592 : vector<2x32xf32>
    %594 = math.tanh %593 : vector<2x32xf32>
    %595 = arith.mulf %588, %594 : vector<2x32xf32>
    %596 = vector.extract_strided_slice %349 {offsets = [12, 0], sizes = [2, 128], strides = [1, 1]} : vector<16x256xf32> to vector<2x128xf32>
    %597 = arith.truncf %579 : vector<2x32xf32> to vector<2x32xbf16>
    %cst_85 = arith.constant dense<0.000000e+00> : vector<2x128xf32>
    %598 = tpu.matmul %597, %350, %cst_85 {dimension_numbers = #tpu.dot_dimension_numbers<[1], [0], [0], [1], [0, 0, 1, 1], [], []>} : vector<2x32xbf16>, vector<32x128xbf16>, vector<2x128xf32> -> vector<2x128xf32>
    %599 = arith.addf %596, %598 : vector<2x128xf32>
    %600 = vector.extract_strided_slice %349 {offsets = [2, 128], sizes = [2, 128], strides = [1, 1]} : vector<16x256xf32> to vector<2x128xf32>
    %601 = arith.truncf %595 : vector<2x32xf32> to vector<2x32xbf16>
    %cst_86 = arith.constant dense<0.000000e+00> : vector<2x128xf32>
    %602 = tpu.matmul %601, %351, %cst_86 {dimension_numbers = #tpu.dot_dimension_numbers<[1], [0], [0], [1], [0, 0, 1, 1], [], []>} : vector<2x32xbf16>, vector<32x128xbf16>, vector<2x128xf32> -> vector<2x128xf32>
    %603 = arith.addf %600, %602 : vector<2x128xf32>
    %604 = vector.extract_strided_slice %599 {offsets = [0, 0], sizes = [2, 96], strides = [1, 1]} : vector<2x128xf32> to vector<2x96xf32>
    %605 = arith.negf %604 : vector<2x96xf32>
    %606 = math.exp %605 : vector<2x96xf32>
    %cst_87 = arith.constant 1.000000e+00 : f32
    %607 = vector.broadcast %cst_87 : f32 to vector<2x96xf32>
    %608 = arith.addf %607, %606 : vector<2x96xf32>
    %609 = arith.divf %607, %608 : vector<2x96xf32>
    %610 = vector.extract_strided_slice %609 {offsets = [0, 0], sizes = [2, 32], strides = [1, 1]} : vector<2x96xf32> to vector<2x32xf32>
    %611 = vector.extract_strided_slice %609 {offsets = [0, 32], sizes = [2, 32], strides = [1, 1]} : vector<2x96xf32> to vector<2x32xf32>
    %612 = vector.extract_strided_slice %609 {offsets = [0, 64], sizes = [2, 32], strides = [1, 1]} : vector<2x96xf32> to vector<2x32xf32>
    %613 = vector.extract_strided_slice %599 {offsets = [0, 96], sizes = [2, 32], strides = [1, 1]} : vector<2x128xf32> to vector<2x32xf32>
    %614 = math.tanh %613 : vector<2x32xf32>
    %615 = arith.mulf %611, %577 : vector<2x32xf32>
    %616 = arith.mulf %610, %614 : vector<2x32xf32>
    %617 = arith.addf %615, %616 : vector<2x32xf32>
    %618 = math.tanh %617 : vector<2x32xf32>
    %619 = arith.mulf %612, %618 : vector<2x32xf32>
    %620 = vector.extract_strided_slice %603 {offsets = [0, 0], sizes = [2, 96], strides = [1, 1]} : vector<2x128xf32> to vector<2x96xf32>
    %621 = arith.negf %620 : vector<2x96xf32>
    %622 = math.exp %621 : vector<2x96xf32>
    %cst_88 = arith.constant 1.000000e+00 : f32
    %623 = vector.broadcast %cst_88 : f32 to vector<2x96xf32>
    %624 = arith.addf %623, %622 : vector<2x96xf32>
    %625 = arith.divf %623, %624 : vector<2x96xf32>
    %626 = vector.extract_strided_slice %625 {offsets = [0, 0], sizes = [2, 32], strides = [1, 1]} : vector<2x96xf32> to vector<2x32xf32>
    %627 = vector.extract_strided_slice %625 {offsets = [0, 32], sizes = [2, 32], strides = [1, 1]} : vector<2x96xf32> to vector<2x32xf32>
    %628 = vector.extract_strided_slice %625 {offsets = [0, 64], sizes = [2, 32], strides = [1, 1]} : vector<2x96xf32> to vector<2x32xf32>
    %629 = vector.extract_strided_slice %603 {offsets = [0, 96], sizes = [2, 32], strides = [1, 1]} : vector<2x128xf32> to vector<2x32xf32>
    %630 = math.tanh %629 : vector<2x32xf32>
    %631 = arith.mulf %627, %593 : vector<2x32xf32>
    %632 = arith.mulf %626, %630 : vector<2x32xf32>
    %633 = arith.addf %631, %632 : vector<2x32xf32>
    %634 = math.tanh %633 : vector<2x32xf32>
    %635 = arith.mulf %628, %634 : vector<2x32xf32>
    %636 = vector.extract_strided_slice %349 {offsets = [14, 0], sizes = [2, 128], strides = [1, 1]} : vector<16x256xf32> to vector<2x128xf32>
    %637 = arith.truncf %619 : vector<2x32xf32> to vector<2x32xbf16>
    %cst_89 = arith.constant dense<0.000000e+00> : vector<2x128xf32>
    %638 = tpu.matmul %637, %350, %cst_89 {dimension_numbers = #tpu.dot_dimension_numbers<[1], [0], [0], [1], [0, 0, 1, 1], [], []>} : vector<2x32xbf16>, vector<32x128xbf16>, vector<2x128xf32> -> vector<2x128xf32>
    %639 = arith.addf %636, %638 : vector<2x128xf32>
    %640 = vector.extract_strided_slice %349 {offsets = [0, 128], sizes = [2, 128], strides = [1, 1]} : vector<16x256xf32> to vector<2x128xf32>
    %641 = arith.truncf %635 : vector<2x32xf32> to vector<2x32xbf16>
    %cst_90 = arith.constant dense<0.000000e+00> : vector<2x128xf32>
    %642 = tpu.matmul %641, %351, %cst_90 {dimension_numbers = #tpu.dot_dimension_numbers<[1], [0], [0], [1], [0, 0, 1, 1], [], []>} : vector<2x32xbf16>, vector<32x128xbf16>, vector<2x128xf32> -> vector<2x128xf32>
    %643 = arith.addf %640, %642 : vector<2x128xf32>
    %644 = vector.extract_strided_slice %639 {offsets = [0, 0], sizes = [2, 96], strides = [1, 1]} : vector<2x128xf32> to vector<2x96xf32>
    %645 = arith.negf %644 : vector<2x96xf32>
    %646 = math.exp %645 : vector<2x96xf32>
    %cst_91 = arith.constant 1.000000e+00 : f32
    %647 = vector.broadcast %cst_91 : f32 to vector<2x96xf32>
    %648 = arith.addf %647, %646 : vector<2x96xf32>
    %649 = arith.divf %647, %648 : vector<2x96xf32>
    %650 = vector.extract_strided_slice %649 {offsets = [0, 0], sizes = [2, 32], strides = [1, 1]} : vector<2x96xf32> to vector<2x32xf32>
    %651 = vector.extract_strided_slice %649 {offsets = [0, 32], sizes = [2, 32], strides = [1, 1]} : vector<2x96xf32> to vector<2x32xf32>
    %652 = vector.extract_strided_slice %649 {offsets = [0, 64], sizes = [2, 32], strides = [1, 1]} : vector<2x96xf32> to vector<2x32xf32>
    %653 = vector.extract_strided_slice %639 {offsets = [0, 96], sizes = [2, 32], strides = [1, 1]} : vector<2x128xf32> to vector<2x32xf32>
    %654 = math.tanh %653 : vector<2x32xf32>
    %655 = arith.mulf %651, %617 : vector<2x32xf32>
    %656 = arith.mulf %650, %654 : vector<2x32xf32>
    %657 = arith.addf %655, %656 : vector<2x32xf32>
    %658 = math.tanh %657 : vector<2x32xf32>
    %659 = arith.mulf %652, %658 : vector<2x32xf32>
    %660 = vector.extract_strided_slice %643 {offsets = [0, 0], sizes = [2, 96], strides = [1, 1]} : vector<2x128xf32> to vector<2x96xf32>
    %661 = arith.negf %660 : vector<2x96xf32>
    %662 = math.exp %661 : vector<2x96xf32>
    %cst_92 = arith.constant 1.000000e+00 : f32
    %663 = vector.broadcast %cst_92 : f32 to vector<2x96xf32>
    %664 = arith.addf %663, %662 : vector<2x96xf32>
    %665 = arith.divf %663, %664 : vector<2x96xf32>
    %666 = vector.extract_strided_slice %665 {offsets = [0, 0], sizes = [2, 32], strides = [1, 1]} : vector<2x96xf32> to vector<2x32xf32>
    %667 = vector.extract_strided_slice %665 {offsets = [0, 32], sizes = [2, 32], strides = [1, 1]} : vector<2x96xf32> to vector<2x32xf32>
    %668 = vector.extract_strided_slice %665 {offsets = [0, 64], sizes = [2, 32], strides = [1, 1]} : vector<2x96xf32> to vector<2x32xf32>
    %669 = vector.extract_strided_slice %643 {offsets = [0, 96], sizes = [2, 32], strides = [1, 1]} : vector<2x128xf32> to vector<2x32xf32>
    %670 = math.tanh %669 : vector<2x32xf32>
    %671 = arith.mulf %667, %633 : vector<2x32xf32>
    %672 = arith.mulf %666, %670 : vector<2x32xf32>
    %673 = arith.addf %671, %672 : vector<2x32xf32>
    %674 = math.tanh %673 : vector<2x32xf32>
    %675 = arith.mulf %668, %674 : vector<2x32xf32>
    %cst_93 = arith.constant 0.000000e+00 : f32
    %676 = vector.broadcast %cst_93 : f32 to vector<2x32xf32>
    %677 = arith.maximumf %659, %676 : vector<2x32xf32>
    %cst_94 = arith.constant 0.000000e+00 : f32
    %678 = vector.broadcast %cst_94 : f32 to vector<2x32xf32>
    %679 = arith.maximumf %675, %678 : vector<2x32xf32>
    %680 = arith.truncf %677 : vector<2x32xf32> to vector<2x32xbf16>
    %c0_95 = arith.constant 0 : index
    %c0_96 = arith.constant 0 : index
    %681 = vector.load %arg10[%c0_95, %c0_96] : memref<32x32xbf16, #tpu.memory_space<vmem>>, vector<32x32xbf16>
    %cst_97 = arith.constant dense<0.000000e+00> : vector<2x32xf32>
    %682 = tpu.matmul %680, %681, %cst_97 {dimension_numbers = #tpu.dot_dimension_numbers<[1], [0], [0], [1], [0, 0, 1, 1], [], []>} : vector<2x32xbf16>, vector<32x32xbf16>, vector<2x32xf32> -> vector<2x32xf32>
    %683 = arith.truncf %679 : vector<2x32xf32> to vector<2x32xbf16>
    %c0_98 = arith.constant 0 : index
    %c0_99 = arith.constant 0 : index
    %684 = vector.load %arg11[%c0_98, %c0_99] : memref<32x32xbf16, #tpu.memory_space<vmem>>, vector<32x32xbf16>
    %cst_100 = arith.constant dense<0.000000e+00> : vector<2x32xf32>
    %685 = tpu.matmul %683, %684, %cst_100 {dimension_numbers = #tpu.dot_dimension_numbers<[1], [0], [0], [1], [0, 0, 1, 1], [], []>} : vector<2x32xbf16>, vector<32x32xbf16>, vector<2x32xf32> -> vector<2x32xf32>
    %686 = arith.addf %682, %685 : vector<2x32xf32>
    %c0_101 = arith.constant 0 : index
    %c0_102 = arith.constant 0 : index
    %687 = vector.load %arg12[%c0_101, %c0_102] : memref<1x32xf32, #tpu.memory_space<vmem>>, vector<1x32xf32>
    %688 = vector.broadcast %687 : vector<1x32xf32> to vector<2x32xf32>
    %689 = arith.addf %686, %688 : vector<2x32xf32>
    %cst_103 = arith.constant 0.000000e+00 : f32
    %690 = vector.broadcast %cst_103 : f32 to vector<2x32xf32>
    %691 = arith.maximumf %689, %690 : vector<2x32xf32>
    %c0_104 = arith.constant 0 : index
    %c0_105 = arith.constant 0 : index
    %692 = vector.load %arg13[%c0_104, %c0_105] : memref<1x32xf32, #tpu.memory_space<vmem>>, vector<1x32xf32>
    %693 = vector.broadcast %692 : vector<1x32xf32> to vector<2x32xf32>
    %694 = arith.mulf %691, %693 : vector<2x32xf32>
    %c0_106 = arith.constant 0 : index
    %c0_107 = arith.constant 0 : index
    %695 = vector.load %arg14[%c0_106, %c0_107] : memref<1x32xf32, #tpu.memory_space<vmem>>, vector<1x32xf32>
    %696 = vector.broadcast %695 : vector<1x32xf32> to vector<2x32xf32>
    %697 = arith.addf %694, %696 : vector<2x32xf32>
    %c0_108 = arith.constant 0 : index
    %c0_109 = arith.constant 0 : index
    %698 = vector.load %arg15[%c0_108, %c0_109] : memref<1x32xf32, #tpu.memory_space<vmem>>, vector<1x32xf32>
    %699 = vector.broadcast %698 : vector<1x32xf32> to vector<2x32xf32>
    %700 = arith.mulf %697, %699 : vector<2x32xf32>
    %cst_110 = arith.constant dense<0.000000e+00> : vector<2xf32>
    %701 = vector.multi_reduction <add>, %700, %cst_110 [1] : vector<2x32xf32> to vector<2xf32>
    %702 = vector.shape_cast %701 : vector<2xf32> to vector<2x1xf32>
    %c0_111 = arith.constant 0 : index
    %c0_112 = arith.constant 0 : index
    %703 = vector.load %arg16[%c0_111, %c0_112] : memref<1x1xf32, #tpu.memory_space<vmem>>, vector<1x1xf32>
    %704 = vector.broadcast %703 : vector<1x1xf32> to vector<2x1xf32>
    %705 = arith.addf %702, %704 : vector<2x1xf32>
    %706 = arith.negf %705 : vector<2x1xf32>
    %707 = math.exp %706 : vector<2x1xf32>
    %cst_113 = arith.constant 1.000000e+00 : f32
    %708 = vector.broadcast %cst_113 : f32 to vector<2x1xf32>
    %709 = arith.addf %708, %707 : vector<2x1xf32>
    %710 = arith.divf %708, %709 : vector<2x1xf32>
    %c0_114 = arith.constant 0 : index
    %c0_115 = arith.constant 0 : index
    %711 = vector.load %arg17[%c0_114, %c0_115] : memref<2x1xf32, #tpu.memory_space<vmem>>, vector<2x1xf32>
    tpu.vector_store %arg17[%c0_114, %c0_115], %710 {strides = array<i32>} : memref<2x1xf32, #tpu.memory_space<vmem>>, vector<2x1xf32>,
    return
  }
}

</mosaic_0001>

<llo_original>
// kernel: forward.1
$region0: #{forward.1}
  #allocation0 [shape = 'u32[]', space=smem, size = 0x4, offset = 0x4, fixed_abs, tag = 'smem constant byte address 0x4 - core index']
  #allocation1 [shape = 'u32[144,128]{1,0:T(1,128)}', space=vmem, size = 0x12000, scoped, tag = 'internal scratch']
  #allocation2 [shape = 'f32[1,1]{1,0:T(1,128)S(1)}', space=vmem, size = 0x200, scoped, tag = 'scoped memory for forward.1']
  %s0 = inlined_call_operand.vmem [shape: s32[16,1], index: 0, kind: input, shape index: {}]
  %s1 = inlined_call_operand.vmem [shape: bf16[64,256], index: 1, kind: input, shape index: {}]
  %s2 = inlined_call_operand.vmem [shape: f32[1,256], index: 2, kind: input, shape index: {}]
  %s3 = inlined_call_operand.hbm [shape: bf16[32,128], index: 3, kind: input, shape index: {}]
  %s4 = inlined_call_operand.hbm [shape: bf16[32,128], index: 4, kind: input, shape index: {}]
  %s5 = inlined_call_operand.hbm [shape: bf16[32,256], index: 5, kind: input, shape index: {}]
  %s6 = inlined_call_operand.hbm [shape: bf16[32,256], index: 6, kind: input, shape index: {}]
  %s7 = inlined_call_operand.vmem [shape: f32[1,256], index: 7, kind: input, shape index: {}]
  %s8 = inlined_call_operand.hbm [shape: bf16[32,128], index: 8, kind: input, shape index: {}]
  %s9 = inlined_call_operand.hbm [shape: bf16[32,128], index: 9, kind: input, shape index: {}]
  %s10 = inlined_call_operand.hbm [shape: bf16[32,32], index: 10, kind: input, shape index: {}]
  %s11 = inlined_call_operand.hbm [shape: bf16[32,32], index: 11, kind: input, shape index: {}]
  %s12 = inlined_call_operand.vmem [shape: f32[1,32], index: 12, kind: input, shape index: {}]
  %s13 = inlined_call_operand.vmem [shape: f32[1,32], index: 13, kind: input, shape index: {}]
  %s14 = inlined_call_operand.vmem [shape: f32[1,32], index: 14, kind: input, shape index: {}]
  %s15 = inlined_call_operand.vmem [shape: f32[1,32], index: 15, kind: input, shape index: {}]
  %s16 = inlined_call_operand.<no memory space> [shape: f32[1,1], index: 16, kind: input, shape index: {}]
  %s17 = inlined_call_operand.vmem [shape: f32[2,1], index: 17, kind: output, shape index: {}]
  %s18 = sld [smem:[#allocation0]]
  $region110: #{forward.1} parent=0
    _
  %s20 = ssub.s32 1, %s18
  %s21 = scalar_select 0, %s20, %s18
  %v22 = vstv %s16
  %23 = vst [vmem:[#allocation2] sm:$0x1] %v22
  $region1: #{forward.1} parent=0
    #allocation3 [shape = 'u8[8192]{0}', space=vmem, size = 0x2000, scoped, tag = 'input window, operand 3, single buffered']
    #allocation4 [shape = 's32[1]{0}', space=sflag, size = 0x4, scoped, tag = 'scoped memory for forward.1']
    #allocation5 [shape = 'u8[8192]{0}', space=vmem, size = 0x2000, scoped, tag = 'input window, operand 4, single buffered']
    #allocation6 [shape = 's32[1]{0}', space=sflag, size = 0x4, scoped, tag = 'scoped memory for forward.1']
    #allocation7 [shape = 'u8[16384]{0}', space=vmem, size = 0x4000, scoped, tag = 'input window, operand 5, single buffered']
    #allocation8 [shape = 'u8[16384]{0}', space=vmem, size = 0x4000, scoped, tag = 'input window, operand 6, single buffered']
    #allocation9 [shape = 's32[1]{0}', space=sflag, size = 0x4, scoped, tag = 'scoped memory for forward.1']
    #allocation10 [shape = 'u8[8192]{0}', space=vmem, size = 0x2000, scoped, tag = 'input window, operand 8, single buffered']
    #allocation11 [shape = 'u8[8192]{0}', space=vmem, size = 0x2000, scoped, tag = 'input window, operand 9, single buffered']
    #allocation12 [shape = 's32[1]{0}', space=sflag, size = 0x4, scoped, tag = 'scoped memory for forward.1']
    #allocation13 [shape = 'u8[8192]{0}', space=vmem, size = 0x2000, scoped, tag = 'input window, operand 10, single buffered']
    #allocation14 [shape = 'u8[8192]{0}', space=vmem, size = 0x2000, scoped, tag = 'input window, operand 11, single buffered']
    #allocation15 [shape = 's32[1]{0}', space=sflag, size = 0x4, scoped, tag = 'scoped memory for forward.1']
    %24 = vsyncpa [#allocation4], 0
    %25 = vsyncpa [#allocation6], 0
    %26 = vsyncpa [#allocation9], 0
    %27 = vsyncpa [#allocation12], 0
    %28 = vsyncpa [#allocation15], 0
    // Predicated region
    $region2: #{forward.1} parent=1 // pred_check
      _
    $region3: #{forward.1} parent=1 // pred_check_branch
      %30 = sbr.rel (0) target = $region5
    $region4: #{forward.1} parent=1 // pred_region
      _
    $region5: #{forward.1} parent=1 // pred_fallthru
      _
    // Predicated region
    $region6: #{forward.1} parent=1 // pred_check
      _
    $region7: #{forward.1} parent=1 // pred_check_branch
      %32 = sbr.rel (0) target = $region9
    $region8: #{forward.1} parent=1 // pred_region
      _
    $region9: #{forward.1} parent=1 // pred_fallthru
      _
    // Predicated region
    $region10: #{forward.1} parent=1 // pred_check
      _
    $region11: #{forward.1} parent=1 // pred_check_branch
      %34 = sbr.rel (0) target = $region13
    $region12: #{forward.1} parent=1 // pred_region
      _
    $region13: #{forward.1} parent=1 // pred_fallthru
      _
    // Predicated region
    $region14: #{forward.1} parent=1 // pred_check
      _
    $region15: #{forward.1} parent=1 // pred_check_branch
      %36 = sbr.rel (0) target = $region17
    $region16: #{forward.1} parent=1 // pred_region
      %s38 = ssub.s32 256, 256
      %39 = vsyncadd [#allocation4], %s38
      %s40 = sshll.u32 [#allocation3], 4
      %s41 = int_to_ptr.vmem [resolvable:$true] %s40
      %46 = dma.hbm_to_vmem [thread:$0]  %s3, 256, %s41, [#allocation4], 64, 64, 4
    $region17: #{forward.1} parent=1 // pred_fallthru
      _
    // Predicated region
    $region18: #{forward.1} parent=1 // pred_check
      _
    $region19: #{forward.1} parent=1 // pred_check_branch
      %48 = sbr.rel (0) target = $region21
    $region20: #{forward.1} parent=1 // pred_region
      %s50 = ssub.s32 256, 256
      %51 = vsyncadd [#allocation6], %s50
      %s52 = sshll.u32 [#allocation5], 4
      %s53 = int_to_ptr.vmem [resolvable:$true] %s52
      %58 = dma.hbm_to_vmem [thread:$0]  %s4, 256, %s53, [#allocation6], 64, 64, 4
    $region21: #{forward.1} parent=1 // pred_fallthru
      _
    // Predicated region
    $region22: #{forward.1} parent=1 // pred_check
      _
    $region23: #{forward.1} parent=1 // pred_check_branch
      %60 = sbr.rel (0) target = $region25
    $region24: #{forward.1} parent=1 // pred_region
      %s62 = ssub.s32 512, 512
      %63 = vsyncadd [#allocation6], %s62
      %s64 = sshll.u32 [#allocation7], 4
      %s65 = int_to_ptr.vmem [resolvable:$true] %s64
      %70 = dma.hbm_to_vmem [thread:$0]  %s5, 512, %s65, [#allocation6], 128, 128, 8
    $region25: #{forward.1} parent=1 // pred_fallthru
      _
    // Predicated region
    $region26: #{forward.1} parent=1 // pred_check
      _
    $region27: #{forward.1} parent=1 // pred_check_branch
      %72 = sbr.rel (0) target = $region29
    $region28: #{forward.1} parent=1 // pred_region
      %s74 = ssub.s32 512, 512
      %75 = vsyncadd [#allocation9], %s74
      %s76 = sshll.u32 [#allocation8], 4
      %s77 = int_to_ptr.vmem [resolvable:$true] %s76
      %82 = dma.hbm_to_vmem [thread:$0]  %s6, 512, %s77, [#allocation9], 128, 128, 8
    $region29: #{forward.1} parent=1 // pred_fallthru
      _
    // Predicated region
    $region30: #{forward.1} parent=1 // pred_check
      _
    $region31: #{forward.1} parent=1 // pred_check_branch
      %84 = sbr.rel (0) target = $region33
    $region32: #{forward.1} parent=1 // pred_region
      _
    $region33: #{forward.1} parent=1 // pred_fallthru
      _
    // Predicated region
    $region34: #{forward.1} parent=1 // pred_check
      _
    $region35: #{forward.1} parent=1 // pred_check_branch
      %86 = sbr.rel (0) target = $region37
    $region36: #{forward.1} parent=1 // pred_region
      %s88 = ssub.s32 256, 256
      %89 = vsyncadd [#allocation9], %s88
      %s90 = sshll.u32 [#allocation10], 4
      %s91 = int_to_ptr.vmem [resolvable:$true] %s90
      %96 = dma.hbm_to_vmem [thread:$0]  %s8, 256, %s91, [#allocation9], 64, 64, 4
    $region37: #{forward.1} parent=1 // pred_fallthru
      _
    // Predicated region
    $region38: #{forward.1} parent=1 // pred_check
      _
    $region39: #{forward.1} parent=1 // pred_check_branch
      %98 = sbr.rel (0) target = $region41
    $region40: #{forward.1} parent=1 // pred_region
      %s100 = ssub.s32 256, 256
      %101 = vsyncadd [#allocation12], %s100
      %s102 = sshll.u32 [#allocation11], 4
      %s103 = int_to_ptr.vmem [resolvable:$true] %s102
      %108 = dma.hbm_to_vmem [thread:$0]  %s9, 256, %s103, [#allocation12], 64, 64, 4
    $region41: #{forward.1} parent=1 // pred_fallthru
      _
    // Predicated region
    $region42: #{forward.1} parent=1 // pred_check
      _
    $region43: #{forward.1} parent=1 // pred_check_branch
      %110 = sbr.rel (0) target = $region45
    $region44: #{forward.1} parent=1 // pred_region
      %s112 = ssub.s32 256, 256
      %113 = vsyncadd [#allocation12], %s112
      %s114 = sshll.u32 [#allocation13], 4
      %s115 = int_to_ptr.vmem [resolvable:$true] %s114
      %120 = dma.hbm_to_vmem [thread:$0]  %s10, 256, %s115, [#allocation12], 64, 64, 4
    $region45: #{forward.1} parent=1 // pred_fallthru
      _
    // Predicated region
    $region46: #{forward.1} parent=1 // pred_check
      _
    $region47: #{forward.1} parent=1 // pred_check_branch
      %122 = sbr.rel (0) target = $region49
    $region48: #{forward.1} parent=1 // pred_region
      %s124 = ssub.s32 256, 256
      %125 = vsyncadd [#allocation15], %s124
      %s126 = sshll.u32 [#allocation14], 4
      %s127 = int_to_ptr.vmem [resolvable:$true] %s126
      %132 = dma.hbm_to_vmem [thread:$0]  %s11, 256, %s127, [#allocation15], 64, 64, 4
    $region49: #{forward.1} parent=1 // pred_fallthru
      _
    // Predicated region
    $region50: #{forward.1} parent=1 // pred_check
      _
    $region51: #{forward.1} parent=1 // pred_check_branch
      %134 = sbr.rel (0) target = $region53
    $region52: #{forward.1} parent=1 // pred_region
      _
    $region53: #{forward.1} parent=1 // pred_fallthru
      _
    // Predicated region
    $region54: #{forward.1} parent=1 // pred_check
      _
    $region55: #{forward.1} parent=1 // pred_check_branch
      %136 = sbr.rel (0) target = $region57
    $region56: #{forward.1} parent=1 // pred_region
      _
    $region57: #{forward.1} parent=1 // pred_fallthru
      _
    // Predicated region
    $region58: #{forward.1} parent=1 // pred_check
      _
    $region59: #{forward.1} parent=1 // pred_check_branch
      %138 = sbr.rel (0) target = $region61
    $region60: #{forward.1} parent=1 // pred_region
      _
    $region61: #{forward.1} parent=1 // pred_fallthru
      _
    // Predicated region
    $region62: #{forward.1} parent=1 // pred_check
      _
    $region63: #{forward.1} parent=1 // pred_check_branch
      %140 = sbr.rel (0) target = $region65
    $region64: #{forward.1} parent=1 // pred_region
      _
    $region65: #{forward.1} parent=1 // pred_fallthru
      _
    // Predicated region
    $region66: #{forward.1} parent=1 // pred_check
      _
    $region67: #{forward.1} parent=1 // pred_check_branch
      %142 = sbr.rel (0) target = $region69
    $region68: #{forward.1} parent=1 // pred_region
      _
    $region69: #{forward.1} parent=1 // pred_fallthru
      _
    // Predicated region
    $region70: #{forward.1} parent=1 // pred_check
      _
    $region71: #{forward.1} parent=1 // pred_check_branch
      %144 = sbr.rel (0) target = $region73
    $region72: #{forward.1} parent=1 // pred_region
      %145 = dma.done [#allocation4], 256
    $region73: #{forward.1} parent=1 // pred_fallthru
      _
    // Predicated region
    $region74: #{forward.1} parent=1 // pred_check
      _
    $region75: #{forward.1} parent=1 // pred_check_branch
      %147 = sbr.rel (0) target = $region77
    $region76: #{forward.1} parent=1 // pred_region
      %148 = dma.done [#allocation6], 256
    $region77: #{forward.1} parent=1 // pred_fallthru
      _
    // Predicated region
    $region78: #{forward.1} parent=1 // pred_check
      _
    $region79: #{forward.1} parent=1 // pred_check_branch
      %150 = sbr.rel (0) target = $region81
    $region80: #{forward.1} parent=1 // pred_region
      %151 = dma.done [#allocation6], 512
    $region81: #{forward.1} parent=1 // pred_fallthru
      _
    // Predicated region
    $region82: #{forward.1} parent=1 // pred_check
      _
    $region83: #{forward.1} parent=1 // pred_check_branch
      %153 = sbr.rel (0) target = $region85
    $region84: #{forward.1} parent=1 // pred_region
      %154 = dma.done [#allocation9], 512
    $region85: #{forward.1} parent=1 // pred_fallthru
      _
    // Predicated region
    $region86: #{forward.1} parent=1 // pred_check
      _
    $region87: #{forward.1} parent=1 // pred_check_branch
      %156 = sbr.rel (0) target = $region89
    $region88: #{forward.1} parent=1 // pred_region
      %157 = dma.done [#allocation9], 256
    $region89: #{forward.1} parent=1 // pred_fallthru
      _
    // Predicated region
    $region90: #{forward.1} parent=1 // pred_check
      _
    $region91: #{forward.1} parent=1 // pred_check_branch
      %159 = sbr.rel (0) target = $region93
    $region92: #{forward.1} parent=1 // pred_region
      %160 = dma.done [#allocation12], 256
    $region93: #{forward.1} parent=1 // pred_fallthru
      _
    // Predicated region
    $region94: #{forward.1} parent=1 // pred_check
      _
    $region95: #{forward.1} parent=1 // pred_check_branch
      %162 = sbr.rel (0) target = $region97
    $region96: #{forward.1} parent=1 // pred_region
      %163 = dma.done [#allocation12], 256
    $region97: #{forward.1} parent=1 // pred_fallthru
      _
    // Predicated region
    $region98: #{forward.1} parent=1 // pred_check
      _
    $region99: #{forward.1} parent=1 // pred_check_branch
      %165 = sbr.rel (0) target = $region101
    $region100: #{forward.1} parent=1 // pred_region
      %166 = dma.done [#allocation15], 256
    $region101: #{forward.1} parent=1 // pred_fallthru
      _
    %v168 = vld [vmem:[%s0] sm:$0xff]
    %v169 = vld [vmem:[%s0 + $0x8] sm:$0xff]
    %v170 = vlaneseq
    %v171 = vand.u32 %v170, 127
    %172 = vset.pattern.permute.xlu0 0
    %173 = vperm.xlu0 %172, %v168
    %v174 = vpop.permute.xlu0 %173
    %175 = vset.pattern.permute.xlu0 0
    %176 = vperm.xlu0 %175, %v169
    %v177 = vpop.permute.xlu0 %176
    %vm178 = vcmp.eq.s32.totalorder %v174, %v171
    %vm179 = vcmp.eq.s32.totalorder %v177, %v171
    %v180 = vsel %vm178, 1, 0
    %v181 = vsel %vm179, 1, 0
    %v182 = vcvt.s32.f32 %v180
    %v183 = vcvt.s32.f32 %v181
    %v184 = vpack.c.bf16 %v183, %v182
    %v185 = vld [vmem:[%s1] sm:$0xff]
    %v186 = vld [vmem:[%s1 + $0x8] sm:$0xff]
    %v187 = vld [vmem:[%s1 + $0x10] sm:$0xff]
    %v188 = vld [vmem:[%s1 + $0x18] sm:$0xff]
    %v189 = vld [vmem:[%s1 + $0x20] sm:$0xff]
    %v190 = vld [vmem:[%s1 + $0x28] sm:$0xff]
    %v191 = vld [vmem:[%s1 + $0x30] sm:$0xff]
    %v192 = vld [vmem:[%s1 + $0x38] sm:$0xff]
    %v193 = vld [vmem:[%s2] sm:$0x3]
    %v195 = vlaneseq
    %v196 = vshrl.u32 %v195, 7
    %v197 = vsub.s32 0, %v196
    %v198 = vrot.slane %v193, %v197
    %v199 = vlaneseq
    %v200 = vshrl.u32 %v199, 7
    %v201 = vsub.s32 1, %v200
    %v202 = vrot.slane %v193, %v201
    %v213 = vunpack.c.l.b16 %v185
    %v214 = vunpack.c.h.b16 %v185
    %v215 = vunpack.c.l.b16 %v186
    %v216 = vunpack.c.h.b16 %v186
    %v217 = vunpack.c.l.b16 %v187
    %v218 = vunpack.c.h.b16 %v187
    %v219 = vunpack.c.l.b16 %v188
    %v220 = vunpack.c.h.b16 %v188
    %v221 = vunpack.c.l.b16 %v189
    %v222 = vunpack.c.h.b16 %v189
    %v223 = vunpack.c.l.b16 %v190
    %v224 = vunpack.c.h.b16 %v190
    %v225 = vunpack.c.l.b16 %v191
    %v226 = vunpack.c.h.b16 %v191
    %v227 = vunpack.c.l.b16 %v192
    %v228 = vunpack.c.h.b16 %v192
    %v229 = vpack.c.b16 %v215, %v213
    %v230 = vpack.c.b16 %v216, %v214
    %v231 = vpack.c.b16 %v219, %v217
    %v232 = vpack.c.b16 %v220, %v218
    %v233 = vpack.c.b16 %v223, %v221
    %v234 = vpack.c.b16 %v224, %v222
    %v235 = vpack.c.b16 %v227, %v225
    %v236 = vpack.c.b16 %v228, %v226
    %vm245 = vcmask 523264
    %v247 = vsel %vm245, %v184, 0
    %249 = vmatprep.subr.bf16.mxu0 %v230
    %250 = vmatpush1.bf16.msra.mxu0 %v229
    %251 = vmatprep.subr.bf16.mxu0 %v232
    %252 = vmatpush1.bf16.msra.mxu0 %v231
    %253 = vmatprep.subr.bf16.mxu0 %v234
    %254 = vmatpush1.bf16.msra.mxu0 %v233
    %255 = vmatprep.subr.bf16.mxu0 %v236
    %256 = vmatpush1.bf16.msra.mxu0 %v235
    %257 = vmatprep.subr.bf16.mxu0 0
    %258 = vmatpush1.bf16.msra.mxu0 0
    %259 = vmatprep.subr.bf16.mxu0 0
    %260 = vmatpush1.bf16.msra.mxu0 0
    %261 = vmatprep.subr.bf16.mxu0 0
    %262 = vmatpush1.bf16.msra.mxu0 0
    %263 = vmatprep.subr.bf16.mxu0 0
    %264 = vmatpush1.bf16.msra.mxu0 0
    %265 = vmatprep.subr.bf16.mxu0 0
    %266 = vmatpush1.bf16.msra.mxu0 0
    %267 = vmatprep.subr.bf16.mxu0 0
    %268 = vmatpush1.bf16.msra.mxu0 0
    %269 = vmatprep.subr.bf16.mxu0 0
    %270 = vmatpush1.bf16.msra.mxu0 0
    %271 = vmatprep.subr.bf16.mxu0 0
    %272 = vmatpush1.bf16.msra.mxu0 0
    %273 = vmatprep.subr.bf16.mxu0 0
    %274 = vmatpush1.bf16.msra.mxu0 0
    %275 = vmatprep.subr.bf16.mxu0 0
    %276 = vmatpush1.bf16.msra.mxu0 0
    %277 = vmatprep.subr.bf16.mxu0 0
    %278 = vmatpush1.bf16.msra.mxu0 0
    %279 = vmatprep.subr.bf16.mxu0 0
    %280 = vmatpush1.bf16.msra.mxu0 0
    %281 = vmatprep.mubr.bf16.mxu0 0
    %282 = vmatmul.mubr.bf16.gmra.mrb[0].mxu0 %v247
    %v283 = vpop.f32.mrb[0].mxu0
    %v284 = vadd.f32 %v198, %v283
    %v285 = vpop.f32.mrb[0].mxu0
    %v286 = vadd.f32 %v202, %v285
    %v287 = vpop.f32.mrb[0].mxu0
    %v288 = vadd.f32 %v198, %v287
    %v289 = vpop.f32.mrb[0].mxu0
    %v290 = vadd.f32 %v202, %v289
    %291 = vdwg.mxu0
    %v292 = vld [vmem:[#allocation3] sm:$0xf]
    %v293 = vld [vmem:[#allocation3 + $0x4] sm:$0xf]
    %v294 = vld [vmem:[#allocation3 + $0x8] sm:$0xf]
    %v295 = vld [vmem:[#allocation3 + $0xc] sm:$0xf]
    %v296 = vld [vmem:[#allocation5] sm:$0xf]
    %v297 = vld [vmem:[#allocation5 + $0x4] sm:$0xf]
    %v298 = vld [vmem:[#allocation5 + $0x8] sm:$0xf]
    %v299 = vld [vmem:[#allocation5 + $0xc] sm:$0xf]
    %v304 = vunpack.c.l.b16 %v292
    %v305 = vunpack.c.l.b16 %v293
    %v306 = vunpack.c.l.b16 %v294
    %v307 = vunpack.c.l.b16 %v295
    %v308 = vpack.c.b16 %v305, %v304
    %v309 = vpack.c.b16 %v307, %v306
    %vm312 = vcmask 261120
    %v314 = vsel %vm312, 0, 0
    %316 = vmatprep.subr.bf16.mxu0 0
    %317 = vmatpush1.bf16.msra.mxu0 %v308
    %318 = vmatprep.subr.bf16.mxu0 0
    %319 = vmatpush1.bf16.msra.mxu0 %v309
    %320 = vmatprep.subr.bf16.mxu0 0
    %321 = vmatpush1.bf16.msra.mxu0 0
    %322 = vmatprep.subr.bf16.mxu0 0
    %323 = vmatpush1.bf16.msra.mxu0 0
    %324 = vmatprep.subr.bf16.mxu0 0
    %325 = vmatpush1.bf16.msra.mxu0 0
    %326 = vmatprep.subr.bf16.mxu0 0
    %327 = vmatpush1.bf16.msra.mxu0 0
    %328 = vmatprep.subr.bf16.mxu0 0
    %329 = vmatpush1.bf16.msra.mxu0 0
    %330 = vmatprep.subr.bf16.mxu0 0
    %331 = vmatpush1.bf16.msra.mxu0 0
    %332 = vmatprep.subr.bf16.mxu0 0
    %333 = vmatpush1.bf16.msra.mxu0 0
    %334 = vmatprep.subr.bf16.mxu0 0
    %335 = vmatpush1.bf16.msra.mxu0 0
    %336 = vmatprep.subr.bf16.mxu0 0
    %337 = vmatpush1.bf16.msra.mxu0 0
    %338 = vmatprep.subr.bf16.mxu0 0
    %339 = vmatpush1.bf16.msra.mxu0 0
    %340 = vmatprep.subr.bf16.mxu0 0
    %341 = vmatpush1.bf16.msra.mxu0 0
    %342 = vmatprep.subr.bf16.mxu0 0
    %343 = vmatpush1.bf16.msra.mxu0 0
    %344 = vmatprep.subr.bf16.mxu0 0
    %345 = vmatpush1.bf16.msra.mxu0 0
    %346 = vmatprep.subr.bf16.mxu0 0
    %347 = vmatpush1.bf16.msra.mxu0 0
    %348 = vmatprep.mubr.bf16.mxu0 0
    %349 = vmatmul.mubr.bf16.gmra.mrb[0].mxu0 %v314
    %v350 = vpop.f32.mrb[0].mxu0
    %v351 = vadd.f32 0.0, %v350
    %v352 = vpop.f32.mrb[0].mxu0
    %v353 = vpop.f32.mrb[0].mxu0
    %v354 = vpop.f32.mrb[0].mxu0
    %355 = vdwg.mxu0
    %v356 = vadd.f32 %v284, %v351
    %v361 = vunpack.c.l.b16 %v296
    %v362 = vunpack.c.l.b16 %v297
    %v363 = vunpack.c.l.b16 %v298
    %v364 = vunpack.c.l.b16 %v299
    %v365 = vpack.c.b16 %v362, %v361
    %v366 = vpack.c.b16 %v364, %v363
    %369 = vmatprep.subr.bf16.mxu0 0
    %370 = vmatpush1.bf16.msra.mxu0 %v365
    %371 = vmatprep.subr.bf16.mxu0 0
    %372 = vmatpush1.bf16.msra.mxu0 %v366
    %373 = vmatprep.subr.bf16.mxu0 0
    %374 = vmatpush1.bf16.msra.mxu0 0
    %375 = vmatprep.subr.bf16.mxu0 0
    %376 = vmatpush1.bf16.msra.mxu0 0
    %377 = vmatprep.subr.bf16.mxu0 0
    %378 = vmatpush1.bf16.msra.mxu0 0
    %379 = vmatprep.subr.bf16.mxu0 0
    %380 = vmatpush1.bf16.msra.mxu0 0
    %381 = vmatprep.subr.bf16.mxu0 0
    %382 = vmatpush1.bf16.msra.mxu0 0
    %383 = vmatprep.subr.bf16.mxu0 0
    %384 = vmatpush1.bf16.msra.mxu0 0
    %385 = vmatprep.subr.bf16.mxu0 0
    %386 = vmatpush1.bf16.msra.mxu0 0
    %387 = vmatprep.subr.bf16.mxu0 0
    %388 = vmatpush1.bf16.msra.mxu0 0
    %389 = vmatprep.subr.bf16.mxu0 0
    %390 = vmatpush1.bf16.msra.mxu0 0
    %391 = vmatprep.subr.bf16.mxu0 0
    %392 = vmatpush1.bf16.msra.mxu0 0
    %393 = vmatprep.subr.bf16.mxu0 0
    %394 = vmatpush1.bf16.msra.mxu0 0
    %395 = vmatprep.subr.bf16.mxu0 0
    %396 = vmatpush1.bf16.msra.mxu0 0
    %397 = vmatprep.subr.bf16.mxu0 0
    %398 = vmatpush1.bf16.msra.mxu0 0
    %399 = vmatprep.subr.bf16.mxu0 0
    %400 = vmatpush1.bf16.msra.mxu0 0
    %401 = vmatprep.mubr.bf16.mxu0 0
    %402 = vmatmul.mubr.bf16.gmra.mrb[0].mxu0 %v314
    %v403 = vpop.f32.mrb[0].mxu0
    %v404 = vadd.f32 0.0, %v403
    %v405 = vpop.f32.mrb[0].mxu0
    %v406 = vpop.f32.mrb[0].mxu0
    %v407 = vpop.f32.mrb[0].mxu0
    %408 = vdwg.mxu0
    %v410 = vrot.slane %v404, 2
    %v412 = vadd.f32 %v290, %v410
    %v413 = vxor.u32 %v356, 2147483648
    %v414 = vmul.f32 %v413, 1.442695
    %v415 = vpow.pop %v414
    %v416 = vadd.f32 %v415, 1.0
    %v417 = vrcp.pop %v416
    %v418 = vmul.f32 1.0, %v417
    %v419 = vtanh.pop %v356
    %v420 = vmul.f32 %v418, 0.0
    %422 = vrot.lane.b32.xlu0 %v419, 32
    %v423 = vpop.permute.xlu0 %422
    %v425 = vmul.f32 %v418, %v423
    %427 = vrot.lane.b32.xlu0 %v425, 32
    %v428 = vpop.permute.xlu0 %427
    %v430 = vadd.f32 %v420, %v428
    %v431 = vtanh.pop %v430
    %433 = vrot.lane.b32.xlu0 %v431, 32
    %v434 = vpop.permute.xlu0 %433
    %v436 = vmul.f32 %v418, %v434
    %v437 = vxor.u32 %v412, 2147483648
    %v438 = vmul.f32 %v437, 1.442695
    %v439 = vpow.pop %v438
    %v440 = vadd.f32 %v439, 1.0
    %v441 = vrcp.pop %v440
    %v442 = vmul.f32 1.0, %v441
    %v443 = vtanh.pop %v412
    %v444 = vmul.f32 %v442, 0.0
    %446 = vrot.lane.b32.xlu0 %v443, 32
    %v447 = vpop.permute.xlu0 %446
    %v449 = vmul.f32 %v442, %v447
    %451 = vrot.lane.b32.xlu0 %v449, 32
    %v452 = vpop.permute.xlu0 %451
    %v454 = vadd.f32 %v444, %v452
    %v455 = vtanh.pop %v454
    %457 = vrot.lane.b32.xlu0 %v455, 32
    %v458 = vpop.permute.xlu0 %457
    %v460 = vmul.f32 %v442, %v458
    %v461 = vpack.c.bf16 %v436, %v436
    %463 = vrot.lane.b32.xlu0 %v461, 64
    %v464 = vpop.permute.xlu0 %463
    %v466 = vsel %vm312, %v464, 0
    %468 = vmatprep.subr.bf16.mxu0 0
    %469 = vmatpush1.bf16.msra.mxu0 %v308
    %470 = vmatprep.subr.bf16.mxu0 0
    %471 = vmatpush1.bf16.msra.mxu0 %v309
    %472 = vmatprep.subr.bf16.mxu0 0
    %473 = vmatpush1.bf16.msra.mxu0 0
    %474 = vmatprep.subr.bf16.mxu0 0
    %475 = vmatpush1.bf16.msra.mxu0 0
    %476 = vmatprep.subr.bf16.mxu0 0
    %477 = vmatpush1.bf16.msra.mxu0 0
    %478 = vmatprep.subr.bf16.mxu0 0
    %479 = vmatpush1.bf16.msra.mxu0 0
    %480 = vmatprep.subr.bf16.mxu0 0
    %481 = vmatpush1.bf16.msra.mxu0 0
    %482 = vmatprep.subr.bf16.mxu0 0
    %483 = vmatpush1.bf16.msra.mxu0 0
    %484 = vmatprep.subr.bf16.mxu0 0
    %485 = vmatpush1.bf16.msra.mxu0 0
    %486 = vmatprep.subr.bf16.mxu0 0
    %487 = vmatpush1.bf16.msra.mxu0 0
    %488 = vmatprep.subr.bf16.mxu0 0
    %489 = vmatpush1.bf16.msra.mxu0 0
    %490 = vmatprep.subr.bf16.mxu0 0
    %491 = vmatpush1.bf16.msra.mxu0 0
    %492 = vmatprep.subr.bf16.mxu0 0
    %493 = vmatpush1.bf16.msra.mxu0 0
    %494 = vmatprep.subr.bf16.mxu0 0
    %495 = vmatpush1.bf16.msra.mxu0 0
    %496 = vmatprep.subr.bf16.mxu0 0
    %497 = vmatpush1.bf16.msra.mxu0 0
    %498 = vmatprep.subr.bf16.mxu0 0
    %499 = vmatpush1.bf16.msra.mxu0 0
    %500 = vmatprep.mubr.bf16.mxu0 0
    %501 = vmatmul.mubr.bf16.gmra.mrb[0].mxu0 %v466
    %v502 = vpop.f32.mrb[0].mxu0
    %v503 = vadd.f32 0.0, %v502
    %v504 = vpop.f32.mrb[0].mxu0
    %v505 = vpop.f32.mrb[0].mxu0
    %v506 = vpop.f32.mrb[0].mxu0
    %507 = vdwg.mxu0
    %v509 = vrot.slane %v503, 6
    %v511 = vadd.f32 %v284, %v509
    %v512 = vpack.c.bf16 %v460, %v460
    %v514 = vrot.slane %v512, 3
    %515 = vrot.lane.b32.xlu0 %v514, 64
    %v516 = vpop.permute.xlu0 %515
    %v518 = vsel %vm312, %v516, 0
    %520 = vmatprep.subr.bf16.mxu0 0
    %521 = vmatpush1.bf16.msra.mxu0 %v365
    %522 = vmatprep.subr.bf16.mxu0 0
    %523 = vmatpush1.bf16.msra.mxu0 %v366
    %524 = vmatprep.subr.bf16.mxu0 0
    %525 = vmatpush1.bf16.msra.mxu0 0
    %526 = vmatprep.subr.bf16.mxu0 0
    %527 = vmatpush1.bf16.msra.mxu0 0
    %528 = vmatprep.subr.bf16.mxu0 0
    %529 = vmatpush1.bf16.msra.mxu0 0
    %530 = vmatprep.subr.bf16.mxu0 0
    %531 = vmatpush1.bf16.msra.mxu0 0
    %532 = vmatprep.subr.bf16.mxu0 0
    %533 = vmatpush1.bf16.msra.mxu0 0
    %534 = vmatprep.subr.bf16.mxu0 0
    %535 = vmatpush1.bf16.msra.mxu0 0
    %536 = vmatprep.subr.bf16.mxu0 0
    %537 = vmatpush1.bf16.msra.mxu0 0
    %538 = vmatprep.subr.bf16.mxu0 0
    %539 = vmatpush1.bf16.msra.mxu0 0
    %540 = vmatprep.subr.bf16.mxu0 0
    %541 = vmatpush1.bf16.msra.mxu0 0
    %542 = vmatprep.subr.bf16.mxu0 0
    %543 = vmatpush1.bf16.msra.mxu0 0
    %544 = vmatprep.subr.bf16.mxu0 0
    %545 = vmatpush1.bf16.msra.mxu0 0
    %546 = vmatprep.subr.bf16.mxu0 0
    %547 = vmatpush1.bf16.msra.mxu0 0
    %548 = vmatprep.subr.bf16.mxu0 0
    %549 = vmatpush1.bf16.msra.mxu0 0
    %550 = vmatprep.subr.bf16.mxu0 0
    %551 = vmatpush1.bf16.msra.mxu0 0
    %552 = vmatprep.mubr.bf16.mxu0 0
    %553 = vmatmul.mubr.bf16.gmra.mrb[0].mxu0 %v518
    %v554 = vpop.f32.mrb[0].mxu0
    %v555 = vadd.f32 0.0, %v554
    %v556 = vpop.f32.mrb[0].mxu0
    %v557 = vpop.f32.mrb[0].mxu0
    %v558 = vpop.f32.mrb[0].mxu0
    %559 = vdwg.mxu0
    %v561 = vrot.slane %v555, 4
    %v563 = vadd.f32 %v290, %v561
    %v564 = vxor.u32 %v511, 2147483648
    %v565 = vmul.f32 %v564, 1.442695
    %v566 = vpow.pop %v565
    %v567 = vadd.f32 %v566, 1.0
    %v568 = vrcp.pop %v567
    %v569 = vmul.f32 1.0, %v568
    %v570 = vtanh.pop %v511
    %v572 = vrot.slane %v430, 6
    %v574 = vmul.f32 %v569, %v572
    %576 = vrot.lane.b32.xlu0 %v570, 32
    %v577 = vpop.permute.xlu0 %576
    %v579 = vmul.f32 %v569, %v577
    %581 = vrot.lane.b32.xlu0 %v579, 32
    %v582 = vpop.permute.xlu0 %581
    %v584 = vadd.f32 %v574, %v582
    %v585 = vtanh.pop %v584
    %587 = vrot.lane.b32.xlu0 %v585, 32
    %v588 = vpop.permute.xlu0 %587
    %v590 = vmul.f32 %v569, %v588
    %v591 = vxor.u32 %v563, 2147483648
    %v592 = vmul.f32 %v591, 1.442695
    %v593 = vpow.pop %v592
    %v594 = vadd.f32 %v593, 1.0
    %v595 = vrcp.pop %v594
    %v596 = vmul.f32 1.0, %v595
    %v597 = vtanh.pop %v563
    %v599 = vrot.slane %v454, 2
    %v601 = vmul.f32 %v596, %v599
    %603 = vrot.lane.b32.xlu0 %v597, 32
    %v604 = vpop.permute.xlu0 %603
    %v606 = vmul.f32 %v596, %v604
    %608 = vrot.lane.b32.xlu0 %v606, 32
    %v609 = vpop.permute.xlu0 %608
    %v611 = vadd.f32 %v601, %v609
    %v612 = vtanh.pop %v611
    %614 = vrot.lane.b32.xlu0 %v612, 32
    %v615 = vpop.permute.xlu0 %614
    %v617 = vmul.f32 %v596, %v615
    %v618 = vpack.c.bf16 %v590, %v590
    %v620 = vrot.slane %v618, 1
    %621 = vrot.lane.b32.xlu0 %v620, 64
    %v622 = vpop.permute.xlu0 %621
    %v624 = vsel %vm312, %v622, 0
    %626 = vmatprep.subr.bf16.mxu0 0
    %627 = vmatpush1.bf16.msra.mxu0 %v308
    %628 = vmatprep.subr.bf16.mxu0 0
    %629 = vmatpush1.bf16.msra.mxu0 %v309
    %630 = vmatprep.subr.bf16.mxu0 0
    %631 = vmatpush1.bf16.msra.mxu0 0
    %632 = vmatprep.subr.bf16.mxu0 0
    %633 = vmatpush1.bf16.msra.mxu0 0
    %634 = vmatprep.subr.bf16.mxu0 0
    %635 = vmatpush1.bf16.msra.mxu0 0
    %636 = vmatprep.subr.bf16.mxu0 0
    %637 = vmatpush1.bf16.msra.mxu0 0
    %638 = vmatprep.subr.bf16.mxu0 0
    %639 = vmatpush1.bf16.msra.mxu0 0
    %640 = vmatprep.subr.bf16.mxu0 0
    %641 = vmatpush1.bf16.msra.mxu0 0
    %642 = vmatprep.subr.bf16.mxu0 0
    %643 = vmatpush1.bf16.msra.mxu0 0
    %644 = vmatprep.subr.bf16.mxu0 0
    %645 = vmatpush1.bf16.msra.mxu0 0
    %646 = vmatprep.subr.bf16.mxu0 0
    %647 = vmatpush1.bf16.msra.mxu0 0
    %648 = vmatprep.subr.bf16.mxu0 0
    %649 = vmatpush1.bf16.msra.mxu0 0
    %650 = vmatprep.subr.bf16.mxu0 0
    %651 = vmatpush1.bf16.msra.mxu0 0
    %652 = vmatprep.subr.bf16.mxu0 0
    %653 = vmatpush1.bf16.msra.mxu0 0
    %654 = vmatprep.subr.bf16.mxu0 0
    %655 = vmatpush1.bf16.msra.mxu0 0
    %656 = vmatprep.subr.bf16.mxu0 0
    %657 = vmatpush1.bf16.msra.mxu0 0
    %658 = vmatprep.mubr.bf16.mxu0 0
    %659 = vmatmul.mubr.bf16.gmra.mrb[0].mxu0 %v624
    %v660 = vpop.f32.mrb[0].mxu0
    %v661 = vadd.f32 0.0, %v660
    %v662 = vpop.f32.mrb[0].mxu0
    %v663 = vpop.f32.mrb[0].mxu0
    %v664 = vpop.f32.mrb[0].mxu0
    %665 = vdwg.mxu0
    %v667 = vrot.slane %v661, 4
    %v669 = vadd.f32 %v284, %v667
    %v670 = vpack.c.bf16 %v617, %v617
    %v672 = vrot.slane %v670, 2
    %673 = vrot.lane.b32.xlu0 %v672, 64
    %v674 = vpop.permute.xlu0 %673
    %v676 = vsel %vm312, %v674, 0
    %678 = vmatprep.subr.bf16.mxu0 0
    %679 = vmatpush1.bf16.msra.mxu0 %v365
    %680 = vmatprep.subr.bf16.mxu0 0
    %681 = vmatpush1.bf16.msra.mxu0 %v366
    %682 = vmatprep.subr.bf16.mxu0 0
    %683 = vmatpush1.bf16.msra.mxu0 0
    %684 = vmatprep.subr.bf16.mxu0 0
    %685 = vmatpush1.bf16.msra.mxu0 0
    %686 = vmatprep.subr.bf16.mxu0 0
    %687 = vmatpush1.bf16.msra.mxu0 0
    %688 = vmatprep.subr.bf16.mxu0 0
    %689 = vmatpush1.bf16.msra.mxu0 0
    %690 = vmatprep.subr.bf16.mxu0 0
    %691 = vmatpush1.bf16.msra.mxu0 0
    %692 = vmatprep.subr.bf16.mxu0 0
    %693 = vmatpush1.bf16.msra.mxu0 0
    %694 = vmatprep.subr.bf16.mxu0 0
    %695 = vmatpush1.bf16.msra.mxu0 0
    %696 = vmatprep.subr.bf16.mxu0 0
    %697 = vmatpush1.bf16.msra.mxu0 0
    %698 = vmatprep.subr.bf16.mxu0 0
    %699 = vmatpush1.bf16.msra.mxu0 0
    %700 = vmatprep.subr.bf16.mxu0 0
    %701 = vmatpush1.bf16.msra.mxu0 0
    %702 = vmatprep.subr.bf16.mxu0 0
    %703 = vmatpush1.bf16.msra.mxu0 0
    %704 = vmatprep.subr.bf16.mxu0 0
    %705 = vmatpush1.bf16.msra.mxu0 0
    %706 = vmatprep.subr.bf16.mxu0 0
    %707 = vmatpush1.bf16.msra.mxu0 0
    %708 = vmatprep.subr.bf16.mxu0 0
    %709 = vmatpush1.bf16.msra.mxu0 0
    %710 = vmatprep.mubr.bf16.mxu0 0
    %711 = vmatmul.mubr.bf16.gmra.mrb[0].mxu0 %v676
    %v712 = vpop.f32.mrb[0].mxu0
    %v713 = vadd.f32 0.0, %v712
    %v714 = vpop.f32.mrb[0].mxu0
    %v715 = vpop.f32.mrb[0].mxu0
    %v716 = vpop.f32.mrb[0].mxu0
    %717 = vdwg.mxu0
    %v719 = vrot.slane %v713, 6
    %v721 = vadd.f32 %v290, %v719
    %v722 = vxor.u32 %v669, 2147483648
    %v723 = vmul.f32 %v722, 1.442695
    %v724 = vpow.pop %v723
    %v725 = vadd.f32 %v724, 1.0
    %v726 = vrcp.pop %v725
    %v727 = vmul.f32 1.0, %v726
    %v728 = vtanh.pop %v669
    %v730 = vrot.slane %v584, 6
    %v732 = vmul.f32 %v727, %v730
    %734 = vrot.lane.b32.xlu0 %v728, 32
    %v735 = vpop.permute.xlu0 %734
    %v737 = vmul.f32 %v727, %v735
    %739 = vrot.lane.b32.xlu0 %v737, 32
    %v740 = vpop.permute.xlu0 %739
    %v742 = vadd.f32 %v732, %v740
    %v743 = vtanh.pop %v742
    %745 = vrot.lane.b32.xlu0 %v743, 32
    %v746 = vpop.permute.xlu0 %745
    %v748 = vmul.f32 %v727, %v746
    %v749 = vxor.u32 %v721, 2147483648
    %v750 = vmul.f32 %v749, 1.442695
    %v751 = vpow.pop %v750
    %v752 = vadd.f32 %v751, 1.0
    %v753 = vrcp.pop %v752
    %v754 = vmul.f32 1.0, %v753
    %v755 = vtanh.pop %v721
    %v757 = vrot.slane %v611, 2
    %v759 = vmul.f32 %v754, %v757
    %761 = vrot.lane.b32.xlu0 %v755, 32
    %v762 = vpop.permute.xlu0 %761
    %v764 = vmul.f32 %v754, %v762
    %766 = vrot.lane.b32.xlu0 %v764, 32
    %v767 = vpop.permute.xlu0 %766
    %v769 = vadd.f32 %v759, %v767
    %v770 = vtanh.pop %v769
    %772 = vrot.lane.b32.xlu0 %v770, 32
    %v773 = vpop.permute.xlu0 %772
    %v775 = vmul.f32 %v754, %v773
    %v776 = vpack.c.bf16 %v748, %v748
    %v778 = vrot.slane %v776, 2
    %779 = vrot.lane.b32.xlu0 %v778, 64
    %v780 = vpop.permute.xlu0 %779
    %v782 = vsel %vm312, %v780, 0
    %784 = vmatprep.subr.bf16.mxu0 0
    %785 = vmatpush1.bf16.msra.mxu0 %v308
    %786 = vmatprep.subr.bf16.mxu0 0
    %787 = vmatpush1.bf16.msra.mxu0 %v309
    %788 = vmatprep.subr.bf16.mxu0 0
    %789 = vmatpush1.bf16.msra.mxu0 0
    %790 = vmatprep.subr.bf16.mxu0 0
    %791 = vmatpush1.bf16.msra.mxu0 0
    %792 = vmatprep.subr.bf16.mxu0 0
    %793 = vmatpush1.bf16.msra.mxu0 0
    %794 = vmatprep.subr.bf16.mxu0 0
    %795 = vmatpush1.bf16.msra.mxu0 0
    %796 = vmatprep.subr.bf16.mxu0 0
    %797 = vmatpush1.bf16.msra.mxu0 0
    %798 = vmatprep.subr.bf16.mxu0 0
    %799 = vmatpush1.bf16.msra.mxu0 0
    %800 = vmatprep.subr.bf16.mxu0 0
    %801 = vmatpush1.bf16.msra.mxu0 0
    %802 = vmatprep.subr.bf16.mxu0 0
    %803 = vmatpush1.bf16.msra.mxu0 0
    %804 = vmatprep.subr.bf16.mxu0 0
    %805 = vmatpush1.bf16.msra.mxu0 0
    %806 = vmatprep.subr.bf16.mxu0 0
    %807 = vmatpush1.bf16.msra.mxu0 0
    %808 = vmatprep.subr.bf16.mxu0 0
    %809 = vmatpush1.bf16.msra.mxu0 0
    %810 = vmatprep.subr.bf16.mxu0 0
    %811 = vmatpush1.bf16.msra.mxu0 0
    %812 = vmatprep.subr.bf16.mxu0 0
    %813 = vmatpush1.bf16.msra.mxu0 0
    %814 = vmatprep.subr.bf16.mxu0 0
    %815 = vmatpush1.bf16.msra.mxu0 0
    %816 = vmatprep.mubr.bf16.mxu0 0
    %817 = vmatmul.mubr.bf16.gmra.mrb[0].mxu0 %v782
    %v818 = vpop.f32.mrb[0].mxu0
    %v819 = vadd.f32 0.0, %v818
    %v820 = vpop.f32.mrb[0].mxu0
    %v821 = vpop.f32.mrb[0].mxu0
    %v822 = vpop.f32.mrb[0].mxu0
    %823 = vdwg.mxu0
    %v825 = vrot.slane %v819, 2
    %v827 = vadd.f32 %v284, %v825
    %v828 = vpack.c.bf16 %v775, %v775
    %v830 = vrot.slane %v828, 1
    %831 = vrot.lane.b32.xlu0 %v830, 64
    %v832 = vpop.permute.xlu0 %831
    %v834 = vsel %vm312, %v832, 0
    %836 = vmatprep.subr.bf16.mxu0 0
    %837 = vmatpush1.bf16.msra.mxu0 %v365
    %838 = vmatprep.subr.bf16.mxu0 0
    %839 = vmatpush1.bf16.msra.mxu0 %v366
    %840 = vmatprep.subr.bf16.mxu0 0
    %841 = vmatpush1.bf16.msra.mxu0 0
    %842 = vmatprep.subr.bf16.mxu0 0
    %843 = vmatpush1.bf16.msra.mxu0 0
    %844 = vmatprep.subr.bf16.mxu0 0
    %845 = vmatpush1.bf16.msra.mxu0 0
    %846 = vmatprep.subr.bf16.mxu0 0
    %847 = vmatpush1.bf16.msra.mxu0 0
    %848 = vmatprep.subr.bf16.mxu0 0
    %849 = vmatpush1.bf16.msra.mxu0 0
    %850 = vmatprep.subr.bf16.mxu0 0
    %851 = vmatpush1.bf16.msra.mxu0 0
    %852 = vmatprep.subr.bf16.mxu0 0
    %853 = vmatpush1.bf16.msra.mxu0 0
    %854 = vmatprep.subr.bf16.mxu0 0
    %855 = vmatpush1.bf16.msra.mxu0 0
    %856 = vmatprep.subr.bf16.mxu0 0
    %857 = vmatpush1.bf16.msra.mxu0 0
    %858 = vmatprep.subr.bf16.mxu0 0
    %859 = vmatpush1.bf16.msra.mxu0 0
    %860 = vmatprep.subr.bf16.mxu0 0
    %861 = vmatpush1.bf16.msra.mxu0 0
    %862 = vmatprep.subr.bf16.mxu0 0
    %863 = vmatpush1.bf16.msra.mxu0 0
    %864 = vmatprep.subr.bf16.mxu0 0
    %865 = vmatpush1.bf16.msra.mxu0 0
    %866 = vmatprep.subr.bf16.mxu0 0
    %867 = vmatpush1.bf16.msra.mxu0 0
    %868 = vmatprep.mubr.bf16.mxu0 0
    %869 = vmatmul.mubr.bf16.gmra.mrb[0].mxu0 %v834
    %v870 = vpop.f32.mrb[0].mxu0
    %v871 = vadd.f32 0.0, %v870
    %v872 = vpop.f32.mrb[0].mxu0
    %v873 = vpop.f32.mrb[0].mxu0
    %v874 = vpop.f32.mrb[0].mxu0
    %875 = vdwg.mxu0
    %v876 = vadd.f32 %v290, %v871
    %v877 = vxor.u32 %v827, 2147483648
    %v878 = vmul.f32 %v877, 1.442695
    %v879 = vpow.pop %v878
    %v880 = vadd.f32 %v879, 1.0
    %v881 = vrcp.pop %v880
    %v882 = vmul.f32 1.0, %v881
    %v883 = vtanh.pop %v827
    %v885 = vrot.slane %v742, 6
    %v887 = vmul.f32 %v882, %v885
    %889 = vrot.lane.b32.xlu0 %v883, 32
    %v890 = vpop.permute.xlu0 %889
    %v892 = vmul.f32 %v882, %v890
    %894 = vrot.lane.b32.xlu0 %v892, 32
    %v895 = vpop.permute.xlu0 %894
    %v897 = vadd.f32 %v887, %v895
    %v898 = vtanh.pop %v897
    %900 = vrot.lane.b32.xlu0 %v898, 32
    %v901 = vpop.permute.xlu0 %900
    %v903 = vmul.f32 %v882, %v901
    %v904 = vxor.u32 %v876, 2147483648
    %v905 = vmul.f32 %v904, 1.442695
    %v906 = vpow.pop %v905
    %v907 = vadd.f32 %v906, 1.0
    %v908 = vrcp.pop %v907
    %v909 = vmul.f32 1.0, %v908
    %v910 = vtanh.pop %v876
    %v912 = vrot.slane %v769, 2
    %v914 = vmul.f32 %v909, %v912
    %916 = vrot.lane.b32.xlu0 %v910, 32
    %v917 = vpop.permute.xlu0 %916
    %v919 = vmul.f32 %v909, %v917
    %921 = vrot.lane.b32.xlu0 %v919, 32
    %v922 = vpop.permute.xlu0 %921
    %v924 = vadd.f32 %v914, %v922
    %v925 = vtanh.pop %v924
    %927 = vrot.lane.b32.xlu0 %v925, 32
    %v928 = vpop.permute.xlu0 %927
    %v930 = vmul.f32 %v909, %v928
    %v931 = vpack.c.bf16 %v903, %v903
    %v933 = vrot.slane %v931, 3
    %934 = vrot.lane.b32.xlu0 %v933, 64
    %v935 = vpop.permute.xlu0 %934
    %v937 = vsel %vm312, %v935, 0
    %939 = vmatprep.subr.bf16.mxu0 0
    %940 = vmatpush1.bf16.msra.mxu0 %v308
    %941 = vmatprep.subr.bf16.mxu0 0
    %942 = vmatpush1.bf16.msra.mxu0 %v309
    %943 = vmatprep.subr.bf16.mxu0 0
    %944 = vmatpush1.bf16.msra.mxu0 0
    %945 = vmatprep.subr.bf16.mxu0 0
    %946 = vmatpush1.bf16.msra.mxu0 0
    %947 = vmatprep.subr.bf16.mxu0 0
    %948 = vmatpush1.bf16.msra.mxu0 0
    %949 = vmatprep.subr.bf16.mxu0 0
    %950 = vmatpush1.bf16.msra.mxu0 0
    %951 = vmatprep.subr.bf16.mxu0 0
    %952 = vmatpush1.bf16.msra.mxu0 0
    %953 = vmatprep.subr.bf16.mxu0 0
    %954 = vmatpush1.bf16.msra.mxu0 0
    %955 = vmatprep.subr.bf16.mxu0 0
    %956 = vmatpush1.bf16.msra.mxu0 0
    %957 = vmatprep.subr.bf16.mxu0 0
    %958 = vmatpush1.bf16.msra.mxu0 0
    %959 = vmatprep.subr.bf16.mxu0 0
    %960 = vmatpush1.bf16.msra.mxu0 0
    %961 = vmatprep.subr.bf16.mxu0 0
    %962 = vmatpush1.bf16.msra.mxu0 0
    %963 = vmatprep.subr.bf16.mxu0 0
    %964 = vmatpush1.bf16.msra.mxu0 0
    %965 = vmatprep.subr.bf16.mxu0 0
    %966 = vmatpush1.bf16.msra.mxu0 0
    %967 = vmatprep.subr.bf16.mxu0 0
    %968 = vmatpush1.bf16.msra.mxu0 0
    %969 = vmatprep.subr.bf16.mxu0 0
    %970 = vmatpush1.bf16.msra.mxu0 0
    %971 = vmatprep.mubr.bf16.mxu0 0
    %972 = vmatmul.mubr.bf16.gmra.mrb[0].mxu0 %v937
    %v973 = vpop.f32.mrb[0].mxu0
    %v974 = vadd.f32 0.0, %v973
    %v975 = vpop.f32.mrb[0].mxu0
    %v976 = vpop.f32.mrb[0].mxu0
    %v977 = vpop.f32.mrb[0].mxu0
    %978 = vdwg.mxu0
    %v979 = vadd.f32 %v288, %v974
    %v980 = vpack.c.bf16 %v930, %v930
    %982 = vrot.lane.b32.xlu0 %v980, 64
    %v983 = vpop.permute.xlu0 %982
    %v985 = vsel %vm312, %v983, 0
    %987 = vmatprep.subr.bf16.mxu0 0
    %988 = vmatpush1.bf16.msra.mxu0 %v365
    %989 = vmatprep.subr.bf16.mxu0 0
    %990 = vmatpush1.bf16.msra.mxu0 %v366
    %991 = vmatprep.subr.bf16.mxu0 0
    %992 = vmatpush1.bf16.msra.mxu0 0
    %993 = vmatprep.subr.bf16.mxu0 0
    %994 = vmatpush1.bf16.msra.mxu0 0
    %995 = vmatprep.subr.bf16.mxu0 0
    %996 = vmatpush1.bf16.msra.mxu0 0
    %997 = vmatprep.subr.bf16.mxu0 0
    %998 = vmatpush1.bf16.msra.mxu0 0
    %999 = vmatprep.subr.bf16.mxu0 0
    %1000 = vmatpush1.bf16.msra.mxu0 0
    %1001 = vmatprep.subr.bf16.mxu0 0
    %1002 = vmatpush1.bf16.msra.mxu0 0
    %1003 = vmatprep.subr.bf16.mxu0 0
    %1004 = vmatpush1.bf16.msra.mxu0 0
    %1005 = vmatprep.subr.bf16.mxu0 0
    %1006 = vmatpush1.bf16.msra.mxu0 0
    %1007 = vmatprep.subr.bf16.mxu0 0
    %1008 = vmatpush1.bf16.msra.mxu0 0
    %1009 = vmatprep.subr.bf16.mxu0 0
    %1010 = vmatpush1.bf16.msra.mxu0 0
    %1011 = vmatprep.subr.bf16.mxu0 0
    %1012 = vmatpush1.bf16.msra.mxu0 0
    %1013 = vmatprep.subr.bf16.mxu0 0
    %1014 = vmatpush1.bf16.msra.mxu0 0
    %1015 = vmatprep.subr.bf16.mxu0 0
    %1016 = vmatpush1.bf16.msra.mxu0 0
    %1017 = vmatprep.subr.bf16.mxu0 0
    %1018 = vmatpush1.bf16.msra.mxu0 0
    %1019 = vmatprep.mubr.bf16.mxu0 0
    %1020 = vmatmul.mubr.bf16.gmra.mrb[0].mxu0 %v985
    %v1021 = vpop.f32.mrb[0].mxu0
    %v1022 = vadd.f32 0.0, %v1021
    %v1023 = vpop.f32.mrb[0].mxu0
    %v1024 = vpop.f32.mrb[0].mxu0
    %v1025 = vpop.f32.mrb[0].mxu0
    %1026 = vdwg.mxu0
    %v1028 = vrot.slane %v1022, 2
    %v1030 = vadd.f32 %v286, %v1028
    %v1031 = vxor.u32 %v979, 2147483648
    %v1032 = vmul.f32 %v1031, 1.442695
    %v1033 = vpow.pop %v1032
    %v1034 = vadd.f32 %v1033, 1.0
    %v1035 = vrcp.pop %v1034
    %v1036 = vmul.f32 1.0, %v1035
    %v1037 = vtanh.pop %v979
    %v1039 = vrot.slane %v897, 6
    %v1041 = vmul.f32 %v1036, %v1039
    %1043 = vrot.lane.b32.xlu0 %v1037, 32
    %v1044 = vpop.permute.xlu0 %1043
    %v1046 = vmul.f32 %v1036, %v1044
    %1048 = vrot.lane.b32.xlu0 %v1046, 32
    %v1049 = vpop.permute.xlu0 %1048
    %v1051 = vadd.f32 %v1041, %v1049
    %v1052 = vtanh.pop %v1051
    %1054 = vrot.lane.b32.xlu0 %v1052, 32
    %v1055 = vpop.permute.xlu0 %1054
    %v1057 = vmul.f32 %v1036, %v1055
    %v1058 = vxor.u32 %v1030, 2147483648
    %v1059 = vmul.f32 %v1058, 1.442695
    %v1060 = vpow.pop %v1059
    %v1061 = vadd.f32 %v1060, 1.0
    %v1062 = vrcp.pop %v1061
    %v1063 = vmul.f32 1.0, %v1062
    %v1064 = vtanh.pop %v1030
    %v1066 = vrot.slane %v924, 2
    %v1068 = vmul.f32 %v1063, %v1066
    %1070 = vrot.lane.b32.xlu0 %v1064, 32
    %v1071 = vpop.permute.xlu0 %1070
    %v1073 = vmul.f32 %v1063, %v1071
    %1075 = vrot.lane.b32.xlu0 %v1073, 32
    %v1076 = vpop.permute.xlu0 %1075
    %v1078 = vadd.f32 %v1068, %v1076
    %v1079 = vtanh.pop %v1078
    %1081 = vrot.lane.b32.xlu0 %v1079, 32
    %v1082 = vpop.permute.xlu0 %1081
    %v1084 = vmul.f32 %v1063, %v1082
    %v1085 = vpack.c.bf16 %v1057, %v1057
    %1087 = vrot.lane.b32.xlu0 %v1085, 64
    %v1088 = vpop.permute.xlu0 %1087
    %v1090 = vsel %vm312, %v1088, 0
    %1092 = vmatprep.subr.bf16.mxu0 0
    %1093 = vmatpush1.bf16.msra.mxu0 %v308
    %1094 = vmatprep.subr.bf16.mxu0 0
    %1095 = vmatpush1.bf16.msra.mxu0 %v309
    %1096 = vmatprep.subr.bf16.mxu0 0
    %1097 = vmatpush1.bf16.msra.mxu0 0
    %1098 = vmatprep.subr.bf16.mxu0 0
    %1099 = vmatpush1.bf16.msra.mxu0 0
    %1100 = vmatprep.subr.bf16.mxu0 0
    %1101 = vmatpush1.bf16.msra.mxu0 0
    %1102 = vmatprep.subr.bf16.mxu0 0
    %1103 = vmatpush1.bf16.msra.mxu0 0
    %1104 = vmatprep.subr.bf16.mxu0 0
    %1105 = vmatpush1.bf16.msra.mxu0 0
    %1106 = vmatprep.subr.bf16.mxu0 0
    %1107 = vmatpush1.bf16.msra.mxu0 0
    %1108 = vmatprep.subr.bf16.mxu0 0
    %1109 = vmatpush1.bf16.msra.mxu0 0
    %1110 = vmatprep.subr.bf16.mxu0 0
    %1111 = vmatpush1.bf16.msra.mxu0 0
    %1112 = vmatprep.subr.bf16.mxu0 0
    %1113 = vmatpush1.bf16.msra.mxu0 0
    %1114 = vmatprep.subr.bf16.mxu0 0
    %1115 = vmatpush1.bf16.msra.mxu0 0
    %1116 = vmatprep.subr.bf16.mxu0 0
    %1117 = vmatpush1.bf16.msra.mxu0 0
    %1118 = vmatprep.subr.bf16.mxu0 0
    %1119 = vmatpush1.bf16.msra.mxu0 0
    %1120 = vmatprep.subr.bf16.mxu0 0
    %1121 = vmatpush1.bf16.msra.mxu0 0
    %1122 = vmatprep.subr.bf16.mxu0 0
    %1123 = vmatpush1.bf16.msra.mxu0 0
    %1124 = vmatprep.mubr.bf16.mxu0 0
    %1125 = vmatmul.mubr.bf16.gmra.mrb[0].mxu0 %v1090
    %v1126 = vpop.f32.mrb[0].mxu0
    %v1127 = vadd.f32 0.0, %v1126
    %v1128 = vpop.f32.mrb[0].mxu0
    %v1129 = vpop.f32.mrb[0].mxu0
    %v1130 = vpop.f32.mrb[0].mxu0
    %1131 = vdwg.mxu0
    %v1133 = vrot.slane %v1127, 6
    %v1135 = vadd.f32 %v288, %v1133
    %v1136 = vpack.c.bf16 %v1084, %v1084
    %v1138 = vrot.slane %v1136, 3
    %1139 = vrot.lane.b32.xlu0 %v1138, 64
    %v1140 = vpop.permute.xlu0 %1139
    %v1142 = vsel %vm312, %v1140, 0
    %1144 = vmatprep.subr.bf16.mxu0 0
    %1145 = vmatpush1.bf16.msra.mxu0 %v365
    %1146 = vmatprep.subr.bf16.mxu0 0
    %1147 = vmatpush1.bf16.msra.mxu0 %v366
    %1148 = vmatprep.subr.bf16.mxu0 0
    %1149 = vmatpush1.bf16.msra.mxu0 0
    %1150 = vmatprep.subr.bf16.mxu0 0
    %1151 = vmatpush1.bf16.msra.mxu0 0
    %1152 = vmatprep.subr.bf16.mxu0 0
    %1153 = vmatpush1.bf16.msra.mxu0 0
    %1154 = vmatprep.subr.bf16.mxu0 0
    %1155 = vmatpush1.bf16.msra.mxu0 0
    %1156 = vmatprep.subr.bf16.mxu0 0
    %1157 = vmatpush1.bf16.msra.mxu0 0
    %1158 = vmatprep.subr.bf16.mxu0 0
    %1159 = vmatpush1.bf16.msra.mxu0 0
    %1160 = vmatprep.subr.bf16.mxu0 0
    %1161 = vmatpush1.bf16.msra.mxu0 0
    %1162 = vmatprep.subr.bf16.mxu0 0
    %1163 = vmatpush1.bf16.msra.mxu0 0
    %1164 = vmatprep.subr.bf16.mxu0 0
    %1165 = vmatpush1.bf16.msra.mxu0 0
    %1166 = vmatprep.subr.bf16.mxu0 0
    %1167 = vmatpush1.bf16.msra.mxu0 0
    %1168 = vmatprep.subr.bf16.mxu0 0
    %1169 = vmatpush1.bf16.msra.mxu0 0
    %1170 = vmatprep.subr.bf16.mxu0 0
    %1171 = vmatpush1.bf16.msra.mxu0 0
    %1172 = vmatprep.subr.bf16.mxu0 0
    %1173 = vmatpush1.bf16.msra.mxu0 0
    %1174 = vmatprep.subr.bf16.mxu0 0
    %1175 = vmatpush1.bf16.msra.mxu0 0
    %1176 = vmatprep.mubr.bf16.mxu0 0
    %1177 = vmatmul.mubr.bf16.gmra.mrb[0].mxu0 %v1142
    %v1178 = vpop.f32.mrb[0].mxu0
    %v1179 = vadd.f32 0.0, %v1178
    %v1180 = vpop.f32.mrb[0].mxu0
    %v1181 = vpop.f32.mrb[0].mxu0
    %v1182 = vpop.f32.mrb[0].mxu0
    %1183 = vdwg.mxu0
    %v1185 = vrot.slane %v1179, 4
    %v1187 = vadd.f32 %v286, %v1185
    %v1188 = vxor.u32 %v1135, 2147483648
    %v1189 = vmul.f32 %v1188, 1.442695
    %v1190 = vpow.pop %v1189
    %v1191 = vadd.f32 %v1190, 1.0
    %v1192 = vrcp.pop %v1191
    %v1193 = vmul.f32 1.0, %v1192
    %v1194 = vtanh.pop %v1135
    %v1196 = vrot.slane %v1051, 6
    %v1198 = vmul.f32 %v1193, %v1196
    %1200 = vrot.lane.b32.xlu0 %v1194, 32
    %v1201 = vpop.permute.xlu0 %1200
    %v1203 = vmul.f32 %v1193, %v1201
    %1205 = vrot.lane.b32.xlu0 %v1203, 32
    %v1206 = vpop.permute.xlu0 %1205
    %v1208 = vadd.f32 %v1198, %v1206
    %v1209 = vtanh.pop %v1208
    %1211 = vrot.lane.b32.xlu0 %v1209, 32
    %v1212 = vpop.permute.xlu0 %1211
    %v1214 = vmul.f32 %v1193, %v1212
    %v1215 = vxor.u32 %v1187, 2147483648
    %v1216 = vmul.f32 %v1215, 1.442695
    %v1217 = vpow.pop %v1216
    %v1218 = vadd.f32 %v1217, 1.0
    %v1219 = vrcp.pop %v1218
    %v1220 = vmul.f32 1.0, %v1219
    %v1221 = vtanh.pop %v1187
    %v1223 = vrot.slane %v1078, 2
    %v1225 = vmul.f32 %v1220, %v1223
    %1227 = vrot.lane.b32.xlu0 %v1221, 32
    %v1228 = vpop.permute.xlu0 %1227
    %v1230 = vmul.f32 %v1220, %v1228
    %1232 = vrot.lane.b32.xlu0 %v1230, 32
    %v1233 = vpop.permute.xlu0 %1232
    %v1235 = vadd.f32 %v1225, %v1233
    %v1236 = vtanh.pop %v1235
    %1238 = vrot.lane.b32.xlu0 %v1236, 32
    %v1239 = vpop.permute.xlu0 %1238
    %v1241 = vmul.f32 %v1220, %v1239
    %v1242 = vpack.c.bf16 %v1214, %v1214
    %v1244 = vrot.slane %v1242, 1
    %1245 = vrot.lane.b32.xlu0 %v1244, 64
    %v1246 = vpop.permute.xlu0 %1245
    %v1248 = vsel %vm312, %v1246, 0
    %1250 = vmatprep.subr.bf16.mxu0 0
    %1251 = vmatpush1.bf16.msra.mxu0 %v308
    %1252 = vmatprep.subr.bf16.mxu0 0
    %1253 = vmatpush1.bf16.msra.mxu0 %v309
    %1254 = vmatprep.subr.bf16.mxu0 0
    %1255 = vmatpush1.bf16.msra.mxu0 0
    %1256 = vmatprep.subr.bf16.mxu0 0
    %1257 = vmatpush1.bf16.msra.mxu0 0
    %1258 = vmatprep.subr.bf16.mxu0 0
    %1259 = vmatpush1.bf16.msra.mxu0 0
    %1260 = vmatprep.subr.bf16.mxu0 0
    %1261 = vmatpush1.bf16.msra.mxu0 0
    %1262 = vmatprep.subr.bf16.mxu0 0
    %1263 = vmatpush1.bf16.msra.mxu0 0
    %1264 = vmatprep.subr.bf16.mxu0 0
    %1265 = vmatpush1.bf16.msra.mxu0 0
    %1266 = vmatprep.subr.bf16.mxu0 0
    %1267 = vmatpush1.bf16.msra.mxu0 0
    %1268 = vmatprep.subr.bf16.mxu0 0
    %1269 = vmatpush1.bf16.msra.mxu0 0
    %1270 = vmatprep.subr.bf16.mxu0 0
    %1271 = vmatpush1.bf16.msra.mxu0 0
    %1272 = vmatprep.subr.bf16.mxu0 0
    %1273 = vmatpush1.bf16.msra.mxu0 0
    %1274 = vmatprep.subr.bf16.mxu0 0
    %1275 = vmatpush1.bf16.msra.mxu0 0
    %1276 = vmatprep.subr.bf16.mxu0 0
    %1277 = vmatpush1.bf16.msra.mxu0 0
    %1278 = vmatprep.subr.bf16.mxu0 0
    %1279 = vmatpush1.bf16.msra.mxu0 0
    %1280 = vmatprep.subr.bf16.mxu0 0
    %1281 = vmatpush1.bf16.msra.mxu0 0
    %1282 = vmatprep.mubr.bf16.mxu0 0
    %1283 = vmatmul.mubr.bf16.gmra.mrb[0].mxu0 %v1248
    %v1284 = vpop.f32.mrb[0].mxu0
    %v1285 = vadd.f32 0.0, %v1284
    %v1286 = vpop.f32.mrb[0].mxu0
    %v1287 = vpop.f32.mrb[0].mxu0
    %v1288 = vpop.f32.mrb[0].mxu0
    %1289 = vdwg.mxu0
    %v1291 = vrot.slane %v1285, 4
    %v1293 = vadd.f32 %v288, %v1291
    %v1294 = vpack.c.bf16 %v1241, %v1241
    %v1296 = vrot.slane %v1294, 2
    %1297 = vrot.lane.b32.xlu0 %v1296, 64
    %v1298 = vpop.permute.xlu0 %1297
    %v1300 = vsel %vm312, %v1298, 0
    %1302 = vmatprep.subr.bf16.mxu0 0
    %1303 = vmatpush1.bf16.msra.mxu0 %v365
    %1304 = vmatprep.subr.bf16.mxu0 0
    %1305 = vmatpush1.bf16.msra.mxu0 %v366
    %1306 = vmatprep.subr.bf16.mxu0 0
    %1307 = vmatpush1.bf16.msra.mxu0 0
    %1308 = vmatprep.subr.bf16.mxu0 0
    %1309 = vmatpush1.bf16.msra.mxu0 0
    %1310 = vmatprep.subr.bf16.mxu0 0
    %1311 = vmatpush1.bf16.msra.mxu0 0
    %1312 = vmatprep.subr.bf16.mxu0 0
    %1313 = vmatpush1.bf16.msra.mxu0 0
    %1314 = vmatprep.subr.bf16.mxu0 0
    %1315 = vmatpush1.bf16.msra.mxu0 0
    %1316 = vmatprep.subr.bf16.mxu0 0
    %1317 = vmatpush1.bf16.msra.mxu0 0
    %1318 = vmatprep.subr.bf16.mxu0 0
    %1319 = vmatpush1.bf16.msra.mxu0 0
    %1320 = vmatprep.subr.bf16.mxu0 0
    %1321 = vmatpush1.bf16.msra.mxu0 0
    %1322 = vmatprep.subr.bf16.mxu0 0
    %1323 = vmatpush1.bf16.msra.mxu0 0
    %1324 = vmatprep.subr.bf16.mxu0 0
    %1325 = vmatpush1.bf16.msra.mxu0 0
    %1326 = vmatprep.subr.bf16.mxu0 0
    %1327 = vmatpush1.bf16.msra.mxu0 0
    %1328 = vmatprep.subr.bf16.mxu0 0
    %1329 = vmatpush1.bf16.msra.mxu0 0
    %1330 = vmatprep.subr.bf16.mxu0 0
    %1331 = vmatpush1.bf16.msra.mxu0 0
    %1332 = vmatprep.subr.bf16.mxu0 0
    %1333 = vmatpush1.bf16.msra.mxu0 0
    %1334 = vmatprep.mubr.bf16.mxu0 0
    %1335 = vmatmul.mubr.bf16.gmra.mrb[0].mxu0 %v1300
    %v1336 = vpop.f32.mrb[0].mxu0
    %v1337 = vadd.f32 0.0, %v1336
    %v1338 = vpop.f32.mrb[0].mxu0
    %v1339 = vpop.f32.mrb[0].mxu0
    %v1340 = vpop.f32.mrb[0].mxu0
    %1341 = vdwg.mxu0
    %v1343 = vrot.slane %v1337, 6
    %v1345 = vadd.f32 %v286, %v1343
    %v1346 = vxor.u32 %v1293, 2147483648
    %v1347 = vmul.f32 %v1346, 1.442695
    %v1348 = vpow.pop %v1347
    %v1349 = vadd.f32 %v1348, 1.0
    %v1350 = vrcp.pop %v1349
    %v1351 = vmul.f32 1.0, %v1350
    %v1352 = vtanh.pop %v1293
    %v1354 = vrot.slane %v1208, 6
    %v1356 = vmul.f32 %v1351, %v1354
    %1358 = vrot.lane.b32.xlu0 %v1352, 32
    %v1359 = vpop.permute.xlu0 %1358
    %v1361 = vmul.f32 %v1351, %v1359
    %1363 = vrot.lane.b32.xlu0 %v1361, 32
    %v1364 = vpop.permute.xlu0 %1363
    %v1366 = vadd.f32 %v1356, %v1364
    %v1367 = vtanh.pop %v1366
    %1369 = vrot.lane.b32.xlu0 %v1367, 32
    %v1370 = vpop.permute.xlu0 %1369
    %v1372 = vmul.f32 %v1351, %v1370
    %v1373 = vxor.u32 %v1345, 2147483648
    %v1374 = vmul.f32 %v1373, 1.442695
    %v1375 = vpow.pop %v1374
    %v1376 = vadd.f32 %v1375, 1.0
    %v1377 = vrcp.pop %v1376
    %v1378 = vmul.f32 1.0, %v1377
    %v1379 = vtanh.pop %v1345
    %v1381 = vrot.slane %v1235, 2
    %v1383 = vmul.f32 %v1378, %v1381
    %1385 = vrot.lane.b32.xlu0 %v1379, 32
    %v1386 = vpop.permute.xlu0 %1385
    %v1388 = vmul.f32 %v1378, %v1386
    %1390 = vrot.lane.b32.xlu0 %v1388, 32
    %v1391 = vpop.permute.xlu0 %1390
    %v1393 = vadd.f32 %v1383, %v1391
    %v1394 = vtanh.pop %v1393
    %1396 = vrot.lane.b32.xlu0 %v1394, 32
    %v1397 = vpop.permute.xlu0 %1396
    %v1399 = vmul.f32 %v1378, %v1397
    %v1400 = vpack.c.bf16 %v1372, %v1372
    %v1402 = vrot.slane %v1400, 2
    %1403 = vrot.lane.b32.xlu0 %v1402, 64
    %v1404 = vpop.permute.xlu0 %1403
    %v1406 = vsel %vm312, %v1404, 0
    %1408 = vmatprep.subr.bf16.mxu0 0
    %1409 = vmatpush1.bf16.msra.mxu0 %v308
    %1410 = vmatprep.subr.bf16.mxu0 0
    %1411 = vmatpush1.bf16.msra.mxu0 %v309
    %1412 = vmatprep.subr.bf16.mxu0 0
    %1413 = vmatpush1.bf16.msra.mxu0 0
    %1414 = vmatprep.subr.bf16.mxu0 0
    %1415 = vmatpush1.bf16.msra.mxu0 0
    %1416 = vmatprep.subr.bf16.mxu0 0
    %1417 = vmatpush1.bf16.msra.mxu0 0
    %1418 = vmatprep.subr.bf16.mxu0 0
    %1419 = vmatpush1.bf16.msra.mxu0 0
    %1420 = vmatprep.subr.bf16.mxu0 0
    %1421 = vmatpush1.bf16.msra.mxu0 0
    %1422 = vmatprep.subr.bf16.mxu0 0
    %1423 = vmatpush1.bf16.msra.mxu0 0
    %1424 = vmatprep.subr.bf16.mxu0 0
    %1425 = vmatpush1.bf16.msra.mxu0 0
    %1426 = vmatprep.subr.bf16.mxu0 0
    %1427 = vmatpush1.bf16.msra.mxu0 0
    %1428 = vmatprep.subr.bf16.mxu0 0
    %1429 = vmatpush1.bf16.msra.mxu0 0
    %1430 = vmatprep.subr.bf16.mxu0 0
    %1431 = vmatpush1.bf16.msra.mxu0 0
    %1432 = vmatprep.subr.bf16.mxu0 0
    %1433 = vmatpush1.bf16.msra.mxu0 0
    %1434 = vmatprep.subr.bf16.mxu0 0
    %1435 = vmatpush1.bf16.msra.mxu0 0
    %1436 = vmatprep.subr.bf16.mxu0 0
    %1437 = vmatpush1.bf16.msra.mxu0 0
    %1438 = vmatprep.subr.bf16.mxu0 0
    %1439 = vmatpush1.bf16.msra.mxu0 0
    %1440 = vmatprep.mubr.bf16.mxu0 0
    %1441 = vmatmul.mubr.bf16.gmra.mrb[0].mxu0 %v1406
    %v1442 = vpop.f32.mrb[0].mxu0
    %v1443 = vadd.f32 0.0, %v1442
    %v1444 = vpop.f32.mrb[0].mxu0
    %v1445 = vpop.f32.mrb[0].mxu0
    %v1446 = vpop.f32.mrb[0].mxu0
    %1447 = vdwg.mxu0
    %v1449 = vrot.slane %v1443, 2
    %v1451 = vadd.f32 %v288, %v1449
    %v1452 = vpack.c.bf16 %v1399, %v1399
    %v1454 = vrot.slane %v1452, 1
    %1455 = vrot.lane.b32.xlu0 %v1454, 64
    %v1456 = vpop.permute.xlu0 %1455
    %v1458 = vsel %vm312, %v1456, 0
    %1460 = vmatprep.subr.bf16.mxu0 0
    %1461 = vmatpush1.bf16.msra.mxu0 %v365
    %1462 = vmatprep.subr.bf16.mxu0 0
    %1463 = vmatpush1.bf16.msra.mxu0 %v366
    %1464 = vmatprep.subr.bf16.mxu0 0
    %1465 = vmatpush1.bf16.msra.mxu0 0
    %1466 = vmatprep.subr.bf16.mxu0 0
    %1467 = vmatpush1.bf16.msra.mxu0 0
    %1468 = vmatprep.subr.bf16.mxu0 0
    %1469 = vmatpush1.bf16.msra.mxu0 0
    %1470 = vmatprep.subr.bf16.mxu0 0
    %1471 = vmatpush1.bf16.msra.mxu0 0
    %1472 = vmatprep.subr.bf16.mxu0 0
    %1473 = vmatpush1.bf16.msra.mxu0 0
    %1474 = vmatprep.subr.bf16.mxu0 0
    %1475 = vmatpush1.bf16.msra.mxu0 0
    %1476 = vmatprep.subr.bf16.mxu0 0
    %1477 = vmatpush1.bf16.msra.mxu0 0
    %1478 = vmatprep.subr.bf16.mxu0 0
    %1479 = vmatpush1.bf16.msra.mxu0 0
    %1480 = vmatprep.subr.bf16.mxu0 0
    %1481 = vmatpush1.bf16.msra.mxu0 0
    %1482 = vmatprep.subr.bf16.mxu0 0
    %1483 = vmatpush1.bf16.msra.mxu0 0
    %1484 = vmatprep.subr.bf16.mxu0 0
    %1485 = vmatpush1.bf16.msra.mxu0 0
    %1486 = vmatprep.subr.bf16.mxu0 0
    %1487 = vmatpush1.bf16.msra.mxu0 0
    %1488 = vmatprep.subr.bf16.mxu0 0
    %1489 = vmatpush1.bf16.msra.mxu0 0
    %1490 = vmatprep.subr.bf16.mxu0 0
    %1491 = vmatpush1.bf16.msra.mxu0 0
    %1492 = vmatprep.mubr.bf16.mxu0 0
    %1493 = vmatmul.mubr.bf16.gmra.mrb[0].mxu0 %v1458
    %v1494 = vpop.f32.mrb[0].mxu0
    %v1495 = vadd.f32 0.0, %v1494
    %v1496 = vpop.f32.mrb[0].mxu0
    %v1497 = vpop.f32.mrb[0].mxu0
    %v1498 = vpop.f32.mrb[0].mxu0
    %1499 = vdwg.mxu0
    %v1500 = vadd.f32 %v286, %v1495
    %v1501 = vxor.u32 %v1451, 2147483648
    %v1502 = vmul.f32 %v1501, 1.442695
    %v1503 = vpow.pop %v1502
    %v1504 = vadd.f32 %v1503, 1.0
    %v1505 = vrcp.pop %v1504
    %v1506 = vmul.f32 1.0, %v1505
    %v1507 = vtanh.pop %v1451
    %v1509 = vrot.slane %v1366, 6
    %v1511 = vmul.f32 %v1506, %v1509
    %1513 = vrot.lane.b32.xlu0 %v1507, 32
    %v1514 = vpop.permute.xlu0 %1513
    %v1516 = vmul.f32 %v1506, %v1514
    %1518 = vrot.lane.b32.xlu0 %v1516, 32
    %v1519 = vpop.permute.xlu0 %1518
    %v1521 = vadd.f32 %v1511, %v1519
    %v1522 = vtanh.pop %v1521
    %1524 = vrot.lane.b32.xlu0 %v1522, 32
    %v1525 = vpop.permute.xlu0 %1524
    %v1527 = vmul.f32 %v1506, %v1525
    %v1528 = vxor.u32 %v1500, 2147483648
    %v1529 = vmul.f32 %v1528, 1.442695
    %v1530 = vpow.pop %v1529
    %v1531 = vadd.f32 %v1530, 1.0
    %v1532 = vrcp.pop %v1531
    %v1533 = vmul.f32 1.0, %v1532
    %v1534 = vtanh.pop %v1500
    %v1536 = vrot.slane %v1393, 2
    %v1538 = vmul.f32 %v1533, %v1536
    %1540 = vrot.lane.b32.xlu0 %v1534, 32
    %v1541 = vpop.permute.xlu0 %1540
    %v1543 = vmul.f32 %v1533, %v1541
    %1545 = vrot.lane.b32.xlu0 %v1543, 32
    %v1546 = vpop.permute.xlu0 %1545
    %v1548 = vadd.f32 %v1538, %v1546
    %v1549 = vtanh.pop %v1548
    %1551 = vrot.lane.b32.xlu0 %v1549, 32
    %v1552 = vpop.permute.xlu0 %1551
    %v1554 = vmul.f32 %v1533, %v1552
    %vm1555 = vcmask 1041408
    %v1556 = vsel %vm1555, %v436, %v590
    %vm1557 = vcmask 1043456
    %v1558 = vsel %vm1557, %v1556, %v748
    %vm1559 = vcmask 1045504
    %v1560 = vsel %vm1559, %v1558, %v903
    %v1561 = vsel %vm1555, %v1057, %v1214
    %v1562 = vsel %vm1557, %v1561, %v1372
    %v1563 = vsel %vm1559, %v1562, %v1527
    %v1564 = vsel %vm1555, %v1554, %v1399
    %v1565 = vsel %vm1557, %v1564, %v1241
    %v1566 = vsel %vm1559, %v1565, %v1084
    %v1567 = vsel %vm1555, %v930, %v775
    %v1568 = vsel %vm1557, %v1567, %v617
    %v1569 = vsel %vm1559, %v1568, %v460
    %v1570 = vpack.c.bf16 %v1563, %v1560
    %v1571 = vld [vmem:[#allocation7] sm:$0xff]
    %v1572 = vld [vmem:[#allocation7 + $0x8] sm:$0xff]
    %v1573 = vld [vmem:[#allocation7 + $0x10] sm:$0xff]
    %v1574 = vld [vmem:[#allocation7 + $0x18] sm:$0xff]
    %v1575 = vpack.c.bf16 %v1569, %v1566
    %v1576 = vld [vmem:[#allocation8] sm:$0xff]
    %v1577 = vld [vmem:[#allocation8 + $0x8] sm:$0xff]
    %v1578 = vld [vmem:[#allocation8 + $0x10] sm:$0xff]
    %v1579 = vld [vmem:[#allocation8 + $0x18] sm:$0xff]
    %1581 = vrot.lane.b32.xlu0 %v1575, 64
    %v1582 = vpop.permute.xlu0 %1581
    %v1587 = vunpack.c.l.b16 %v1576
    %v1588 = vunpack.c.h.b16 %v1576
    %v1589 = vunpack.c.l.b16 %v1577
    %v1590 = vunpack.c.h.b16 %v1577
    %v1591 = vunpack.c.l.b16 %v1578
    %v1592 = vunpack.c.h.b16 %v1578
    %v1593 = vunpack.c.l.b16 %v1579
    %v1594 = vunpack.c.h.b16 %v1579
    %v1595 = vpack.c.b16 %v1589, %v1587
    %v1596 = vpack.c.b16 %v1590, %v1588
    %v1597 = vpack.c.b16 %v1593, %v1591
    %v1598 = vpack.c.b16 %v1594, %v1592
    %v1604 = vsel %vm312, %v1582, 0
    %1606 = vmatprep.subr.bf16.mxu0 %v1596
    %1607 = vmatpush1.bf16.msra.mxu0 %v1595
    %1608 = vmatprep.subr.bf16.mxu0 %v1598
    %1609 = vmatpush1.bf16.msra.mxu0 %v1597
    %1610 = vmatprep.subr.bf16.mxu0 0
    %1611 = vmatpush1.bf16.msra.mxu0 0
    %1612 = vmatprep.subr.bf16.mxu0 0
    %1613 = vmatpush1.bf16.msra.mxu0 0
    %1614 = vmatprep.subr.bf16.mxu0 0
    %1615 = vmatpush1.bf16.msra.mxu0 0
    %1616 = vmatprep.subr.bf16.mxu0 0
    %1617 = vmatpush1.bf16.msra.mxu0 0
    %1618 = vmatprep.subr.bf16.mxu0 0
    %1619 = vmatpush1.bf16.msra.mxu0 0
    %1620 = vmatprep.subr.bf16.mxu0 0
    %1621 = vmatpush1.bf16.msra.mxu0 0
    %1622 = vmatprep.subr.bf16.mxu0 0
    %1623 = vmatpush1.bf16.msra.mxu0 0
    %1624 = vmatprep.subr.bf16.mxu0 0
    %1625 = vmatpush1.bf16.msra.mxu0 0
    %1626 = vmatprep.subr.bf16.mxu0 0
    %1627 = vmatpush1.bf16.msra.mxu0 0
    %1628 = vmatprep.subr.bf16.mxu0 0
    %1629 = vmatpush1.bf16.msra.mxu0 0
    %1630 = vmatprep.subr.bf16.mxu0 0
    %1631 = vmatpush1.bf16.msra.mxu0 0
    %1632 = vmatprep.subr.bf16.mxu0 0
    %1633 = vmatpush1.bf16.msra.mxu0 0
    %1634 = vmatprep.subr.bf16.mxu0 0
    %1635 = vmatpush1.bf16.msra.mxu0 0
    %1636 = vmatprep.subr.bf16.mxu0 0
    %1637 = vmatpush1.bf16.msra.mxu0 0
    %1638 = vmatprep.mubr.bf16.mxu0 0
    %1639 = vmatmul.mubr.bf16.gmra.mrb[0].mxu0 %v1604
    %v1640 = vpop.f32.mrb[0].mxu0
    %v1641 = vadd.f32 0.0, %v1640
    %v1642 = vpop.f32.mrb[0].mxu0
    %v1643 = vadd.f32 0.0, %v1642
    %v1644 = vpop.f32.mrb[0].mxu0
    %v1645 = vadd.f32 0.0, %v1644
    %v1646 = vpop.f32.mrb[0].mxu0
    %v1647 = vadd.f32 0.0, %v1646
    %1648 = vdwg.mxu0
    %1650 = vrot.lane.b32.xlu0 %v1570, 64
    %v1651 = vpop.permute.xlu0 %1650
    %v1656 = vunpack.c.l.b16 %v1571
    %v1657 = vunpack.c.h.b16 %v1571
    %v1658 = vunpack.c.l.b16 %v1572
    %v1659 = vunpack.c.h.b16 %v1572
    %v1660 = vunpack.c.l.b16 %v1573
    %v1661 = vunpack.c.h.b16 %v1573
    %v1662 = vunpack.c.l.b16 %v1574
    %v1663 = vunpack.c.h.b16 %v1574
    %v1664 = vpack.c.b16 %v1658, %v1656
    %v1665 = vpack.c.b16 %v1659, %v1657
    %v1666 = vpack.c.b16 %v1662, %v1660
    %v1667 = vpack.c.b16 %v1663, %v1661
    %v1673 = vsel %vm312, %v1651, 0
    %1675 = vmatprep.subr.bf16.mxu0 %v1665
    %1676 = vmatpush1.bf16.msra.mxu0 %v1664
    %1677 = vmatprep.subr.bf16.mxu0 %v1667
    %1678 = vmatpush1.bf16.msra.mxu0 %v1666
    %1679 = vmatprep.subr.bf16.mxu0 0
    %1680 = vmatpush1.bf16.msra.mxu0 0
    %1681 = vmatprep.subr.bf16.mxu0 0
    %1682 = vmatpush1.bf16.msra.mxu0 0
    %1683 = vmatprep.subr.bf16.mxu0 0
    %1684 = vmatpush1.bf16.msra.mxu0 0
    %1685 = vmatprep.subr.bf16.mxu0 0
    %1686 = vmatpush1.bf16.msra.mxu0 0
    %1687 = vmatprep.subr.bf16.mxu0 0
    %1688 = vmatpush1.bf16.msra.mxu0 0
    %1689 = vmatprep.subr.bf16.mxu0 0
    %1690 = vmatpush1.bf16.msra.mxu0 0
    %1691 = vmatprep.subr.bf16.mxu0 0
    %1692 = vmatpush1.bf16.msra.mxu0 0
    %1693 = vmatprep.subr.bf16.mxu0 0
    %1694 = vmatpush1.bf16.msra.mxu0 0
    %1695 = vmatprep.subr.bf16.mxu0 0
    %1696 = vmatpush1.bf16.msra.mxu0 0
    %1697 = vmatprep.subr.bf16.mxu0 0
    %1698 = vmatpush1.bf16.msra.mxu0 0
    %1699 = vmatprep.subr.bf16.mxu0 0
    %1700 = vmatpush1.bf16.msra.mxu0 0
    %1701 = vmatprep.subr.bf16.mxu0 0
    %1702 = vmatpush1.bf16.msra.mxu0 0
    %1703 = vmatprep.subr.bf16.mxu0 0
    %1704 = vmatpush1.bf16.msra.mxu0 0
    %1705 = vmatprep.subr.bf16.mxu0 0
    %1706 = vmatpush1.bf16.msra.mxu0 0
    %1707 = vmatprep.mubr.bf16.mxu0 0
    %1708 = vmatmul.mubr.bf16.gmra.mrb[0].mxu0 %v1673
    %v1709 = vpop.f32.mrb[0].mxu0
    %v1710 = vadd.f32 %v1641, %v1709
    %v1711 = vpop.f32.mrb[0].mxu0
    %v1712 = vadd.f32 %v1643, %v1711
    %v1713 = vpop.f32.mrb[0].mxu0
    %v1714 = vadd.f32 %v1645, %v1713
    %v1715 = vpop.f32.mrb[0].mxu0
    %v1716 = vadd.f32 %v1647, %v1715
    %1717 = vdwg.mxu0
    %v1718 = vld [vmem:[%s7] sm:$0x3]
    %v1720 = vlaneseq
    %v1721 = vshrl.u32 %v1720, 7
    %v1722 = vsub.s32 0, %v1721
    %v1723 = vrot.slane %v1718, %v1722
    %v1724 = vlaneseq
    %v1725 = vshrl.u32 %v1724, 7
    %v1726 = vsub.s32 1, %v1725
    %v1727 = vrot.slane %v1718, %v1726
    %v1730 = vadd.f32 %v1710, %v1723
    %v1731 = vadd.f32 %v1712, %v1727
    %v1732 = vadd.f32 %v1714, %v1723
    %v1733 = vadd.f32 %v1716, %v1727
    %v1734 = vld [vmem:[#allocation10] sm:$0xf]
    %v1735 = vld [vmem:[#allocation10 + $0x4] sm:$0xf]
    %v1736 = vld [vmem:[#allocation10 + $0x8] sm:$0xf]
    %v1737 = vld [vmem:[#allocation10 + $0xc] sm:$0xf]
    %v1738 = vld [vmem:[#allocation11] sm:$0xf]
    %v1739 = vld [vmem:[#allocation11 + $0x4] sm:$0xf]
    %v1740 = vld [vmem:[#allocation11 + $0x8] sm:$0xf]
    %v1741 = vld [vmem:[#allocation11 + $0xc] sm:$0xf]
    %v1746 = vunpack.c.l.b16 %v1734
    %v1747 = vunpack.c.l.b16 %v1735
    %v1748 = vunpack.c.l.b16 %v1736
    %v1749 = vunpack.c.l.b16 %v1737
    %v1750 = vpack.c.b16 %v1747, %v1746
    %v1751 = vpack.c.b16 %v1749, %v1748
    %1754 = vmatprep.subr.bf16.mxu0 0
    %1755 = vmatpush1.bf16.msra.mxu0 %v1750
    %1756 = vmatprep.subr.bf16.mxu0 0
    %1757 = vmatpush1.bf16.msra.mxu0 %v1751
    %1758 = vmatprep.subr.bf16.mxu0 0
    %1759 = vmatpush1.bf16.msra.mxu0 0
    %1760 = vmatprep.subr.bf16.mxu0 0
    %1761 = vmatpush1.bf16.msra.mxu0 0
    %1762 = vmatprep.subr.bf16.mxu0 0
    %1763 = vmatpush1.bf16.msra.mxu0 0
    %1764 = vmatprep.subr.bf16.mxu0 0
    %1765 = vmatpush1.bf16.msra.mxu0 0
    %1766 = vmatprep.subr.bf16.mxu0 0
    %1767 = vmatpush1.bf16.msra.mxu0 0
    %1768 = vmatprep.subr.bf16.mxu0 0
    %1769 = vmatpush1.bf16.msra.mxu0 0
    %1770 = vmatprep.subr.bf16.mxu0 0
    %1771 = vmatpush1.bf16.msra.mxu0 0
    %1772 = vmatprep.subr.bf16.mxu0 0
    %1773 = vmatpush1.bf16.msra.mxu0 0
    %1774 = vmatprep.subr.bf16.mxu0 0
    %1775 = vmatpush1.bf16.msra.mxu0 0
    %1776 = vmatprep.subr.bf16.mxu0 0
    %1777 = vmatpush1.bf16.msra.mxu0 0
    %1778 = vmatprep.subr.bf16.mxu0 0
    %1779 = vmatpush1.bf16.msra.mxu0 0
    %1780 = vmatprep.subr.bf16.mxu0 0
    %1781 = vmatpush1.bf16.msra.mxu0 0
    %1782 = vmatprep.subr.bf16.mxu0 0
    %1783 = vmatpush1.bf16.msra.mxu0 0
    %1784 = vmatprep.subr.bf16.mxu0 0
    %1785 = vmatpush1.bf16.msra.mxu0 0
    %1786 = vmatprep.mubr.bf16.mxu0 0
    %1787 = vmatmul.mubr.bf16.gmra.mrb[0].mxu0 %v314
    %v1788 = vpop.f32.mrb[0].mxu0
    %v1789 = vadd.f32 0.0, %v1788
    %v1790 = vpop.f32.mrb[0].mxu0
    %v1791 = vpop.f32.mrb[0].mxu0
    %v1792 = vpop.f32.mrb[0].mxu0
    %1793 = vdwg.mxu0
    %v1794 = vadd.f32 %v1730, %v1789
    %v1799 = vunpack.c.l.b16 %v1738
    %v1800 = vunpack.c.l.b16 %v1739
    %v1801 = vunpack.c.l.b16 %v1740
    %v1802 = vunpack.c.l.b16 %v1741
    %v1803 = vpack.c.b16 %v1800, %v1799
    %v1804 = vpack.c.b16 %v1802, %v1801
    %1807 = vmatprep.subr.bf16.mxu0 0
    %1808 = vmatpush1.bf16.msra.mxu0 %v1803
    %1809 = vmatprep.subr.bf16.mxu0 0
    %1810 = vmatpush1.bf16.msra.mxu0 %v1804
    %1811 = vmatprep.subr.bf16.mxu0 0
    %1812 = vmatpush1.bf16.msra.mxu0 0
    %1813 = vmatprep.subr.bf16.mxu0 0
    %1814 = vmatpush1.bf16.msra.mxu0 0
    %1815 = vmatprep.subr.bf16.mxu0 0
    %1816 = vmatpush1.bf16.msra.mxu0 0
    %1817 = vmatprep.subr.bf16.mxu0 0
    %1818 = vmatpush1.bf16.msra.mxu0 0
    %1819 = vmatprep.subr.bf16.mxu0 0
    %1820 = vmatpush1.bf16.msra.mxu0 0
    %1821 = vmatprep.subr.bf16.mxu0 0
    %1822 = vmatpush1.bf16.msra.mxu0 0
    %1823 = vmatprep.subr.bf16.mxu0 0
    %1824 = vmatpush1.bf16.msra.mxu0 0
    %1825 = vmatprep.subr.bf16.mxu0 0
    %1826 = vmatpush1.bf16.msra.mxu0 0
    %1827 = vmatprep.subr.bf16.mxu0 0
    %1828 = vmatpush1.bf16.msra.mxu0 0
    %1829 = vmatprep.subr.bf16.mxu0 0
    %1830 = vmatpush1.bf16.msra.mxu0 0
    %1831 = vmatprep.subr.bf16.mxu0 0
    %1832 = vmatpush1.bf16.msra.mxu0 0
    %1833 = vmatprep.subr.bf16.mxu0 0
    %1834 = vmatpush1.bf16.msra.mxu0 0
    %1835 = vmatprep.subr.bf16.mxu0 0
    %1836 = vmatpush1.bf16.msra.mxu0 0
    %1837 = vmatprep.subr.bf16.mxu0 0
    %1838 = vmatpush1.bf16.msra.mxu0 0
    %1839 = vmatprep.mubr.bf16.mxu0 0
    %1840 = vmatmul.mubr.bf16.gmra.mrb[0].mxu0 %v314
    %v1841 = vpop.f32.mrb[0].mxu0
    %v1842 = vadd.f32 0.0, %v1841
    %v1843 = vpop.f32.mrb[0].mxu0
    %v1844 = vpop.f32.mrb[0].mxu0
    %v1845 = vpop.f32.mrb[0].mxu0
    %1846 = vdwg.mxu0
    %v1848 = vrot.slane %v1842, 2
    %v1850 = vadd.f32 %v1733, %v1848
    %v1851 = vxor.u32 %v1794, 2147483648
    %v1852 = vmul.f32 %v1851, 1.442695
    %v1853 = vpow.pop %v1852
    %v1854 = vadd.f32 %v1853, 1.0
    %v1855 = vrcp.pop %v1854
    %v1856 = vmul.f32 1.0, %v1855
    %v1857 = vtanh.pop %v1794
    %v1858 = vmul.f32 %v1856, 0.0
    %1860 = vrot.lane.b32.xlu0 %v1857, 32
    %v1861 = vpop.permute.xlu0 %1860
    %v1863 = vmul.f32 %v1856, %v1861
    %1865 = vrot.lane.b32.xlu0 %v1863, 32
    %v1866 = vpop.permute.xlu0 %1865
    %v1868 = vadd.f32 %v1858, %v1866
    %v1869 = vtanh.pop %v1868
    %1871 = vrot.lane.b32.xlu0 %v1869, 32
    %v1872 = vpop.permute.xlu0 %1871
    %v1874 = vmul.f32 %v1856, %v1872
    %v1875 = vxor.u32 %v1850, 2147483648
    %v1876 = vmul.f32 %v1875, 1.442695
    %v1877 = vpow.pop %v1876
    %v1878 = vadd.f32 %v1877, 1.0
    %v1879 = vrcp.pop %v1878
    %v1880 = vmul.f32 1.0, %v1879
    %v1881 = vtanh.pop %v1850
    %v1882 = vmul.f32 %v1880, 0.0
    %1884 = vrot.lane.b32.xlu0 %v1881, 32
    %v1885 = vpop.permute.xlu0 %1884
    %v1887 = vmul.f32 %v1880, %v1885
    %1889 = vrot.lane.b32.xlu0 %v1887, 32
    %v1890 = vpop.permute.xlu0 %1889
    %v1892 = vadd.f32 %v1882, %v1890
    %v1893 = vtanh.pop %v1892
    %1895 = vrot.lane.b32.xlu0 %v1893, 32
    %v1896 = vpop.permute.xlu0 %1895
    %v1898 = vmul.f32 %v1880, %v1896
    %v1899 = vpack.c.bf16 %v1874, %v1874
    %1901 = vrot.lane.b32.xlu0 %v1899, 64
    %v1902 = vpop.permute.xlu0 %1901
    %v1904 = vsel %vm312, %v1902, 0
    %1906 = vmatprep.subr.bf16.mxu0 0
    %1907 = vmatpush1.bf16.msra.mxu0 %v1750
    %1908 = vmatprep.subr.bf16.mxu0 0
    %1909 = vmatpush1.bf16.msra.mxu0 %v1751
    %1910 = vmatprep.subr.bf16.mxu0 0
    %1911 = vmatpush1.bf16.msra.mxu0 0
    %1912 = vmatprep.subr.bf16.mxu0 0
    %1913 = vmatpush1.bf16.msra.mxu0 0
    %1914 = vmatprep.subr.bf16.mxu0 0
    %1915 = vmatpush1.bf16.msra.mxu0 0
    %1916 = vmatprep.subr.bf16.mxu0 0
    %1917 = vmatpush1.bf16.msra.mxu0 0
    %1918 = vmatprep.subr.bf16.mxu0 0
    %1919 = vmatpush1.bf16.msra.mxu0 0
    %1920 = vmatprep.subr.bf16.mxu0 0
    %1921 = vmatpush1.bf16.msra.mxu0 0
    %1922 = vmatprep.subr.bf16.mxu0 0
    %1923 = vmatpush1.bf16.msra.mxu0 0
    %1924 = vmatprep.subr.bf16.mxu0 0
    %1925 = vmatpush1.bf16.msra.mxu0 0
    %1926 = vmatprep.subr.bf16.mxu0 0
    %1927 = vmatpush1.bf16.msra.mxu0 0
    %1928 = vmatprep.subr.bf16.mxu0 0
    %1929 = vmatpush1.bf16.msra.mxu0 0
    %1930 = vmatprep.subr.bf16.mxu0 0
    %1931 = vmatpush1.bf16.msra.mxu0 0
    %1932 = vmatprep.subr.bf16.mxu0 0
    %1933 = vmatpush1.bf16.msra.mxu0 0
    %1934 = vmatprep.subr.bf16.mxu0 0
    %1935 = vmatpush1.bf16.msra.mxu0 0
    %1936 = vmatprep.subr.bf16.mxu0 0
    %1937 = vmatpush1.bf16.msra.mxu0 0
    %1938 = vmatprep.mubr.bf16.mxu0 0
    %1939 = vmatmul.mubr.bf16.gmra.mrb[0].mxu0 %v1904
    %v1940 = vpop.f32.mrb[0].mxu0
    %v1941 = vadd.f32 0.0, %v1940
    %v1942 = vpop.f32.mrb[0].mxu0
    %v1943 = vpop.f32.mrb[0].mxu0
    %v1944 = vpop.f32.mrb[0].mxu0
    %1945 = vdwg.mxu0
    %v1947 = vrot.slane %v1941, 6
    %v1949 = vadd.f32 %v1730, %v1947
    %v1950 = vpack.c.bf16 %v1898, %v1898
    %v1952 = vrot.slane %v1950, 3
    %1953 = vrot.lane.b32.xlu0 %v1952, 64
    %v1954 = vpop.permute.xlu0 %1953
    %v1956 = vsel %vm312, %v1954, 0
    %1958 = vmatprep.subr.bf16.mxu0 0
    %1959 = vmatpush1.bf16.msra.mxu0 %v1803
    %1960 = vmatprep.subr.bf16.mxu0 0
    %1961 = vmatpush1.bf16.msra.mxu0 %v1804
    %1962 = vmatprep.subr.bf16.mxu0 0
    %1963 = vmatpush1.bf16.msra.mxu0 0
    %1964 = vmatprep.subr.bf16.mxu0 0
    %1965 = vmatpush1.bf16.msra.mxu0 0
    %1966 = vmatprep.subr.bf16.mxu0 0
    %1967 = vmatpush1.bf16.msra.mxu0 0
    %1968 = vmatprep.subr.bf16.mxu0 0
    %1969 = vmatpush1.bf16.msra.mxu0 0
    %1970 = vmatprep.subr.bf16.mxu0 0
    %1971 = vmatpush1.bf16.msra.mxu0 0
    %1972 = vmatprep.subr.bf16.mxu0 0
    %1973 = vmatpush1.bf16.msra.mxu0 0
    %1974 = vmatprep.subr.bf16.mxu0 0
    %1975 = vmatpush1.bf16.msra.mxu0 0
    %1976 = vmatprep.subr.bf16.mxu0 0
    %1977 = vmatpush1.bf16.msra.mxu0 0
    %1978 = vmatprep.subr.bf16.mxu0 0
    %1979 = vmatpush1.bf16.msra.mxu0 0
    %1980 = vmatprep.subr.bf16.mxu0 0
    %1981 = vmatpush1.bf16.msra.mxu0 0
    %1982 = vmatprep.subr.bf16.mxu0 0
    %1983 = vmatpush1.bf16.msra.mxu0 0
    %1984 = vmatprep.subr.bf16.mxu0 0
    %1985 = vmatpush1.bf16.msra.mxu0 0
    %1986 = vmatprep.subr.bf16.mxu0 0
    %1987 = vmatpush1.bf16.msra.mxu0 0
    %1988 = vmatprep.subr.bf16.mxu0 0
    %1989 = vmatpush1.bf16.msra.mxu0 0
    %1990 = vmatprep.mubr.bf16.mxu0 0
    %1991 = vmatmul.mubr.bf16.gmra.mrb[0].mxu0 %v1956
    %v1992 = vpop.f32.mrb[0].mxu0
    %v1993 = vadd.f32 0.0, %v1992
    %v1994 = vpop.f32.mrb[0].mxu0
    %v1995 = vpop.f32.mrb[0].mxu0
    %v1996 = vpop.f32.mrb[0].mxu0
    %1997 = vdwg.mxu0
    %v1999 = vrot.slane %v1993, 4
    %v2001 = vadd.f32 %v1733, %v1999
    %v2002 = vxor.u32 %v1949, 2147483648
    %v2003 = vmul.f32 %v2002, 1.442695
    %v2004 = vpow.pop %v2003
    %v2005 = vadd.f32 %v2004, 1.0
    %v2006 = vrcp.pop %v2005
    %v2007 = vmul.f32 1.0, %v2006
    %v2008 = vtanh.pop %v1949
    %v2010 = vrot.slane %v1868, 6
    %v2012 = vmul.f32 %v2007, %v2010
    %2014 = vrot.lane.b32.xlu0 %v2008, 32
    %v2015 = vpop.permute.xlu0 %2014
    %v2017 = vmul.f32 %v2007, %v2015
    %2019 = vrot.lane.b32.xlu0 %v2017, 32
    %v2020 = vpop.permute.xlu0 %2019
    %v2022 = vadd.f32 %v2012, %v2020
    %v2023 = vtanh.pop %v2022
    %2025 = vrot.lane.b32.xlu0 %v2023, 32
    %v2026 = vpop.permute.xlu0 %2025
    %v2028 = vmul.f32 %v2007, %v2026
    %v2029 = vxor.u32 %v2001, 2147483648
    %v2030 = vmul.f32 %v2029, 1.442695
    %v2031 = vpow.pop %v2030
    %v2032 = vadd.f32 %v2031, 1.0
    %v2033 = vrcp.pop %v2032
    %v2034 = vmul.f32 1.0, %v2033
    %v2035 = vtanh.pop %v2001
    %v2037 = vrot.slane %v1892, 2
    %v2039 = vmul.f32 %v2034, %v2037
    %2041 = vrot.lane.b32.xlu0 %v2035, 32
    %v2042 = vpop.permute.xlu0 %2041
    %v2044 = vmul.f32 %v2034, %v2042
    %2046 = vrot.lane.b32.xlu0 %v2044, 32
    %v2047 = vpop.permute.xlu0 %2046
    %v2049 = vadd.f32 %v2039, %v2047
    %v2050 = vtanh.pop %v2049
    %2052 = vrot.lane.b32.xlu0 %v2050, 32
    %v2053 = vpop.permute.xlu0 %2052
    %v2055 = vmul.f32 %v2034, %v2053
    %v2056 = vpack.c.bf16 %v2028, %v2028
    %v2058 = vrot.slane %v2056, 1
    %2059 = vrot.lane.b32.xlu0 %v2058, 64
    %v2060 = vpop.permute.xlu0 %2059
    %v2062 = vsel %vm312, %v2060, 0
    %2064 = vmatprep.subr.bf16.mxu0 0
    %2065 = vmatpush1.bf16.msra.mxu0 %v1750
    %2066 = vmatprep.subr.bf16.mxu0 0
    %2067 = vmatpush1.bf16.msra.mxu0 %v1751
    %2068 = vmatprep.subr.bf16.mxu0 0
    %2069 = vmatpush1.bf16.msra.mxu0 0
    %2070 = vmatprep.subr.bf16.mxu0 0
    %2071 = vmatpush1.bf16.msra.mxu0 0
    %2072 = vmatprep.subr.bf16.mxu0 0
    %2073 = vmatpush1.bf16.msra.mxu0 0
    %2074 = vmatprep.subr.bf16.mxu0 0
    %2075 = vmatpush1.bf16.msra.mxu0 0
    %2076 = vmatprep.subr.bf16.mxu0 0
    %2077 = vmatpush1.bf16.msra.mxu0 0
    %2078 = vmatprep.subr.bf16.mxu0 0
    %2079 = vmatpush1.bf16.msra.mxu0 0
    %2080 = vmatprep.subr.bf16.mxu0 0
    %2081 = vmatpush1.bf16.msra.mxu0 0
    %2082 = vmatprep.subr.bf16.mxu0 0
    %2083 = vmatpush1.bf16.msra.mxu0 0
    %2084 = vmatprep.subr.bf16.mxu0 0
    %2085 = vmatpush1.bf16.msra.mxu0 0
    %2086 = vmatprep.subr.bf16.mxu0 0
    %2087 = vmatpush1.bf16.msra.mxu0 0
    %2088 = vmatprep.subr.bf16.mxu0 0
    %2089 = vmatpush1.bf16.msra.mxu0 0
    %2090 = vmatprep.subr.bf16.mxu0 0
    %2091 = vmatpush1.bf16.msra.mxu0 0
    %2092 = vmatprep.subr.bf16.mxu0 0
    %2093 = vmatpush1.bf16.msra.mxu0 0
    %2094 = vmatprep.subr.bf16.mxu0 0
    %2095 = vmatpush1.bf16.msra.mxu0 0
    %2096 = vmatprep.mubr.bf16.mxu0 0
    %2097 = vmatmul.mubr.bf16.gmra.mrb[0].mxu0 %v2062
    %v2098 = vpop.f32.mrb[0].mxu0
    %v2099 = vadd.f32 0.0, %v2098
    %v2100 = vpop.f32.mrb[0].mxu0
    %v2101 = vpop.f32.mrb[0].mxu0
    %v2102 = vpop.f32.mrb[0].mxu0
    %2103 = vdwg.mxu0
    %v2105 = vrot.slane %v2099, 4
    %v2107 = vadd.f32 %v1730, %v2105
    %v2108 = vpack.c.bf16 %v2055, %v2055
    %v2110 = vrot.slane %v2108, 2
    %2111 = vrot.lane.b32.xlu0 %v2110, 64
    %v2112 = vpop.permute.xlu0 %2111
    %v2114 = vsel %vm312, %v2112, 0
    %2116 = vmatprep.subr.bf16.mxu0 0
    %2117 = vmatpush1.bf16.msra.mxu0 %v1803
    %2118 = vmatprep.subr.bf16.mxu0 0
    %2119 = vmatpush1.bf16.msra.mxu0 %v1804
    %2120 = vmatprep.subr.bf16.mxu0 0
    %2121 = vmatpush1.bf16.msra.mxu0 0
    %2122 = vmatprep.subr.bf16.mxu0 0
    %2123 = vmatpush1.bf16.msra.mxu0 0
    %2124 = vmatprep.subr.bf16.mxu0 0
    %2125 = vmatpush1.bf16.msra.mxu0 0
    %2126 = vmatprep.subr.bf16.mxu0 0
    %2127 = vmatpush1.bf16.msra.mxu0 0
    %2128 = vmatprep.subr.bf16.mxu0 0
    %2129 = vmatpush1.bf16.msra.mxu0 0
    %2130 = vmatprep.subr.bf16.mxu0 0
    %2131 = vmatpush1.bf16.msra.mxu0 0
    %2132 = vmatprep.subr.bf16.mxu0 0
    %2133 = vmatpush1.bf16.msra.mxu0 0
    %2134 = vmatprep.subr.bf16.mxu0 0
    %2135 = vmatpush1.bf16.msra.mxu0 0
    %2136 = vmatprep.subr.bf16.mxu0 0
    %2137 = vmatpush1.bf16.msra.mxu0 0
    %2138 = vmatprep.subr.bf16.mxu0 0
    %2139 = vmatpush1.bf16.msra.mxu0 0
    %2140 = vmatprep.subr.bf16.mxu0 0
    %2141 = vmatpush1.bf16.msra.mxu0 0
    %2142 = vmatprep.subr.bf16.mxu0 0
    %2143 = vmatpush1.bf16.msra.mxu0 0
    %2144 = vmatprep.subr.bf16.mxu0 0
    %2145 = vmatpush1.bf16.msra.mxu0 0
    %2146 = vmatprep.subr.bf16.mxu0 0
    %2147 = vmatpush1.bf16.msra.mxu0 0
    %2148 = vmatprep.mubr.bf16.mxu0 0
    %2149 = vmatmul.mubr.bf16.gmra.mrb[0].mxu0 %v2114
    %v2150 = vpop.f32.mrb[0].mxu0
    %v2151 = vadd.f32 0.0, %v2150
    %v2152 = vpop.f32.mrb[0].mxu0
    %v2153 = vpop.f32.mrb[0].mxu0
    %v2154 = vpop.f32.mrb[0].mxu0
    %2155 = vdwg.mxu0
    %v2157 = vrot.slane %v2151, 6
    %v2159 = vadd.f32 %v1733, %v2157
    %v2160 = vxor.u32 %v2107, 2147483648
    %v2161 = vmul.f32 %v2160, 1.442695
    %v2162 = vpow.pop %v2161
    %v2163 = vadd.f32 %v2162, 1.0
    %v2164 = vrcp.pop %v2163
    %v2165 = vmul.f32 1.0, %v2164
    %v2166 = vtanh.pop %v2107
    %v2168 = vrot.slane %v2022, 6
    %v2170 = vmul.f32 %v2165, %v2168
    %2172 = vrot.lane.b32.xlu0 %v2166, 32
    %v2173 = vpop.permute.xlu0 %2172
    %v2175 = vmul.f32 %v2165, %v2173
    %2177 = vrot.lane.b32.xlu0 %v2175, 32
    %v2178 = vpop.permute.xlu0 %2177
    %v2180 = vadd.f32 %v2170, %v2178
    %v2181 = vtanh.pop %v2180
    %2183 = vrot.lane.b32.xlu0 %v2181, 32
    %v2184 = vpop.permute.xlu0 %2183
    %v2186 = vmul.f32 %v2165, %v2184
    %v2187 = vxor.u32 %v2159, 2147483648
    %v2188 = vmul.f32 %v2187, 1.442695
    %v2189 = vpow.pop %v2188
    %v2190 = vadd.f32 %v2189, 1.0
    %v2191 = vrcp.pop %v2190
    %v2192 = vmul.f32 1.0, %v2191
    %v2193 = vtanh.pop %v2159
    %v2195 = vrot.slane %v2049, 2
    %v2197 = vmul.f32 %v2192, %v2195
    %2199 = vrot.lane.b32.xlu0 %v2193, 32
    %v2200 = vpop.permute.xlu0 %2199
    %v2202 = vmul.f32 %v2192, %v2200
    %2204 = vrot.lane.b32.xlu0 %v2202, 32
    %v2205 = vpop.permute.xlu0 %2204
    %v2207 = vadd.f32 %v2197, %v2205
    %v2208 = vtanh.pop %v2207
    %2210 = vrot.lane.b32.xlu0 %v2208, 32
    %v2211 = vpop.permute.xlu0 %2210
    %v2213 = vmul.f32 %v2192, %v2211
    %v2214 = vpack.c.bf16 %v2186, %v2186
    %v2216 = vrot.slane %v2214, 2
    %2217 = vrot.lane.b32.xlu0 %v2216, 64
    %v2218 = vpop.permute.xlu0 %2217
    %v2220 = vsel %vm312, %v2218, 0
    %2222 = vmatprep.subr.bf16.mxu0 0
    %2223 = vmatpush1.bf16.msra.mxu0 %v1750
    %2224 = vmatprep.subr.bf16.mxu0 0
    %2225 = vmatpush1.bf16.msra.mxu0 %v1751
    %2226 = vmatprep.subr.bf16.mxu0 0
    %2227 = vmatpush1.bf16.msra.mxu0 0
    %2228 = vmatprep.subr.bf16.mxu0 0
    %2229 = vmatpush1.bf16.msra.mxu0 0
    %2230 = vmatprep.subr.bf16.mxu0 0
    %2231 = vmatpush1.bf16.msra.mxu0 0
    %2232 = vmatprep.subr.bf16.mxu0 0
    %2233 = vmatpush1.bf16.msra.mxu0 0
    %2234 = vmatprep.subr.bf16.mxu0 0
    %2235 = vmatpush1.bf16.msra.mxu0 0
    %2236 = vmatprep.subr.bf16.mxu0 0
    %2237 = vmatpush1.bf16.msra.mxu0 0
    %2238 = vmatprep.subr.bf16.mxu0 0
    %2239 = vmatpush1.bf16.msra.mxu0 0
    %2240 = vmatprep.subr.bf16.mxu0 0
    %2241 = vmatpush1.bf16.msra.mxu0 0
    %2242 = vmatprep.subr.bf16.mxu0 0
    %2243 = vmatpush1.bf16.msra.mxu0 0
    %2244 = vmatprep.subr.bf16.mxu0 0
    %2245 = vmatpush1.bf16.msra.mxu0 0
    %2246 = vmatprep.subr.bf16.mxu0 0
    %2247 = vmatpush1.bf16.msra.mxu0 0
    %2248 = vmatprep.subr.bf16.mxu0 0
    %2249 = vmatpush1.bf16.msra.mxu0 0
    %2250 = vmatprep.subr.bf16.mxu0 0
    %2251 = vmatpush1.bf16.msra.mxu0 0
    %2252 = vmatprep.subr.bf16.mxu0 0
    %2253 = vmatpush1.bf16.msra.mxu0 0
    %2254 = vmatprep.mubr.bf16.mxu0 0
    %2255 = vmatmul.mubr.bf16.gmra.mrb[0].mxu0 %v2220
    %v2256 = vpop.f32.mrb[0].mxu0
    %v2257 = vadd.f32 0.0, %v2256
    %v2258 = vpop.f32.mrb[0].mxu0
    %v2259 = vpop.f32.mrb[0].mxu0
    %v2260 = vpop.f32.mrb[0].mxu0
    %2261 = vdwg.mxu0
    %v2263 = vrot.slane %v2257, 2
    %v2265 = vadd.f32 %v1730, %v2263
    %v2266 = vpack.c.bf16 %v2213, %v2213
    %v2268 = vrot.slane %v2266, 1
    %2269 = vrot.lane.b32.xlu0 %v2268, 64
    %v2270 = vpop.permute.xlu0 %2269
    %v2272 = vsel %vm312, %v2270, 0
    %2274 = vmatprep.subr.bf16.mxu0 0
    %2275 = vmatpush1.bf16.msra.mxu0 %v1803
    %2276 = vmatprep.subr.bf16.mxu0 0
    %2277 = vmatpush1.bf16.msra.mxu0 %v1804
    %2278 = vmatprep.subr.bf16.mxu0 0
    %2279 = vmatpush1.bf16.msra.mxu0 0
    %2280 = vmatprep.subr.bf16.mxu0 0
    %2281 = vmatpush1.bf16.msra.mxu0 0
    %2282 = vmatprep.subr.bf16.mxu0 0
    %2283 = vmatpush1.bf16.msra.mxu0 0
    %2284 = vmatprep.subr.bf16.mxu0 0
    %2285 = vmatpush1.bf16.msra.mxu0 0
    %2286 = vmatprep.subr.bf16.mxu0 0
    %2287 = vmatpush1.bf16.msra.mxu0 0
    %2288 = vmatprep.subr.bf16.mxu0 0
    %2289 = vmatpush1.bf16.msra.mxu0 0
    %2290 = vmatprep.subr.bf16.mxu0 0
    %2291 = vmatpush1.bf16.msra.mxu0 0
    %2292 = vmatprep.subr.bf16.mxu0 0
    %2293 = vmatpush1.bf16.msra.mxu0 0
    %2294 = vmatprep.subr.bf16.mxu0 0
    %2295 = vmatpush1.bf16.msra.mxu0 0
    %2296 = vmatprep.subr.bf16.mxu0 0
    %2297 = vmatpush1.bf16.msra.mxu0 0
    %2298 = vmatprep.subr.bf16.mxu0 0
    %2299 = vmatpush1.bf16.msra.mxu0 0
    %2300 = vmatprep.subr.bf16.mxu0 0
    %2301 = vmatpush1.bf16.msra.mxu0 0
    %2302 = vmatprep.subr.bf16.mxu0 0
    %2303 = vmatpush1.bf16.msra.mxu0 0
    %2304 = vmatprep.subr.bf16.mxu0 0
    %2305 = vmatpush1.bf16.msra.mxu0 0
    %2306 = vmatprep.mubr.bf16.mxu0 0
    %2307 = vmatmul.mubr.bf16.gmra.mrb[0].mxu0 %v2272
    %v2308 = vpop.f32.mrb[0].mxu0
    %v2309 = vadd.f32 0.0, %v2308
    %v2310 = vpop.f32.mrb[0].mxu0
    %v2311 = vpop.f32.mrb[0].mxu0
    %v2312 = vpop.f32.mrb[0].mxu0
    %2313 = vdwg.mxu0
    %v2314 = vadd.f32 %v1733, %v2309
    %v2315 = vxor.u32 %v2265, 2147483648
    %v2316 = vmul.f32 %v2315, 1.442695
    %v2317 = vpow.pop %v2316
    %v2318 = vadd.f32 %v2317, 1.0
    %v2319 = vrcp.pop %v2318
    %v2320 = vmul.f32 1.0, %v2319
    %v2321 = vtanh.pop %v2265
    %v2323 = vrot.slane %v2180, 6
    %v2325 = vmul.f32 %v2320, %v2323
    %2327 = vrot.lane.b32.xlu0 %v2321, 32
    %v2328 = vpop.permute.xlu0 %2327
    %v2330 = vmul.f32 %v2320, %v2328
    %2332 = vrot.lane.b32.xlu0 %v2330, 32
    %v2333 = vpop.permute.xlu0 %2332
    %v2335 = vadd.f32 %v2325, %v2333
    %v2336 = vtanh.pop %v2335
    %2338 = vrot.lane.b32.xlu0 %v2336, 32
    %v2339 = vpop.permute.xlu0 %2338
    %v2341 = vmul.f32 %v2320, %v2339
    %v2342 = vxor.u32 %v2314, 2147483648
    %v2343 = vmul.f32 %v2342, 1.442695
    %v2344 = vpow.pop %v2343
    %v2345 = vadd.f32 %v2344, 1.0
    %v2346 = vrcp.pop %v2345
    %v2347 = vmul.f32 1.0, %v2346
    %v2348 = vtanh.pop %v2314
    %v2350 = vrot.slane %v2207, 2
    %v2352 = vmul.f32 %v2347, %v2350
    %2354 = vrot.lane.b32.xlu0 %v2348, 32
    %v2355 = vpop.permute.xlu0 %2354
    %v2357 = vmul.f32 %v2347, %v2355
    %2359 = vrot.lane.b32.xlu0 %v2357, 32
    %v2360 = vpop.permute.xlu0 %2359
    %v2362 = vadd.f32 %v2352, %v2360
    %v2363 = vtanh.pop %v2362
    %2365 = vrot.lane.b32.xlu0 %v2363, 32
    %v2366 = vpop.permute.xlu0 %2365
    %v2368 = vmul.f32 %v2347, %v2366
    %v2369 = vpack.c.bf16 %v2341, %v2341
    %v2371 = vrot.slane %v2369, 3
    %2372 = vrot.lane.b32.xlu0 %v2371, 64
    %v2373 = vpop.permute.xlu0 %2372
    %v2375 = vsel %vm312, %v2373, 0
    %2377 = vmatprep.subr.bf16.mxu0 0
    %2378 = vmatpush1.bf16.msra.mxu0 %v1750
    %2379 = vmatprep.subr.bf16.mxu0 0
    %2380 = vmatpush1.bf16.msra.mxu0 %v1751
    %2381 = vmatprep.subr.bf16.mxu0 0
    %2382 = vmatpush1.bf16.msra.mxu0 0
    %2383 = vmatprep.subr.bf16.mxu0 0
    %2384 = vmatpush1.bf16.msra.mxu0 0
    %2385 = vmatprep.subr.bf16.mxu0 0
    %2386 = vmatpush1.bf16.msra.mxu0 0
    %2387 = vmatprep.subr.bf16.mxu0 0
    %2388 = vmatpush1.bf16.msra.mxu0 0
    %2389 = vmatprep.subr.bf16.mxu0 0
    %2390 = vmatpush1.bf16.msra.mxu0 0
    %2391 = vmatprep.subr.bf16.mxu0 0
    %2392 = vmatpush1.bf16.msra.mxu0 0
    %2393 = vmatprep.subr.bf16.mxu0 0
    %2394 = vmatpush1.bf16.msra.mxu0 0
    %2395 = vmatprep.subr.bf16.mxu0 0
    %2396 = vmatpush1.bf16.msra.mxu0 0
    %2397 = vmatprep.subr.bf16.mxu0 0
    %2398 = vmatpush1.bf16.msra.mxu0 0
    %2399 = vmatprep.subr.bf16.mxu0 0
    %2400 = vmatpush1.bf16.msra.mxu0 0
    %2401 = vmatprep.subr.bf16.mxu0 0
    %2402 = vmatpush1.bf16.msra.mxu0 0
    %2403 = vmatprep.subr.bf16.mxu0 0
    %2404 = vmatpush1.bf16.msra.mxu0 0
    %2405 = vmatprep.subr.bf16.mxu0 0
    %2406 = vmatpush1.bf16.msra.mxu0 0
    %2407 = vmatprep.subr.bf16.mxu0 0
    %2408 = vmatpush1.bf16.msra.mxu0 0
    %2409 = vmatprep.mubr.bf16.mxu0 0
    %2410 = vmatmul.mubr.bf16.gmra.mrb[0].mxu0 %v2375
    %v2411 = vpop.f32.mrb[0].mxu0
    %v2412 = vadd.f32 0.0, %v2411
    %v2413 = vpop.f32.mrb[0].mxu0
    %v2414 = vpop.f32.mrb[0].mxu0
    %v2415 = vpop.f32.mrb[0].mxu0
    %2416 = vdwg.mxu0
    %v2417 = vadd.f32 %v1732, %v2412
    %v2418 = vpack.c.bf16 %v2368, %v2368
    %2420 = vrot.lane.b32.xlu0 %v2418, 64
    %v2421 = vpop.permute.xlu0 %2420
    %v2423 = vsel %vm312, %v2421, 0
    %2425 = vmatprep.subr.bf16.mxu0 0
    %2426 = vmatpush1.bf16.msra.mxu0 %v1803
    %2427 = vmatprep.subr.bf16.mxu0 0
    %2428 = vmatpush1.bf16.msra.mxu0 %v1804
    %2429 = vmatprep.subr.bf16.mxu0 0
    %2430 = vmatpush1.bf16.msra.mxu0 0
    %2431 = vmatprep.subr.bf16.mxu0 0
    %2432 = vmatpush1.bf16.msra.mxu0 0
    %2433 = vmatprep.subr.bf16.mxu0 0
    %2434 = vmatpush1.bf16.msra.mxu0 0
    %2435 = vmatprep.subr.bf16.mxu0 0
    %2436 = vmatpush1.bf16.msra.mxu0 0
    %2437 = vmatprep.subr.bf16.mxu0 0
    %2438 = vmatpush1.bf16.msra.mxu0 0
    %2439 = vmatprep.subr.bf16.mxu0 0
    %2440 = vmatpush1.bf16.msra.mxu0 0
    %2441 = vmatprep.subr.bf16.mxu0 0
    %2442 = vmatpush1.bf16.msra.mxu0 0
    %2443 = vmatprep.subr.bf16.mxu0 0
    %2444 = vmatpush1.bf16.msra.mxu0 0
    %2445 = vmatprep.subr.bf16.mxu0 0
    %2446 = vmatpush1.bf16.msra.mxu0 0
    %2447 = vmatprep.subr.bf16.mxu0 0
    %2448 = vmatpush1.bf16.msra.mxu0 0
    %2449 = vmatprep.subr.bf16.mxu0 0
    %2450 = vmatpush1.bf16.msra.mxu0 0
    %2451 = vmatprep.subr.bf16.mxu0 0
    %2452 = vmatpush1.bf16.msra.mxu0 0
    %2453 = vmatprep.subr.bf16.mxu0 0
    %2454 = vmatpush1.bf16.msra.mxu0 0
    %2455 = vmatprep.subr.bf16.mxu0 0
    %2456 = vmatpush1.bf16.msra.mxu0 0
    %2457 = vmatprep.mubr.bf16.mxu0 0
    %2458 = vmatmul.mubr.bf16.gmra.mrb[0].mxu0 %v2423
    %v2459 = vpop.f32.mrb[0].mxu0
    %v2460 = vadd.f32 0.0, %v2459
    %v2461 = vpop.f32.mrb[0].mxu0
    %v2462 = vpop.f32.mrb[0].mxu0
    %v2463 = vpop.f32.mrb[0].mxu0
    %2464 = vdwg.mxu0
    %v2466 = vrot.slane %v2460, 2
    %v2468 = vadd.f32 %v1731, %v2466
    %v2469 = vxor.u32 %v2417, 2147483648
    %v2470 = vmul.f32 %v2469, 1.442695
    %v2471 = vpow.pop %v2470
    %v2472 = vadd.f32 %v2471, 1.0
    %v2473 = vrcp.pop %v2472
    %v2474 = vmul.f32 1.0, %v2473
    %v2475 = vtanh.pop %v2417
    %v2477 = vrot.slane %v2335, 6
    %v2479 = vmul.f32 %v2474, %v2477
    %2481 = vrot.lane.b32.xlu0 %v2475, 32
    %v2482 = vpop.permute.xlu0 %2481
    %v2484 = vmul.f32 %v2474, %v2482
    %2486 = vrot.lane.b32.xlu0 %v2484, 32
    %v2487 = vpop.permute.xlu0 %2486
    %v2489 = vadd.f32 %v2479, %v2487
    %v2490 = vtanh.pop %v2489
    %2492 = vrot.lane.b32.xlu0 %v2490, 32
    %v2493 = vpop.permute.xlu0 %2492
    %v2495 = vmul.f32 %v2474, %v2493
    %v2496 = vxor.u32 %v2468, 2147483648
    %v2497 = vmul.f32 %v2496, 1.442695
    %v2498 = vpow.pop %v2497
    %v2499 = vadd.f32 %v2498, 1.0
    %v2500 = vrcp.pop %v2499
    %v2501 = vmul.f32 1.0, %v2500
    %v2502 = vtanh.pop %v2468
    %v2504 = vrot.slane %v2362, 2
    %v2506 = vmul.f32 %v2501, %v2504
    %2508 = vrot.lane.b32.xlu0 %v2502, 32
    %v2509 = vpop.permute.xlu0 %2508
    %v2511 = vmul.f32 %v2501, %v2509
    %2513 = vrot.lane.b32.xlu0 %v2511, 32
    %v2514 = vpop.permute.xlu0 %2513
    %v2516 = vadd.f32 %v2506, %v2514
    %v2517 = vtanh.pop %v2516
    %2519 = vrot.lane.b32.xlu0 %v2517, 32
    %v2520 = vpop.permute.xlu0 %2519
    %v2522 = vmul.f32 %v2501, %v2520
    %v2523 = vpack.c.bf16 %v2495, %v2495
    %2525 = vrot.lane.b32.xlu0 %v2523, 64
    %v2526 = vpop.permute.xlu0 %2525
    %v2528 = vsel %vm312, %v2526, 0
    %2530 = vmatprep.subr.bf16.mxu0 0
    %2531 = vmatpush1.bf16.msra.mxu0 %v1750
    %2532 = vmatprep.subr.bf16.mxu0 0
    %2533 = vmatpush1.bf16.msra.mxu0 %v1751
    %2534 = vmatprep.subr.bf16.mxu0 0
    %2535 = vmatpush1.bf16.msra.mxu0 0
    %2536 = vmatprep.subr.bf16.mxu0 0
    %2537 = vmatpush1.bf16.msra.mxu0 0
    %2538 = vmatprep.subr.bf16.mxu0 0
    %2539 = vmatpush1.bf16.msra.mxu0 0
    %2540 = vmatprep.subr.bf16.mxu0 0
    %2541 = vmatpush1.bf16.msra.mxu0 0
    %2542 = vmatprep.subr.bf16.mxu0 0
    %2543 = vmatpush1.bf16.msra.mxu0 0
    %2544 = vmatprep.subr.bf16.mxu0 0
    %2545 = vmatpush1.bf16.msra.mxu0 0
    %2546 = vmatprep.subr.bf16.mxu0 0
    %2547 = vmatpush1.bf16.msra.mxu0 0
    %2548 = vmatprep.subr.bf16.mxu0 0
    %2549 = vmatpush1.bf16.msra.mxu0 0
    %2550 = vmatprep.subr.bf16.mxu0 0
    %2551 = vmatpush1.bf16.msra.mxu0 0
    %2552 = vmatprep.subr.bf16.mxu0 0
    %2553 = vmatpush1.bf16.msra.mxu0 0
    %2554 = vmatprep.subr.bf16.mxu0 0
    %2555 = vmatpush1.bf16.msra.mxu0 0
    %2556 = vmatprep.subr.bf16.mxu0 0
    %2557 = vmatpush1.bf16.msra.mxu0 0
    %2558 = vmatprep.subr.bf16.mxu0 0
    %2559 = vmatpush1.bf16.msra.mxu0 0
    %2560 = vmatprep.subr.bf16.mxu0 0
    %2561 = vmatpush1.bf16.msra.mxu0 0
    %2562 = vmatprep.mubr.bf16.mxu0 0
    %2563 = vmatmul.mubr.bf16.gmra.mrb[0].mxu0 %v2528
    %v2564 = vpop.f32.mrb[0].mxu0
    %v2565 = vadd.f32 0.0, %v2564
    %v2566 = vpop.f32.mrb[0].mxu0
    %v2567 = vpop.f32.mrb[0].mxu0
    %v2568 = vpop.f32.mrb[0].mxu0
    %2569 = vdwg.mxu0
    %v2571 = vrot.slane %v2565, 6
    %v2573 = vadd.f32 %v1732, %v2571
    %v2574 = vpack.c.bf16 %v2522, %v2522
    %v2576 = vrot.slane %v2574, 3
    %2577 = vrot.lane.b32.xlu0 %v2576, 64
    %v2578 = vpop.permute.xlu0 %2577
    %v2580 = vsel %vm312, %v2578, 0
    %2582 = vmatprep.subr.bf16.mxu0 0
    %2583 = vmatpush1.bf16.msra.mxu0 %v1803
    %2584 = vmatprep.subr.bf16.mxu0 0
    %2585 = vmatpush1.bf16.msra.mxu0 %v1804
    %2586 = vmatprep.subr.bf16.mxu0 0
    %2587 = vmatpush1.bf16.msra.mxu0 0
    %2588 = vmatprep.subr.bf16.mxu0 0
    %2589 = vmatpush1.bf16.msra.mxu0 0
    %2590 = vmatprep.subr.bf16.mxu0 0
    %2591 = vmatpush1.bf16.msra.mxu0 0
    %2592 = vmatprep.subr.bf16.mxu0 0
    %2593 = vmatpush1.bf16.msra.mxu0 0
    %2594 = vmatprep.subr.bf16.mxu0 0
    %2595 = vmatpush1.bf16.msra.mxu0 0
    %2596 = vmatprep.subr.bf16.mxu0 0
    %2597 = vmatpush1.bf16.msra.mxu0 0
    %2598 = vmatprep.subr.bf16.mxu0 0
    %2599 = vmatpush1.bf16.msra.mxu0 0
    %2600 = vmatprep.subr.bf16.mxu0 0
    %2601 = vmatpush1.bf16.msra.mxu0 0
    %2602 = vmatprep.subr.bf16.mxu0 0
    %2603 = vmatpush1.bf16.msra.mxu0 0
    %2604 = vmatprep.subr.bf16.mxu0 0
    %2605 = vmatpush1.bf16.msra.mxu0 0
    %2606 = vmatprep.subr.bf16.mxu0 0
    %2607 = vmatpush1.bf16.msra.mxu0 0
    %2608 = vmatprep.subr.bf16.mxu0 0
    %2609 = vmatpush1.bf16.msra.mxu0 0
    %2610 = vmatprep.subr.bf16.mxu0 0
    %2611 = vmatpush1.bf16.msra.mxu0 0
    %2612 = vmatprep.subr.bf16.mxu0 0
    %2613 = vmatpush1.bf16.msra.mxu0 0
    %2614 = vmatprep.mubr.bf16.mxu0 0
    %2615 = vmatmul.mubr.bf16.gmra.mrb[0].mxu0 %v2580
    %v2616 = vpop.f32.mrb[0].mxu0
    %v2617 = vadd.f32 0.0, %v2616
    %v2618 = vpop.f32.mrb[0].mxu0
    %v2619 = vpop.f32.mrb[0].mxu0
    %v2620 = vpop.f32.mrb[0].mxu0
    %2621 = vdwg.mxu0
    %v2623 = vrot.slane %v2617, 4
    %v2625 = vadd.f32 %v1731, %v2623
    %v2626 = vxor.u32 %v2573, 2147483648
    %v2627 = vmul.f32 %v2626, 1.442695
    %v2628 = vpow.pop %v2627
    %v2629 = vadd.f32 %v2628, 1.0
    %v2630 = vrcp.pop %v2629
    %v2631 = vmul.f32 1.0, %v2630
    %v2632 = vtanh.pop %v2573
    %v2634 = vrot.slane %v2489, 6
    %v2636 = vmul.f32 %v2631, %v2634
    %2638 = vrot.lane.b32.xlu0 %v2632, 32
    %v2639 = vpop.permute.xlu0 %2638
    %v2641 = vmul.f32 %v2631, %v2639
    %2643 = vrot.lane.b32.xlu0 %v2641, 32
    %v2644 = vpop.permute.xlu0 %2643
    %v2646 = vadd.f32 %v2636, %v2644
    %v2647 = vtanh.pop %v2646
    %2649 = vrot.lane.b32.xlu0 %v2647, 32
    %v2650 = vpop.permute.xlu0 %2649
    %v2652 = vmul.f32 %v2631, %v2650
    %v2653 = vxor.u32 %v2625, 2147483648
    %v2654 = vmul.f32 %v2653, 1.442695
    %v2655 = vpow.pop %v2654
    %v2656 = vadd.f32 %v2655, 1.0
    %v2657 = vrcp.pop %v2656
    %v2658 = vmul.f32 1.0, %v2657
    %v2659 = vtanh.pop %v2625
    %v2661 = vrot.slane %v2516, 2
    %v2663 = vmul.f32 %v2658, %v2661
    %2665 = vrot.lane.b32.xlu0 %v2659, 32
    %v2666 = vpop.permute.xlu0 %2665
    %v2668 = vmul.f32 %v2658, %v2666
    %2670 = vrot.lane.b32.xlu0 %v2668, 32
    %v2671 = vpop.permute.xlu0 %2670
    %v2673 = vadd.f32 %v2663, %v2671
    %v2674 = vtanh.pop %v2673
    %2676 = vrot.lane.b32.xlu0 %v2674, 32
    %v2677 = vpop.permute.xlu0 %2676
    %v2679 = vmul.f32 %v2658, %v2677
    %v2680 = vpack.c.bf16 %v2652, %v2652
    %v2682 = vrot.slane %v2680, 1
    %2683 = vrot.lane.b32.xlu0 %v2682, 64
    %v2684 = vpop.permute.xlu0 %2683
    %v2686 = vsel %vm312, %v2684, 0
    %2688 = vmatprep.subr.bf16.mxu0 0
    %2689 = vmatpush1.bf16.msra.mxu0 %v1750
    %2690 = vmatprep.subr.bf16.mxu0 0
    %2691 = vmatpush1.bf16.msra.mxu0 %v1751
    %2692 = vmatprep.subr.bf16.mxu0 0
    %2693 = vmatpush1.bf16.msra.mxu0 0
    %2694 = vmatprep.subr.bf16.mxu0 0
    %2695 = vmatpush1.bf16.msra.mxu0 0
    %2696 = vmatprep.subr.bf16.mxu0 0
    %2697 = vmatpush1.bf16.msra.mxu0 0
    %2698 = vmatprep.subr.bf16.mxu0 0
    %2699 = vmatpush1.bf16.msra.mxu0 0
    %2700 = vmatprep.subr.bf16.mxu0 0
    %2701 = vmatpush1.bf16.msra.mxu0 0
    %2702 = vmatprep.subr.bf16.mxu0 0
    %2703 = vmatpush1.bf16.msra.mxu0 0
    %2704 = vmatprep.subr.bf16.mxu0 0
    %2705 = vmatpush1.bf16.msra.mxu0 0
    %2706 = vmatprep.subr.bf16.mxu0 0
    %2707 = vmatpush1.bf16.msra.mxu0 0
    %2708 = vmatprep.subr.bf16.mxu0 0
    %2709 = vmatpush1.bf16.msra.mxu0 0
    %2710 = vmatprep.subr.bf16.mxu0 0
    %2711 = vmatpush1.bf16.msra.mxu0 0
    %2712 = vmatprep.subr.bf16.mxu0 0
    %2713 = vmatpush1.bf16.msra.mxu0 0
    %2714 = vmatprep.subr.bf16.mxu0 0
    %2715 = vmatpush1.bf16.msra.mxu0 0
    %2716 = vmatprep.subr.bf16.mxu0 0
    %2717 = vmatpush1.bf16.msra.mxu0 0
    %2718 = vmatprep.subr.bf16.mxu0 0
    %2719 = vmatpush1.bf16.msra.mxu0 0
    %2720 = vmatprep.mubr.bf16.mxu0 0
    %2721 = vmatmul.mubr.bf16.gmra.mrb[0].mxu0 %v2686
    %v2722 = vpop.f32.mrb[0].mxu0
    %v2723 = vadd.f32 0.0, %v2722
    %v2724 = vpop.f32.mrb[0].mxu0
    %v2725 = vpop.f32.mrb[0].mxu0
    %v2726 = vpop.f32.mrb[0].mxu0
    %2727 = vdwg.mxu0
    %v2729 = vrot.slane %v2723, 4
    %v2731 = vadd.f32 %v1732, %v2729
    %v2732 = vpack.c.bf16 %v2679, %v2679
    %v2734 = vrot.slane %v2732, 2
    %2735 = vrot.lane.b32.xlu0 %v2734, 64
    %v2736 = vpop.permute.xlu0 %2735
    %v2738 = vsel %vm312, %v2736, 0
    %2740 = vmatprep.subr.bf16.mxu0 0
    %2741 = vmatpush1.bf16.msra.mxu0 %v1803
    %2742 = vmatprep.subr.bf16.mxu0 0
    %2743 = vmatpush1.bf16.msra.mxu0 %v1804
    %2744 = vmatprep.subr.bf16.mxu0 0
    %2745 = vmatpush1.bf16.msra.mxu0 0
    %2746 = vmatprep.subr.bf16.mxu0 0
    %2747 = vmatpush1.bf16.msra.mxu0 0
    %2748 = vmatprep.subr.bf16.mxu0 0
    %2749 = vmatpush1.bf16.msra.mxu0 0
    %2750 = vmatprep.subr.bf16.mxu0 0
    %2751 = vmatpush1.bf16.msra.mxu0 0
    %2752 = vmatprep.subr.bf16.mxu0 0
    %2753 = vmatpush1.bf16.msra.mxu0 0
    %2754 = vmatprep.subr.bf16.mxu0 0
    %2755 = vmatpush1.bf16.msra.mxu0 0
    %2756 = vmatprep.subr.bf16.mxu0 0
    %2757 = vmatpush1.bf16.msra.mxu0 0
    %2758 = vmatprep.subr.bf16.mxu0 0
    %2759 = vmatpush1.bf16.msra.mxu0 0
    %2760 = vmatprep.subr.bf16.mxu0 0
    %2761 = vmatpush1.bf16.msra.mxu0 0
    %2762 = vmatprep.subr.bf16.mxu0 0
    %2763 = vmatpush1.bf16.msra.mxu0 0
    %2764 = vmatprep.subr.bf16.mxu0 0
    %2765 = vmatpush1.bf16.msra.mxu0 0
    %2766 = vmatprep.subr.bf16.mxu0 0
    %2767 = vmatpush1.bf16.msra.mxu0 0
    %2768 = vmatprep.subr.bf16.mxu0 0
    %2769 = vmatpush1.bf16.msra.mxu0 0
    %2770 = vmatprep.subr.bf16.mxu0 0
    %2771 = vmatpush1.bf16.msra.mxu0 0
    %2772 = vmatprep.mubr.bf16.mxu0 0
    %2773 = vmatmul.mubr.bf16.gmra.mrb[0].mxu0 %v2738
    %v2774 = vpop.f32.mrb[0].mxu0
    %v2775 = vadd.f32 0.0, %v2774
    %v2776 = vpop.f32.mrb[0].mxu0
    %v2777 = vpop.f32.mrb[0].mxu0
    %v2778 = vpop.f32.mrb[0].mxu0
    %2779 = vdwg.mxu0
    %v2781 = vrot.slane %v2775, 6
    %v2783 = vadd.f32 %v1731, %v2781
    %v2784 = vxor.u32 %v2731, 2147483648
    %v2785 = vmul.f32 %v2784, 1.442695
    %v2786 = vpow.pop %v2785
    %v2787 = vadd.f32 %v2786, 1.0
    %v2788 = vrcp.pop %v2787
    %v2789 = vmul.f32 1.0, %v2788
    %v2790 = vtanh.pop %v2731
    %v2792 = vrot.slane %v2646, 6
    %v2794 = vmul.f32 %v2789, %v2792
    %2796 = vrot.lane.b32.xlu0 %v2790, 32
    %v2797 = vpop.permute.xlu0 %2796
    %v2799 = vmul.f32 %v2789, %v2797
    %2801 = vrot.lane.b32.xlu0 %v2799, 32
    %v2802 = vpop.permute.xlu0 %2801
    %v2804 = vadd.f32 %v2794, %v2802
    %v2805 = vtanh.pop %v2804
    %2807 = vrot.lane.b32.xlu0 %v2805, 32
    %v2808 = vpop.permute.xlu0 %2807
    %v2810 = vmul.f32 %v2789, %v2808
    %v2811 = vxor.u32 %v2783, 2147483648
    %v2812 = vmul.f32 %v2811, 1.442695
    %v2813 = vpow.pop %v2812
    %v2814 = vadd.f32 %v2813, 1.0
    %v2815 = vrcp.pop %v2814
    %v2816 = vmul.f32 1.0, %v2815
    %v2817 = vtanh.pop %v2783
    %v2819 = vrot.slane %v2673, 2
    %v2821 = vmul.f32 %v2816, %v2819
    %2823 = vrot.lane.b32.xlu0 %v2817, 32
    %v2824 = vpop.permute.xlu0 %2823
    %v2826 = vmul.f32 %v2816, %v2824
    %2828 = vrot.lane.b32.xlu0 %v2826, 32
    %v2829 = vpop.permute.xlu0 %2828
    %v2831 = vadd.f32 %v2821, %v2829
    %v2832 = vtanh.pop %v2831
    %2834 = vrot.lane.b32.xlu0 %v2832, 32
    %v2835 = vpop.permute.xlu0 %2834
    %v2837 = vmul.f32 %v2816, %v2835
    %v2838 = vpack.c.bf16 %v2810, %v2810
    %v2840 = vrot.slane %v2838, 2
    %2841 = vrot.lane.b32.xlu0 %v2840, 64
    %v2842 = vpop.permute.xlu0 %2841
    %v2844 = vsel %vm312, %v2842, 0
    %2846 = vmatprep.subr.bf16.mxu0 0
    %2847 = vmatpush1.bf16.msra.mxu0 %v1750
    %2848 = vmatprep.subr.bf16.mxu0 0
    %2849 = vmatpush1.bf16.msra.mxu0 %v1751
    %2850 = vmatprep.subr.bf16.mxu0 0
    %2851 = vmatpush1.bf16.msra.mxu0 0
    %2852 = vmatprep.subr.bf16.mxu0 0
    %2853 = vmatpush1.bf16.msra.mxu0 0
    %2854 = vmatprep.subr.bf16.mxu0 0
    %2855 = vmatpush1.bf16.msra.mxu0 0
    %2856 = vmatprep.subr.bf16.mxu0 0
    %2857 = vmatpush1.bf16.msra.mxu0 0
    %2858 = vmatprep.subr.bf16.mxu0 0
    %2859 = vmatpush1.bf16.msra.mxu0 0
    %2860 = vmatprep.subr.bf16.mxu0 0
    %2861 = vmatpush1.bf16.msra.mxu0 0
    %2862 = vmatprep.subr.bf16.mxu0 0
    %2863 = vmatpush1.bf16.msra.mxu0 0
    %2864 = vmatprep.subr.bf16.mxu0 0
    %2865 = vmatpush1.bf16.msra.mxu0 0
    %2866 = vmatprep.subr.bf16.mxu0 0
    %2867 = vmatpush1.bf16.msra.mxu0 0
    %2868 = vmatprep.subr.bf16.mxu0 0
    %2869 = vmatpush1.bf16.msra.mxu0 0
    %2870 = vmatprep.subr.bf16.mxu0 0
    %2871 = vmatpush1.bf16.msra.mxu0 0
    %2872 = vmatprep.subr.bf16.mxu0 0
    %2873 = vmatpush1.bf16.msra.mxu0 0
    %2874 = vmatprep.subr.bf16.mxu0 0
    %2875 = vmatpush1.bf16.msra.mxu0 0
    %2876 = vmatprep.subr.bf16.mxu0 0
    %2877 = vmatpush1.bf16.msra.mxu0 0
    %2878 = vmatprep.mubr.bf16.mxu0 0
    %2879 = vmatmul.mubr.bf16.gmra.mrb[0].mxu0 %v2844
    %v2880 = vpop.f32.mrb[0].mxu0
    %v2881 = vadd.f32 0.0, %v2880
    %v2882 = vpop.f32.mrb[0].mxu0
    %v2883 = vpop.f32.mrb[0].mxu0
    %v2884 = vpop.f32.mrb[0].mxu0
    %2885 = vdwg.mxu0
    %v2887 = vrot.slane %v2881, 2
    %v2889 = vadd.f32 %v1732, %v2887
    %v2890 = vpack.c.bf16 %v2837, %v2837
    %v2892 = vrot.slane %v2890, 1
    %2893 = vrot.lane.b32.xlu0 %v2892, 64
    %v2894 = vpop.permute.xlu0 %2893
    %v2896 = vsel %vm312, %v2894, 0
    %2898 = vmatprep.subr.bf16.mxu0 0
    %2899 = vmatpush1.bf16.msra.mxu0 %v1803
    %2900 = vmatprep.subr.bf16.mxu0 0
    %2901 = vmatpush1.bf16.msra.mxu0 %v1804
    %2902 = vmatprep.subr.bf16.mxu0 0
    %2903 = vmatpush1.bf16.msra.mxu0 0
    %2904 = vmatprep.subr.bf16.mxu0 0
    %2905 = vmatpush1.bf16.msra.mxu0 0
    %2906 = vmatprep.subr.bf16.mxu0 0
    %2907 = vmatpush1.bf16.msra.mxu0 0
    %2908 = vmatprep.subr.bf16.mxu0 0
    %2909 = vmatpush1.bf16.msra.mxu0 0
    %2910 = vmatprep.subr.bf16.mxu0 0
    %2911 = vmatpush1.bf16.msra.mxu0 0
    %2912 = vmatprep.subr.bf16.mxu0 0
    %2913 = vmatpush1.bf16.msra.mxu0 0
    %2914 = vmatprep.subr.bf16.mxu0 0
    %2915 = vmatpush1.bf16.msra.mxu0 0
    %2916 = vmatprep.subr.bf16.mxu0 0
    %2917 = vmatpush1.bf16.msra.mxu0 0
    %2918 = vmatprep.subr.bf16.mxu0 0
    %2919 = vmatpush1.bf16.msra.mxu0 0
    %2920 = vmatprep.subr.bf16.mxu0 0
    %2921 = vmatpush1.bf16.msra.mxu0 0
    %2922 = vmatprep.subr.bf16.mxu0 0
    %2923 = vmatpush1.bf16.msra.mxu0 0
    %2924 = vmatprep.subr.bf16.mxu0 0
    %2925 = vmatpush1.bf16.msra.mxu0 0
    %2926 = vmatprep.subr.bf16.mxu0 0
    %2927 = vmatpush1.bf16.msra.mxu0 0
    %2928 = vmatprep.subr.bf16.mxu0 0
    %2929 = vmatpush1.bf16.msra.mxu0 0
    %2930 = vmatprep.mubr.bf16.mxu0 0
    %2931 = vmatmul.mubr.bf16.gmra.mrb[0].mxu0 %v2896
    %v2932 = vpop.f32.mrb[0].mxu0
    %v2933 = vadd.f32 0.0, %v2932
    %v2934 = vpop.f32.mrb[0].mxu0
    %v2935 = vpop.f32.mrb[0].mxu0
    %v2936 = vpop.f32.mrb[0].mxu0
    %2937 = vdwg.mxu0
    %v2938 = vadd.f32 %v1731, %v2933
    %v2939 = vxor.u32 %v2889, 2147483648
    %v2940 = vmul.f32 %v2939, 1.442695
    %v2941 = vpow.pop %v2940
    %v2942 = vadd.f32 %v2941, 1.0
    %v2943 = vrcp.pop %v2942
    %v2944 = vmul.f32 1.0, %v2943
    %v2945 = vtanh.pop %v2889
    %v2947 = vrot.slane %v2804, 6
    %v2949 = vmul.f32 %v2944, %v2947
    %2951 = vrot.lane.b32.xlu0 %v2945, 32
    %v2952 = vpop.permute.xlu0 %2951
    %v2954 = vmul.f32 %v2944, %v2952
    %2956 = vrot.lane.b32.xlu0 %v2954, 32
    %v2957 = vpop.permute.xlu0 %2956
    %v2959 = vadd.f32 %v2949, %v2957
    %v2960 = vtanh.pop %v2959
    %2962 = vrot.lane.b32.xlu0 %v2960, 32
    %v2963 = vpop.permute.xlu0 %2962
    %v2965 = vmul.f32 %v2944, %v2963
    %v2966 = vxor.u32 %v2938, 2147483648
    %v2967 = vmul.f32 %v2966, 1.442695
    %v2968 = vpow.pop %v2967
    %v2969 = vadd.f32 %v2968, 1.0
    %v2970 = vrcp.pop %v2969
    %v2971 = vmul.f32 1.0, %v2970
    %v2972 = vtanh.pop %v2938
    %v2974 = vrot.slane %v2831, 2
    %v2976 = vmul.f32 %v2971, %v2974
    %2978 = vrot.lane.b32.xlu0 %v2972, 32
    %v2979 = vpop.permute.xlu0 %2978
    %v2981 = vmul.f32 %v2971, %v2979
    %2983 = vrot.lane.b32.xlu0 %v2981, 32
    %v2984 = vpop.permute.xlu0 %2983
    %v2986 = vadd.f32 %v2976, %v2984
    %v2987 = vtanh.pop %v2986
    %2989 = vrot.lane.b32.xlu0 %v2987, 32
    %v2990 = vpop.permute.xlu0 %2989
    %v2992 = vmul.f32 %v2971, %v2990
    %v2993 = vmax.f32 %v2965, 0.0
    %v2994 = vmax.f32 %v2992, 0.0
    %v2995 = vpack.c.bf16 %v2993, %v2993
    %v2996 = vld [vmem:[#allocation13] sm:$0xf]
    %v2997 = vld [vmem:[#allocation13 + $0x4] sm:$0xf]
    %v2998 = vld [vmem:[#allocation13 + $0x8] sm:$0xf]
    %v2999 = vld [vmem:[#allocation13 + $0xc] sm:$0xf]
    %v3000 = vpack.c.bf16 %v2994, %v2994
    %v3001 = vld [vmem:[#allocation14] sm:$0xf]
    %v3002 = vld [vmem:[#allocation14 + $0x4] sm:$0xf]
    %v3003 = vld [vmem:[#allocation14 + $0x8] sm:$0xf]
    %v3004 = vld [vmem:[#allocation14 + $0xc] sm:$0xf]
    %3006 = vrot.lane.b32.xlu0 %v3000, 64
    %v3007 = vpop.permute.xlu0 %3006
    %v3012 = vunpack.c.l.b16 %v3001
    %v3013 = vunpack.c.l.b16 %v3002
    %v3014 = vunpack.c.l.b16 %v3003
    %v3015 = vunpack.c.l.b16 %v3004
    %v3016 = vpack.c.b16 %v3013, %v3012
    %v3017 = vpack.c.b16 %v3015, %v3014
    %v3021 = vsel %vm312, %v3007, 0
    %3023 = vmatprep.subr.bf16.mxu0 0
    %3024 = vmatpush1.bf16.msra.mxu0 %v3016
    %3025 = vmatprep.subr.bf16.mxu0 0
    %3026 = vmatpush1.bf16.msra.mxu0 %v3017
    %3027 = vmatprep.subr.bf16.mxu0 0
    %3028 = vmatpush1.bf16.msra.mxu0 0
    %3029 = vmatprep.subr.bf16.mxu0 0
    %3030 = vmatpush1.bf16.msra.mxu0 0
    %3031 = vmatprep.subr.bf16.mxu0 0
    %3032 = vmatpush1.bf16.msra.mxu0 0
    %3033 = vmatprep.subr.bf16.mxu0 0
    %3034 = vmatpush1.bf16.msra.mxu0 0
    %3035 = vmatprep.subr.bf16.mxu0 0
    %3036 = vmatpush1.bf16.msra.mxu0 0
    %3037 = vmatprep.subr.bf16.mxu0 0
    %3038 = vmatpush1.bf16.msra.mxu0 0
    %3039 = vmatprep.subr.bf16.mxu0 0
    %3040 = vmatpush1.bf16.msra.mxu0 0
    %3041 = vmatprep.subr.bf16.mxu0 0
    %3042 = vmatpush1.bf16.msra.mxu0 0
    %3043 = vmatprep.subr.bf16.mxu0 0
    %3044 = vmatpush1.bf16.msra.mxu0 0
    %3045 = vmatprep.subr.bf16.mxu0 0
    %3046 = vmatpush1.bf16.msra.mxu0 0
    %3047 = vmatprep.subr.bf16.mxu0 0
    %3048 = vmatpush1.bf16.msra.mxu0 0
    %3049 = vmatprep.subr.bf16.mxu0 0
    %3050 = vmatpush1.bf16.msra.mxu0 0
    %3051 = vmatprep.subr.bf16.mxu0 0
    %3052 = vmatpush1.bf16.msra.mxu0 0
    %3053 = vmatprep.subr.bf16.mxu0 0
    %3054 = vmatpush1.bf16.msra.mxu0 0
    %3055 = vmatprep.mubr.bf16.mxu0 0
    %3056 = vmatmul.mubr.bf16.gmra.mrb[0].mxu0 %v3021
    %v3057 = vpop.f32.mrb[0].mxu0
    %v3058 = vadd.f32 0.0, %v3057
    %v3059 = vpop.f32.mrb[0].mxu0
    %v3060 = vpop.f32.mrb[0].mxu0
    %v3061 = vpop.f32.mrb[0].mxu0
    %3062 = vdwg.mxu0
    %v3064 = vrot.slane %v2995, 3
    %3065 = vrot.lane.b32.xlu0 %v3064, 64
    %v3066 = vpop.permute.xlu0 %3065
    %v3071 = vunpack.c.l.b16 %v2996
    %v3072 = vunpack.c.l.b16 %v2997
    %v3073 = vunpack.c.l.b16 %v2998
    %v3074 = vunpack.c.l.b16 %v2999
    %v3075 = vpack.c.b16 %v3072, %v3071
    %v3076 = vpack.c.b16 %v3074, %v3073
    %v3080 = vsel %vm312, %v3066, 0
    %3082 = vmatprep.subr.bf16.mxu0 0
    %3083 = vmatpush1.bf16.msra.mxu0 %v3075
    %3084 = vmatprep.subr.bf16.mxu0 0
    %3085 = vmatpush1.bf16.msra.mxu0 %v3076
    %3086 = vmatprep.subr.bf16.mxu0 0
    %3087 = vmatpush1.bf16.msra.mxu0 0
    %3088 = vmatprep.subr.bf16.mxu0 0
    %3089 = vmatpush1.bf16.msra.mxu0 0
    %3090 = vmatprep.subr.bf16.mxu0 0
    %3091 = vmatpush1.bf16.msra.mxu0 0
    %3092 = vmatprep.subr.bf16.mxu0 0
    %3093 = vmatpush1.bf16.msra.mxu0 0
    %3094 = vmatprep.subr.bf16.mxu0 0
    %3095 = vmatpush1.bf16.msra.mxu0 0
    %3096 = vmatprep.subr.bf16.mxu0 0
    %3097 = vmatpush1.bf16.msra.mxu0 0
    %3098 = vmatprep.subr.bf16.mxu0 0
    %3099 = vmatpush1.bf16.msra.mxu0 0
    %3100 = vmatprep.subr.bf16.mxu0 0
    %3101 = vmatpush1.bf16.msra.mxu0 0
    %3102 = vmatprep.subr.bf16.mxu0 0
    %3103 = vmatpush1.bf16.msra.mxu0 0
    %3104 = vmatprep.subr.bf16.mxu0 0
    %3105 = vmatpush1.bf16.msra.mxu0 0
    %3106 = vmatprep.subr.bf16.mxu0 0
    %3107 = vmatpush1.bf16.msra.mxu0 0
    %3108 = vmatprep.subr.bf16.mxu0 0
    %3109 = vmatpush1.bf16.msra.mxu0 0
    %3110 = vmatprep.subr.bf16.mxu0 0
    %3111 = vmatpush1.bf16.msra.mxu0 0
    %3112 = vmatprep.subr.bf16.mxu0 0
    %3113 = vmatpush1.bf16.msra.mxu0 0
    %3114 = vmatprep.mubr.bf16.mxu0 0
    %3115 = vmatmul.mubr.bf16.gmra.mrb[0].mxu0 %v3080
    %v3116 = vpop.f32.mrb[0].mxu0
    %v3117 = vadd.f32 %v3058, %v3116
    %v3118 = vpop.f32.mrb[0].mxu0
    %v3119 = vpop.f32.mrb[0].mxu0
    %v3120 = vpop.f32.mrb[0].mxu0
    %3121 = vdwg.mxu0
    %v3122 = vld [vmem:[%s12] sm:$0x1]
    %v3124 = vlaneseq
    %v3125 = vshrl.u32 %v3124, 7
    %v3126 = vsub.s32 0, %v3125
    %v3127 = vrot.slane %v3122, %v3126
    %v3129 = vadd.f32 %v3117, %v3127
    %v3130 = vmax.f32 %v3129, 0.0
    %v3131 = vld [vmem:[%s13] sm:$0x1]
    %v3133 = vlaneseq
    %v3134 = vshrl.u32 %v3133, 7
    %v3135 = vsub.s32 0, %v3134
    %v3136 = vrot.slane %v3131, %v3135
    %v3138 = vmul.f32 %v3130, %v3136
    %v3139 = vld [vmem:[%s14] sm:$0x1]
    %v3141 = vlaneseq
    %v3142 = vshrl.u32 %v3141, 7
    %v3143 = vsub.s32 0, %v3142
    %v3144 = vrot.slane %v3139, %v3143
    %v3146 = vadd.f32 %v3138, %v3144
    %v3147 = vld [vmem:[%s15] sm:$0x1]
    %v3149 = vlaneseq
    %v3150 = vshrl.u32 %v3149, 7
    %v3151 = vsub.s32 0, %v3150
    %v3152 = vrot.slane %v3147, %v3151
    %v3154 = vmul.f32 %v3146, %v3152
    %vm3155 = vcmask 254976
    %v3156 = vsel %vm3155, %v3154, 0.0
    %3157 = vadd.xlane.f32.xlu0 %v3156
    %v3158 = vpop.xlane.xlu0 %3157
    %v3159 = vld [vmem:[#allocation2] sm:$0x1]
    %v3161 = vlaneseq
    %v3162 = vshrl.u32 %v3161, 7
    %v3163 = vsub.s32 0, %v3162
    %v3164 = vrot.slane %v3159, %v3163
    %v3166 = vadd.f32 %v3158, %v3164
    %v3167 = vxor.u32 %v3166, 2147483648
    %v3168 = vmul.f32 %v3167, 1.442695
    %v3169 = vpow.pop %v3168
    %v3170 = vadd.f32 %v3169, 1.0
    %v3171 = vrcp.pop %v3170
    %v3172 = vmul.f32 1.0, %v3171
    %vm3173 = vcmask 1024
    %3174 = vst.msk [vmem:[%s17] sm:$0x3] %vm3173, %v3172
    // Predicated region
    $region102: #{forward.1} parent=1 // pred_check
      _
    $region103: #{forward.1} parent=1 // pred_check_branch
      %3176 = sbr.rel (0) target = $region105
    $region104: #{forward.1} parent=1 // pred_region
      _
    $region105: #{forward.1} parent=1 // pred_fallthru
      _
    // Predicated region
    $region106: #{forward.1} parent=1 // pred_check
      _
    $region107: #{forward.1} parent=1 // pred_check_branch
      %3178 = sbr.rel (0) target = $region109
    $region108: #{forward.1} parent=1 // pred_region
      _
    $region109: #{forward.1} parent=1 // pred_fallthru
      _
    %3179 = vsyncpa [#allocation4], 1
    %3180 = vsyncpa [#allocation6], 1
    %3181 = vsyncpa [#allocation9], 1
    %3182 = vsyncpa [#allocation12], 1
    %3183 = vsyncpa [#allocation15], 1

</llo_original>
